<compile_context>
chip_gen: v7x
topology: tpu7x:2x2x1
jax: 0.10.0
libtpu: 0.0.40
codegen_flags: <defaults>
</compile_context>

<pallas_src>
import math
import numpy as np
import jax
import jax.numpy as jnp
from jax import lax
from jax.experimental import pallas as pl
from jax.experimental.pallas import tpu as pltpu

# ----- small, module-consistent shapes -----
B = 2              # batch
N = 8              # sequence_length
C = 128            # embedding_dim (lane-dense)
H = 4              # num_heads
D = C // H         # head_dim = 32
F = int(C * 4.0)   # dim_feedforward = embedding_dim * mlp_ratio = 512
L = 2              # num_layers (toy)
M = B * N          # token axis (B and N folded together)
G = B * H          # attention batch: (batch, head) pairs
EPS = 1e-5         # nn.LayerNorm default eps
SCALE = D ** (-0.5)


# ----------------- in-kernel helpers -----------------
def _layernorm(x, w, b):
    mu = jnp.mean(x, axis=-1, keepdims=True)
    var = jnp.mean(jnp.square(x - mu), axis=-1, keepdims=True)
    return (x - mu) * lax.rsqrt(var + EPS) * w + b


def _gelu_exact(x):
    # F.gelu default = exact (erf) GELU
    return 0.5 * x * (1.0 + lax.erf(x * (1.0 / math.sqrt(2.0))))


# ----------------- Pallas kernel -----------------
def video_transformer_kernel(x_ref, pos_ref,
                             ln0_w_ref, ln0_b_ref,
                             qkvw_ref, pw_ref, pb_ref,
                             ln1_w_ref, ln1_b_ref,
                             w1_ref, b1_ref, w2_ref, b2_ref,
                             lnf_w_ref, lnf_b_ref,
                             out_ref):
    h = x_ref[...] + pos_ref[...]                                    # (M, C) f32

    for l in range(L):  # static unroll at toy L; see TODO at top for scaling
        # ---------------- attention block ----------------
        y = _layernorm(h, ln0_w_ref[l], ln0_b_ref[l])                # (M, C) f32
        # fused QKV: one lane-dense (M, C) x (C, 3C) matmul, bf16 operands, f32 acc
        qkv = jnp.dot(y.astype(jnp.bfloat16), qkvw_ref[l],
                      preferred_element_type=jnp.float32)            # (M, 3C)
        q = qkv[:, 0 * C:1 * C]    # 128-aligned lane slices (scale folded into Q weight)
        k = qkv[:, 1 * C:2 * C]
        v = qkv[:, 2 * C:3 * C]

        # split heads -> (G, N, D), g = batch*H + head (single-batch-dim einsums)
        def to_heads(t):
            return (t.reshape(B, N, H, D).transpose(0, 2, 1, 3)
                     .reshape(G, N, D).astype(jnp.bfloat16))

        q3, k3, v3 = to_heads(q), to_heads(k), to_heads(v)

        s = jnp.einsum('gnd,gmd->gnm', q3, k3,
                       preferred_element_type=jnp.float32)           # (G, N, N) f32
        s = s - jnp.max(s, axis=-1, keepdims=True)
        e = jnp.exp(s)
        p = e / jnp.sum(e, axis=-1, keepdims=True)                   # exact softmax (f32)

        ctx = jnp.einsum('gnm,gmd->gnd', p.astype(jnp.bfloat16), v3,
                         preferred_element_type=jnp.float32)         # (G, N, D)
        # concat heads back onto the lane axis -> lane-dense (M, 128)
        ctx = ctx.reshape(B, H, N, D).transpose(0, 2, 1, 3).reshape(M, C)
        attn = jnp.dot(ctx.astype(jnp.bfloat16), pw_ref[l],
                       preferred_element_type=jnp.float32) + pb_ref[l]   # (M, C)

        h = h + attn                                                 # residual (f32)
        h = _layernorm(h, ln1_w_ref[l], ln1_b_ref[l])                # norm1

        # ---------------- MLP block ----------------
        ff = jnp.dot(h.astype(jnp.bfloat16), w1_ref[l],
                     preferred_element_type=jnp.float32) + b1_ref[l]     # (M, F)
        ff = _gelu_exact(ff)
        ff = jnp.dot(ff.astype(jnp.bfloat16), w2_ref[l],
                     preferred_element_type=jnp.float32) + b2_ref[l]     # (M, C)
        h = h + ff                                                   # residual

    out_ref[...] = _layernorm(h, lnf_w_ref[0], lnf_b_ref[0])         # final norm


# ----------------- wrapper -----------------
def video_transformer_forward(x, pos, params):
    (ln0_w, ln0_b, qkv_w, proj_w, proj_b,
     ln1_w, ln1_b, w1, b1, w2, b2, lnf_w, lnf_b) = params

    # ---- wrapper-side layout plumbing (trace-time, no weight replication) ----
    x_flat = x.reshape(M, C)                                         # fold (B, N) -> M
    pos_flat = jnp.broadcast_to(pos, (B, N, C)).reshape(M, C)

    # fused qkv weight, x @ W.T layout, scale folded into Q columns; bf16
    qkv_scaled = qkv_w.at[:, 0:C, :].multiply(SCALE)                 # (L, 3C, C)
    qkvw_t = qkv_scaled.transpose(0, 2, 1).astype(jnp.bfloat16)      # (L, C, 3C)

    pw_t = proj_w.transpose(0, 2, 1).astype(jnp.bfloat16)            # (L, C, C)
    w1_t = w1.transpose(0, 2, 1).astype(jnp.bfloat16)                # (L, C, F)
    w2_t = w2.transpose(0, 2, 1).astype(jnp.bfloat16)                # (L, F, C)

    lnf_w2 = lnf_w.reshape(1, C)
    lnf_b2 = lnf_b.reshape(1, C)

    inputs = (x_flat, pos_flat, ln0_w, ln0_b, qkvw_t, pw_t, proj_b,
              ln1_w, ln1_b, w1_t, b1, w2_t, b2, lnf_w2, lnf_b2)

    vmem = pl.BlockSpec(memory_space=pltpu.MemorySpace.VMEM)
    out = pl.pallas_call(
        video_transformer_kernel,
        out_shape=jax.ShapeDtypeStruct((M, C), jnp.float32),
        in_specs=[vmem] * len(inputs),
        out_specs=vmem,
        compiler_params=pltpu.CompilerParams(vmem_limit_bytes=32 * 1024 * 1024),
    )(*inputs)
    return out.reshape(B, N, C)


# ----------------- deterministic parameter init -----------------
def init_params(key):
    def trunc(k, shape, std=0.02):
        return std * jax.random.truncated_normal(k, -2.0, 2.0, shape, jnp.float32)

    keys = jax.random.split(key, 4 * L)
    ln0_w = jnp.ones((L, C), jnp.float32); ln0_b = jnp.zeros((L, C), jnp.float32)
    ln1_w = jnp.ones((L, C), jnp.float32); ln1_b = jnp.zeros((L, C), jnp.float32)
    qkv_w = jnp.stack([trunc(keys[4 * l + 0], (3 * C, C)) for l in range(L)])
    proj_w = jnp.stack([trunc(keys[4 * l + 1], (C, C)) for l in range(L)])
    proj_b = jnp.zeros((L, C), jnp.float32)
    w1 = jnp.stack([trunc(keys[4 * l + 2], (F, C)) for l in range(L)])
    b1 = jnp.zeros((L, F), jnp.float32)
    w2 = jnp.stack([trunc(keys[4 * l + 3], (C, F)) for l in range(L)])
    b2 = jnp.zeros((L, C), jnp.float32)
    lnf_w = jnp.ones((C,), jnp.float32); lnf_b = jnp.zeros((C,), jnp.float32)
    return (ln0_w, ln0_b, qkv_w, proj_w, proj_b,
            ln1_w, ln1_b, w1, b1, w2, b2, lnf_w, lnf_b)


def sinusoidal_embedding(n_channels, dim):
    p = np.arange(n_channels, dtype=np.float64)[:, None]
    i = np.arange(dim)[None, :]
    ang = p / (10000.0 ** (2 * (i // 2) / dim))
    pe = ang.copy()
    pe[:, 0::2] = np.sin(ang[:, 0::2])
    pe[:, 1::2] = np.cos(ang[:, 1::2])
    return jnp.asarray(pe[None, ...], dtype=jnp.float32)      # (1, n, dim)


# ----------------- pure-JAX reference (correctness check) -----------------
def reference_forward(x, pos, params):
    (ln0_w, ln0_b, qkv_w, proj_w, proj_b,
     ln1_w, ln1_b, w1, b1, w2, b2, lnf_w, lnf_b) = params

    def ln(t, w, b):
        mu = jnp.mean(t, -1, keepdims=True)
        var = jnp.mean(jnp.square(t - mu), -1, keepdims=True)
        return (t - mu) / jnp.sqrt(var + EPS) * w + b

    h = x + pos
    for l in range(L):
        y = ln(h, ln0_w[l], ln0_b[l])
        qkv = y @ qkv_w[l].T
        q, k, v = jnp.split(qkv, 3, axis=-1)

        def heads(t):
            return t.reshape(B, N, H, D).transpose(0, 2, 1, 3)

        q, k, v = heads(q) * SCALE, heads(k), heads(v)
        attn = jax.nn.softmax(jnp.einsum('bhid,bhjd->bhij', q, k), axis=-1)
        o = jnp.einsum('bhij,bhjd->bhid', attn, v).transpose(0, 2, 1, 3).reshape(B, N, C)
        o = o @ proj_w[l].T + proj_b[l]
        h = h + o
        h = ln(h, ln1_w[l], ln1_b[l])
        ff = jax.nn.gelu(h @ w1[l].T + b1[l], approximate=False)
        ff = ff @ w2[l].T + b2[l]
        h = h + ff
    return ln(h, lnf_w, lnf_b)


if __name__ == "__main__":
    key = jax.random.PRNGKey(0)
    kx, kp = jax.random.split(key)
    x = jax.random.normal(kx, (B, N, C), jnp.float32)   # already-tokenized input (B, N, C)
    pos = sinusoidal_embedding(N, C)
    params = init_params(kp)

    out = video_transformer_forward(x, pos, params)
    out = jax.block_until_ready(out)

    ref = reference_forward(x, pos, params)
    assert out.shape == (B, N, C)
    max_err = float(jnp.max(jnp.abs(out - ref)))
    # tolerance covers bf16 matmul operands (f32 accumulation, f32 residual/LN/softmax)
    assert jnp.allclose(out, ref, atol=3e-2, rtol=3e-2), max_err
    print("KERNEL_OK")
</pallas_src>

<mosaic_0001>
module attributes {stable_mosaic.version = 11 : i64} {
  func.func @video_transformer_kernel(%arg0: memref<16x128xf32, #tpu.memory_space<vmem>>, %arg1: memref<16x128xf32, #tpu.memory_space<vmem>>, %arg2: memref<2x128xf32, #tpu.memory_space<vmem>>, %arg3: memref<2x128xf32, #tpu.memory_space<vmem>>, %arg4: memref<2x128x384xbf16, #tpu.memory_space<vmem>>, %arg5: memref<2x128x128xbf16, #tpu.memory_space<vmem>>, %arg6: memref<2x128xf32, #tpu.memory_space<vmem>>, %arg7: memref<2x128xf32, #tpu.memory_space<vmem>>, %arg8: memref<2x128xf32, #tpu.memory_space<vmem>>, %arg9: memref<2x128x512xbf16, #tpu.memory_space<vmem>>, %arg10: memref<2x512xf32, #tpu.memory_space<vmem>>, %arg11: memref<2x512x128xbf16, #tpu.memory_space<vmem>>, %arg12: memref<2x128xf32, #tpu.memory_space<vmem>>, %arg13: memref<1x128xf32, #tpu.memory_space<vmem>>, %arg14: memref<1x128xf32, #tpu.memory_space<vmem>>, %arg15: memref<16x128xf32, #tpu.memory_space<vmem>>) attributes {dimension_semantics = [], scalar_prefetch = 0 : i64, scratch_operands = 0 : i64, tpu.core_type = #tpu.core_type<tc>} {
    %c0 = arith.constant 0 : index
    %c0_0 = arith.constant 0 : index
    %0 = vector.load %arg0[%c0, %c0_0] : memref<16x128xf32, #tpu.memory_space<vmem>>, vector<16x128xf32>
    %c0_1 = arith.constant 0 : index
    %c0_2 = arith.constant 0 : index
    %1 = vector.load %arg1[%c0_1, %c0_2] : memref<16x128xf32, #tpu.memory_space<vmem>>, vector<16x128xf32>
    %2 = arith.addf %0, %1 : vector<16x128xf32>
    %c0_3 = arith.constant 0 : index
    %c0_4 = arith.constant 0 : index
    %3 = vector.load %arg2[%c0_3, %c0_4] : memref<2x128xf32, #tpu.memory_space<vmem>>, vector<1x128xf32>
    %4 = vector.shape_cast %3 : vector<1x128xf32> to vector<128xf32>
    %c0_5 = arith.constant 0 : index
    %c0_6 = arith.constant 0 : index
    %5 = vector.load %arg3[%c0_5, %c0_6] : memref<2x128xf32, #tpu.memory_space<vmem>>, vector<1x128xf32>
    %6 = vector.shape_cast %5 : vector<1x128xf32> to vector<128xf32>
    %cst = arith.constant dense<0.000000e+00> : vector<16xf32>
    %7 = vector.multi_reduction <add>, %2, %cst [1] : vector<16x128xf32> to vector<16xf32>
    %8 = vector.shape_cast %7 : vector<16xf32> to vector<16x1xf32>
    %cst_7 = arith.constant 1.280000e+02 : f32
    %9 = vector.broadcast %cst_7 : f32 to vector<16x1xf32>
    %10 = arith.divf %8, %9 : vector<16x1xf32>
    %11 = vector.broadcast %10 : vector<16x1xf32> to vector<16x128xf32>
    %12 = arith.subf %2, %11 : vector<16x128xf32>
    %13 = arith.mulf %12, %12 : vector<16x128xf32>
    %cst_8 = arith.constant dense<0.000000e+00> : vector<16xf32>
    %14 = vector.multi_reduction <add>, %13, %cst_8 [1] : vector<16x128xf32> to vector<16xf32>
    %15 = vector.shape_cast %14 : vector<16xf32> to vector<16x1xf32>
    %cst_9 = arith.constant 1.280000e+02 : f32
    %16 = vector.broadcast %cst_9 : f32 to vector<16x1xf32>
    %17 = arith.divf %15, %16 : vector<16x1xf32>
    %18 = vector.broadcast %10 : vector<16x1xf32> to vector<16x128xf32>
    %19 = arith.subf %2, %18 : vector<16x128xf32>
    %cst_10 = arith.constant 9.99999974E-6 : f32
    %20 = vector.broadcast %cst_10 : f32 to vector<16x1xf32>
    %21 = arith.addf %17, %20 : vector<16x1xf32>
    %22 = math.rsqrt %21 : vector<16x1xf32>
    %23 = vector.broadcast %22 : vector<16x1xf32> to vector<16x128xf32>
    %24 = arith.mulf %19, %23 : vector<16x128xf32>
    %25 = vector.shape_cast %4 : vector<128xf32> to vector<1x128xf32>
    %26 = vector.broadcast %25 : vector<1x128xf32> to vector<16x128xf32>
    %27 = arith.mulf %24, %26 : vector<16x128xf32>
    %28 = vector.shape_cast %6 : vector<128xf32> to vector<1x128xf32>
    %29 = vector.broadcast %28 : vector<1x128xf32> to vector<16x128xf32>
    %30 = arith.addf %27, %29 : vector<16x128xf32>
    %31 = arith.truncf %30 : vector<16x128xf32> to vector<16x128xbf16>
    %c0_11 = arith.constant 0 : index
    %c0_12 = arith.constant 0 : index
    %c0_13 = arith.constant 0 : index
    %32 = vector.load %arg4[%c0_11, %c0_12, %c0_13] : memref<2x128x384xbf16, #tpu.memory_space<vmem>>, vector<1x128x384xbf16>
    %33 = vector.shape_cast %32 : vector<1x128x384xbf16> to vector<128x384xbf16>
    %cst_14 = arith.constant dense<0.000000e+00> : vector<16x384xf32>
    %34 = tpu.matmul %31, %33, %cst_14 {dimension_numbers = #tpu.dot_dimension_numbers<[1], [0], [0], [1], [0, 0, 1, 1], [], []>} : vector<16x128xbf16>, vector<128x384xbf16>, vector<16x384xf32> -> vector<16x384xf32>
    %35 = vector.extract_strided_slice %34 {offsets = [0, 0], sizes = [16, 128], strides = [1, 1]} : vector<16x384xf32> to vector<16x128xf32>
    %36 = vector.extract_strided_slice %34 {offsets = [0, 128], sizes = [16, 128], strides = [1, 1]} : vector<16x384xf32> to vector<16x128xf32>
    %37 = vector.extract_strided_slice %34 {offsets = [0, 256], sizes = [16, 128], strides = [1, 1]} : vector<16x384xf32> to vector<16x128xf32>
    %38 = vector.shape_cast %35 : vector<16x128xf32> to vector<2x8x4x32xf32>
    %39 = tpu.transpose %38, [0, 2, 1, 3] : vector<2x8x4x32xf32> -> vector<2x4x8x32xf32>
    %40 = vector.shape_cast %39 : vector<2x4x8x32xf32> to vector<8x8x32xf32>
    %41 = arith.truncf %40 : vector<8x8x32xf32> to vector<8x8x32xbf16>
    %42 = vector.shape_cast %36 : vector<16x128xf32> to vector<2x8x4x32xf32>
    %43 = tpu.transpose %42, [0, 2, 1, 3] : vector<2x8x4x32xf32> -> vector<2x4x8x32xf32>
    %44 = vector.shape_cast %43 : vector<2x4x8x32xf32> to vector<8x8x32xf32>
    %45 = arith.truncf %44 : vector<8x8x32xf32> to vector<8x8x32xbf16>
    %46 = vector.shape_cast %37 : vector<16x128xf32> to vector<2x8x4x32xf32>
    %47 = tpu.transpose %46, [0, 2, 1, 3] : vector<2x8x4x32xf32> -> vector<2x4x8x32xf32>
    %48 = vector.shape_cast %47 : vector<2x4x8x32xf32> to vector<8x8x32xf32>
    %49 = arith.truncf %48 : vector<8x8x32xf32> to vector<8x8x32xbf16>
    "tpu.trace_start"() <{level = 10 : i32, message = "gnd,gmd->gnm"}> : () -> ()
    %cst_15 = arith.constant dense<0.000000e+00> : vector<8x8x8xf32>
    %50 = tpu.matmul %41, %45, %cst_15 {dimension_numbers = #tpu.dot_dimension_numbers<[2], [2], [1], [1], [0, 0, 0, 1, 1, 1], [0], [0]>} : vector<8x8x32xbf16>, vector<8x8x32xbf16>, vector<8x8x8xf32> -> vector<8x8x8xf32>
    "tpu.trace_stop"() : () -> ()
    %cst_16 = arith.constant dense<0xFF800000> : vector<8x8xf32>
    %51 = vector.multi_reduction <maximumf>, %50, %cst_16 [2] : vector<8x8x8xf32> to vector<8x8xf32>
    %52 = vector.shape_cast %51 : vector<8x8xf32> to vector<8x8x1xf32>
    %53 = vector.broadcast %52 : vector<8x8x1xf32> to vector<8x8x8xf32>
    %54 = arith.subf %50, %53 : vector<8x8x8xf32>
    %55 = math.exp %54 : vector<8x8x8xf32>
    %cst_17 = arith.constant dense<0.000000e+00> : vector<8x8xf32>
    %56 = vector.multi_reduction <add>, %55, %cst_17 [2] : vector<8x8x8xf32> to vector<8x8xf32>
    %57 = vector.shape_cast %56 : vector<8x8xf32> to vector<8x8x1xf32>
    %58 = vector.broadcast %57 : vector<8x8x1xf32> to vector<8x8x8xf32>
    %59 = arith.divf %55, %58 : vector<8x8x8xf32>
    %60 = arith.truncf %59 : vector<8x8x8xf32> to vector<8x8x8xbf16>
    "tpu.trace_start"() <{level = 10 : i32, message = "gnm,gmd->gnd"}> : () -> ()
    %cst_18 = arith.constant dense<0.000000e+00> : vector<8x8x32xf32>
    %61 = tpu.matmul %60, %49, %cst_18 {dimension_numbers = #tpu.dot_dimension_numbers<[2], [1], [1], [2], [0, 0, 0, 1, 1, 2], [0], [0]>} : vector<8x8x8xbf16>, vector<8x8x32xbf16>, vector<8x8x32xf32> -> vector<8x8x32xf32>
    "tpu.trace_stop"() : () -> ()
    %62 = vector.shape_cast %61 : vector<8x8x32xf32> to vector<2x4x8x32xf32>
    %63 = tpu.transpose %62, [0, 2, 1, 3] : vector<2x4x8x32xf32> -> vector<2x8x4x32xf32>
    %64 = vector.shape_cast %63 : vector<2x8x4x32xf32> to vector<16x128xf32>
    %65 = arith.truncf %64 : vector<16x128xf32> to vector<16x128xbf16>
    %c0_19 = arith.constant 0 : index
    %c0_20 = arith.constant 0 : index
    %c0_21 = arith.constant 0 : index
    %66 = vector.load %arg5[%c0_19, %c0_20, %c0_21] : memref<2x128x128xbf16, #tpu.memory_space<vmem>>, vector<1x128x128xbf16>
    %67 = vector.shape_cast %66 : vector<1x128x128xbf16> to vector<128x128xbf16>
    %cst_22 = arith.constant dense<0.000000e+00> : vector<16x128xf32>
    %68 = tpu.matmul %65, %67, %cst_22 {dimension_numbers = #tpu.dot_dimension_numbers<[1], [0], [0], [1], [0, 0, 1, 1], [], []>} : vector<16x128xbf16>, vector<128x128xbf16>, vector<16x128xf32> -> vector<16x128xf32>
    %c0_23 = arith.constant 0 : index
    %c0_24 = arith.constant 0 : index
    %69 = vector.load %arg6[%c0_23, %c0_24] : memref<2x128xf32, #tpu.memory_space<vmem>>, vector<1x128xf32>
    %70 = vector.shape_cast %69 : vector<1x128xf32> to vector<128xf32>
    %71 = vector.shape_cast %70 : vector<128xf32> to vector<1x128xf32>
    %72 = vector.broadcast %71 : vector<1x128xf32> to vector<16x128xf32>
    %73 = arith.addf %68, %72 : vector<16x128xf32>
    %74 = arith.addf %2, %73 : vector<16x128xf32>
    %c0_25 = arith.constant 0 : index
    %c0_26 = arith.constant 0 : index
    %75 = vector.load %arg7[%c0_25, %c0_26] : memref<2x128xf32, #tpu.memory_space<vmem>>, vector<1x128xf32>
    %76 = vector.shape_cast %75 : vector<1x128xf32> to vector<128xf32>
    %c0_27 = arith.constant 0 : index
    %c0_28 = arith.constant 0 : index
    %77 = vector.load %arg8[%c0_27, %c0_28] : memref<2x128xf32, #tpu.memory_space<vmem>>, vector<1x128xf32>
    %78 = vector.shape_cast %77 : vector<1x128xf32> to vector<128xf32>
    %cst_29 = arith.constant dense<0.000000e+00> : vector<16xf32>
    %79 = vector.multi_reduction <add>, %74, %cst_29 [1] : vector<16x128xf32> to vector<16xf32>
    %80 = vector.shape_cast %79 : vector<16xf32> to vector<16x1xf32>
    %cst_30 = arith.constant 1.280000e+02 : f32
    %81 = vector.broadcast %cst_30 : f32 to vector<16x1xf32>
    %82 = arith.divf %80, %81 : vector<16x1xf32>
    %83 = vector.broadcast %82 : vector<16x1xf32> to vector<16x128xf32>
    %84 = arith.subf %74, %83 : vector<16x128xf32>
    %85 = arith.mulf %84, %84 : vector<16x128xf32>
    %cst_31 = arith.constant dense<0.000000e+00> : vector<16xf32>
    %86 = vector.multi_reduction <add>, %85, %cst_31 [1] : vector<16x128xf32> to vector<16xf32>
    %87 = vector.shape_cast %86 : vector<16xf32> to vector<16x1xf32>
    %cst_32 = arith.constant 1.280000e+02 : f32
    %88 = vector.broadcast %cst_32 : f32 to vector<16x1xf32>
    %89 = arith.divf %87, %88 : vector<16x1xf32>
    %90 = vector.broadcast %82 : vector<16x1xf32> to vector<16x128xf32>
    %91 = arith.subf %74, %90 : vector<16x128xf32>
    %cst_33 = arith.constant 9.99999974E-6 : f32
    %92 = vector.broadcast %cst_33 : f32 to vector<16x1xf32>
    %93 = arith.addf %89, %92 : vector<16x1xf32>
    %94 = math.rsqrt %93 : vector<16x1xf32>
    %95 = vector.broadcast %94 : vector<16x1xf32> to vector<16x128xf32>
    %96 = arith.mulf %91, %95 : vector<16x128xf32>
    %97 = vector.shape_cast %76 : vector<128xf32> to vector<1x128xf32>
    %98 = vector.broadcast %97 : vector<1x128xf32> to vector<16x128xf32>
    %99 = arith.mulf %96, %98 : vector<16x128xf32>
    %100 = vector.shape_cast %78 : vector<128xf32> to vector<1x128xf32>
    %101 = vector.broadcast %100 : vector<1x128xf32> to vector<16x128xf32>
    %102 = arith.addf %99, %101 : vector<16x128xf32>
    %103 = arith.truncf %102 : vector<16x128xf32> to vector<16x128xbf16>
    %c0_34 = arith.constant 0 : index
    %c0_35 = arith.constant 0 : index
    %c0_36 = arith.constant 0 : index
    %104 = vector.load %arg9[%c0_34, %c0_35, %c0_36] : memref<2x128x512xbf16, #tpu.memory_space<vmem>>, vector<1x128x512xbf16>
    %105 = vector.shape_cast %104 : vector<1x128x512xbf16> to vector<128x512xbf16>
    %cst_37 = arith.constant dense<0.000000e+00> : vector<16x512xf32>
    %106 = tpu.matmul %103, %105, %cst_37 {dimension_numbers = #tpu.dot_dimension_numbers<[1], [0], [0], [1], [0, 0, 1, 1], [], []>} : vector<16x128xbf16>, vector<128x512xbf16>, vector<16x512xf32> -> vector<16x512xf32>
    %c0_38 = arith.constant 0 : index
    %c0_39 = arith.constant 0 : index
    %107 = vector.load %arg10[%c0_38, %c0_39] : memref<2x512xf32, #tpu.memory_space<vmem>>, vector<1x512xf32>
    %108 = vector.shape_cast %107 : vector<1x512xf32> to vector<512xf32>
    %109 = vector.shape_cast %108 : vector<512xf32> to vector<1x512xf32>
    %110 = vector.broadcast %109 : vector<1x512xf32> to vector<16x512xf32>
    %111 = arith.addf %106, %110 : vector<16x512xf32>
    %cst_40 = arith.constant 5.000000e-01 : f32
    %112 = vector.broadcast %cst_40 : f32 to vector<16x512xf32>
    %113 = arith.mulf %112, %111 : vector<16x512xf32>
    %cst_41 = arith.constant 0.707106769 : f32
    %114 = vector.broadcast %cst_41 : f32 to vector<16x512xf32>
    %115 = arith.mulf %111, %114 : vector<16x512xf32>
    %116 = math.erf %115 : vector<16x512xf32>
    %cst_42 = arith.constant 1.000000e+00 : f32
    %117 = vector.broadcast %cst_42 : f32 to vector<16x512xf32>
    %118 = arith.addf %117, %116 : vector<16x512xf32>
    %119 = arith.mulf %113, %118 : vector<16x512xf32>
    %120 = arith.truncf %119 : vector<16x512xf32> to vector<16x512xbf16>
    %c0_43 = arith.constant 0 : index
    %c0_44 = arith.constant 0 : index
    %c0_45 = arith.constant 0 : index
    %121 = vector.load %arg11[%c0_43, %c0_44, %c0_45] : memref<2x512x128xbf16, #tpu.memory_space<vmem>>, vector<1x512x128xbf16>
    %122 = vector.shape_cast %121 : vector<1x512x128xbf16> to vector<512x128xbf16>
    %cst_46 = arith.constant dense<0.000000e+00> : vector<16x128xf32>
    %123 = tpu.matmul %120, %122, %cst_46 {dimension_numbers = #tpu.dot_dimension_numbers<[1], [0], [0], [1], [0, 0, 1, 1], [], []>} : vector<16x512xbf16>, vector<512x128xbf16>, vector<16x128xf32> -> vector<16x128xf32>
    %c0_47 = arith.constant 0 : index
    %c0_48 = arith.constant 0 : index
    %124 = vector.load %arg12[%c0_47, %c0_48] : memref<2x128xf32, #tpu.memory_space<vmem>>, vector<1x128xf32>
    %125 = vector.shape_cast %124 : vector<1x128xf32> to vector<128xf32>
    %126 = vector.shape_cast %125 : vector<128xf32> to vector<1x128xf32>
    %127 = vector.broadcast %126 : vector<1x128xf32> to vector<16x128xf32>
    %128 = arith.addf %123, %127 : vector<16x128xf32>
    %129 = arith.addf %102, %128 : vector<16x128xf32>
    %c1 = arith.constant 1 : index
    %c0_49 = arith.constant 0 : index
    %130 = vector.load %arg2[%c1, %c0_49] : memref<2x128xf32, #tpu.memory_space<vmem>>, vector<1x128xf32>
    %131 = vector.shape_cast %130 : vector<1x128xf32> to vector<128xf32>
    %c1_50 = arith.constant 1 : index
    %c0_51 = arith.constant 0 : index
    %132 = vector.load %arg3[%c1_50, %c0_51] : memref<2x128xf32, #tpu.memory_space<vmem>>, vector<1x128xf32>
    %133 = vector.shape_cast %132 : vector<1x128xf32> to vector<128xf32>
    %cst_52 = arith.constant dense<0.000000e+00> : vector<16xf32>
    %134 = vector.multi_reduction <add>, %129, %cst_52 [1] : vector<16x128xf32> to vector<16xf32>
    %135 = vector.shape_cast %134 : vector<16xf32> to vector<16x1xf32>
    %cst_53 = arith.constant 1.280000e+02 : f32
    %136 = vector.broadcast %cst_53 : f32 to vector<16x1xf32>
    %137 = arith.divf %135, %136 : vector<16x1xf32>
    %138 = vector.broadcast %137 : vector<16x1xf32> to vector<16x128xf32>
    %139 = arith.subf %129, %138 : vector<16x128xf32>
    %140 = arith.mulf %139, %139 : vector<16x128xf32>
    %cst_54 = arith.constant dense<0.000000e+00> : vector<16xf32>
    %141 = vector.multi_reduction <add>, %140, %cst_54 [1] : vector<16x128xf32> to vector<16xf32>
    %142 = vector.shape_cast %141 : vector<16xf32> to vector<16x1xf32>
    %cst_55 = arith.constant 1.280000e+02 : f32
    %143 = vector.broadcast %cst_55 : f32 to vector<16x1xf32>
    %144 = arith.divf %142, %143 : vector<16x1xf32>
    %145 = vector.broadcast %137 : vector<16x1xf32> to vector<16x128xf32>
    %146 = arith.subf %129, %145 : vector<16x128xf32>
    %cst_56 = arith.constant 9.99999974E-6 : f32
    %147 = vector.broadcast %cst_56 : f32 to vector<16x1xf32>
    %148 = arith.addf %144, %147 : vector<16x1xf32>
    %149 = math.rsqrt %148 : vector<16x1xf32>
    %150 = vector.broadcast %149 : vector<16x1xf32> to vector<16x128xf32>
    %151 = arith.mulf %146, %150 : vector<16x128xf32>
    %152 = vector.shape_cast %131 : vector<128xf32> to vector<1x128xf32>
    %153 = vector.broadcast %152 : vector<1x128xf32> to vector<16x128xf32>
    %154 = arith.mulf %151, %153 : vector<16x128xf32>
    %155 = vector.shape_cast %133 : vector<128xf32> to vector<1x128xf32>
    %156 = vector.broadcast %155 : vector<1x128xf32> to vector<16x128xf32>
    %157 = arith.addf %154, %156 : vector<16x128xf32>
    %158 = arith.truncf %157 : vector<16x128xf32> to vector<16x128xbf16>
    %c1_57 = arith.constant 1 : index
    %c0_58 = arith.constant 0 : index
    %c0_59 = arith.constant 0 : index
    %159 = vector.load %arg4[%c1_57, %c0_58, %c0_59] : memref<2x128x384xbf16, #tpu.memory_space<vmem>>, vector<1x128x384xbf16>
    %160 = vector.shape_cast %159 : vector<1x128x384xbf16> to vector<128x384xbf16>
    %cst_60 = arith.constant dense<0.000000e+00> : vector<16x384xf32>
    %161 = tpu.matmul %158, %160, %cst_60 {dimension_numbers = #tpu.dot_dimension_numbers<[1], [0], [0], [1], [0, 0, 1, 1], [], []>} : vector<16x128xbf16>, vector<128x384xbf16>, vector<16x384xf32> -> vector<16x384xf32>
    %162 = vector.extract_strided_slice %161 {offsets = [0, 0], sizes = [16, 128], strides = [1, 1]} : vector<16x384xf32> to vector<16x128xf32>
    %163 = vector.extract_strided_slice %161 {offsets = [0, 128], sizes = [16, 128], strides = [1, 1]} : vector<16x384xf32> to vector<16x128xf32>
    %164 = vector.extract_strided_slice %161 {offsets = [0, 256], sizes = [16, 128], strides = [1, 1]} : vector<16x384xf32> to vector<16x128xf32>
    %165 = vector.shape_cast %162 : vector<16x128xf32> to vector<2x8x4x32xf32>
    %166 = tpu.transpose %165, [0, 2, 1, 3] : vector<2x8x4x32xf32> -> vector<2x4x8x32xf32>
    %167 = vector.shape_cast %166 : vector<2x4x8x32xf32> to vector<8x8x32xf32>
    %168 = arith.truncf %167 : vector<8x8x32xf32> to vector<8x8x32xbf16>
    %169 = vector.shape_cast %163 : vector<16x128xf32> to vector<2x8x4x32xf32>
    %170 = tpu.transpose %169, [0, 2, 1, 3] : vector<2x8x4x32xf32> -> vector<2x4x8x32xf32>
    %171 = vector.shape_cast %170 : vector<2x4x8x32xf32> to vector<8x8x32xf32>
    %172 = arith.truncf %171 : vector<8x8x32xf32> to vector<8x8x32xbf16>
    %173 = vector.shape_cast %164 : vector<16x128xf32> to vector<2x8x4x32xf32>
    %174 = tpu.transpose %173, [0, 2, 1, 3] : vector<2x8x4x32xf32> -> vector<2x4x8x32xf32>
    %175 = vector.shape_cast %174 : vector<2x4x8x32xf32> to vector<8x8x32xf32>
    %176 = arith.truncf %175 : vector<8x8x32xf32> to vector<8x8x32xbf16>
    "tpu.trace_start"() <{level = 10 : i32, message = "gnd,gmd->gnm"}> : () -> ()
    %cst_61 = arith.constant dense<0.000000e+00> : vector<8x8x8xf32>
    %177 = tpu.matmul %168, %172, %cst_61 {dimension_numbers = #tpu.dot_dimension_numbers<[2], [2], [1], [1], [0, 0, 0, 1, 1, 1], [0], [0]>} : vector<8x8x32xbf16>, vector<8x8x32xbf16>, vector<8x8x8xf32> -> vector<8x8x8xf32>
    "tpu.trace_stop"() : () -> ()
    %cst_62 = arith.constant dense<0xFF800000> : vector<8x8xf32>
    %178 = vector.multi_reduction <maximumf>, %177, %cst_62 [2] : vector<8x8x8xf32> to vector<8x8xf32>
    %179 = vector.shape_cast %178 : vector<8x8xf32> to vector<8x8x1xf32>
    %180 = vector.broadcast %179 : vector<8x8x1xf32> to vector<8x8x8xf32>
    %181 = arith.subf %177, %180 : vector<8x8x8xf32>
    %182 = math.exp %181 : vector<8x8x8xf32>
    %cst_63 = arith.constant dense<0.000000e+00> : vector<8x8xf32>
    %183 = vector.multi_reduction <add>, %182, %cst_63 [2] : vector<8x8x8xf32> to vector<8x8xf32>
    %184 = vector.shape_cast %183 : vector<8x8xf32> to vector<8x8x1xf32>
    %185 = vector.broadcast %184 : vector<8x8x1xf32> to vector<8x8x8xf32>
    %186 = arith.divf %182, %185 : vector<8x8x8xf32>
    %187 = arith.truncf %186 : vector<8x8x8xf32> to vector<8x8x8xbf16>
    "tpu.trace_start"() <{level = 10 : i32, message = "gnm,gmd->gnd"}> : () -> ()
    %cst_64 = arith.constant dense<0.000000e+00> : vector<8x8x32xf32>
    %188 = tpu.matmul %187, %176, %cst_64 {dimension_numbers = #tpu.dot_dimension_numbers<[2], [1], [1], [2], [0, 0, 0, 1, 1, 2], [0], [0]>} : vector<8x8x8xbf16>, vector<8x8x32xbf16>, vector<8x8x32xf32> -> vector<8x8x32xf32>
    "tpu.trace_stop"() : () -> ()
    %189 = vector.shape_cast %188 : vector<8x8x32xf32> to vector<2x4x8x32xf32>
    %190 = tpu.transpose %189, [0, 2, 1, 3] : vector<2x4x8x32xf32> -> vector<2x8x4x32xf32>
    %191 = vector.shape_cast %190 : vector<2x8x4x32xf32> to vector<16x128xf32>
    %192 = arith.truncf %191 : vector<16x128xf32> to vector<16x128xbf16>
    %c1_65 = arith.constant 1 : index
    %c0_66 = arith.constant 0 : index
    %c0_67 = arith.constant 0 : index
    %193 = vector.load %arg5[%c1_65, %c0_66, %c0_67] : memref<2x128x128xbf16, #tpu.memory_space<vmem>>, vector<1x128x128xbf16>
    %194 = vector.shape_cast %193 : vector<1x128x128xbf16> to vector<128x128xbf16>
    %cst_68 = arith.constant dense<0.000000e+00> : vector<16x128xf32>
    %195 = tpu.matmul %192, %194, %cst_68 {dimension_numbers = #tpu.dot_dimension_numbers<[1], [0], [0], [1], [0, 0, 1, 1], [], []>} : vector<16x128xbf16>, vector<128x128xbf16>, vector<16x128xf32> -> vector<16x128xf32>
    %c1_69 = arith.constant 1 : index
    %c0_70 = arith.constant 0 : index
    %196 = vector.load %arg6[%c1_69, %c0_70] : memref<2x128xf32, #tpu.memory_space<vmem>>, vector<1x128xf32>
    %197 = vector.shape_cast %196 : vector<1x128xf32> to vector<128xf32>
    %198 = vector.shape_cast %197 : vector<128xf32> to vector<1x128xf32>
    %199 = vector.broadcast %198 : vector<1x128xf32> to vector<16x128xf32>
    %200 = arith.addf %195, %199 : vector<16x128xf32>
    %201 = arith.addf %129, %200 : vector<16x128xf32>
    %c1_71 = arith.constant 1 : index
    %c0_72 = arith.constant 0 : index
    %202 = vector.load %arg7[%c1_71, %c0_72] : memref<2x128xf32, #tpu.memory_space<vmem>>, vector<1x128xf32>
    %203 = vector.shape_cast %202 : vector<1x128xf32> to vector<128xf32>
    %c1_73 = arith.constant 1 : index
    %c0_74 = arith.constant 0 : index
    %204 = vector.load %arg8[%c1_73, %c0_74] : memref<2x128xf32, #tpu.memory_space<vmem>>, vector<1x128xf32>
    %205 = vector.shape_cast %204 : vector<1x128xf32> to vector<128xf32>
    %cst_75 = arith.constant dense<0.000000e+00> : vector<16xf32>
    %206 = vector.multi_reduction <add>, %201, %cst_75 [1] : vector<16x128xf32> to vector<16xf32>
    %207 = vector.shape_cast %206 : vector<16xf32> to vector<16x1xf32>
    %cst_76 = arith.constant 1.280000e+02 : f32
    %208 = vector.broadcast %cst_76 : f32 to vector<16x1xf32>
    %209 = arith.divf %207, %208 : vector<16x1xf32>
    %210 = vector.broadcast %209 : vector<16x1xf32> to vector<16x128xf32>
    %211 = arith.subf %201, %210 : vector<16x128xf32>
    %212 = arith.mulf %211, %211 : vector<16x128xf32>
    %cst_77 = arith.constant dense<0.000000e+00> : vector<16xf32>
    %213 = vector.multi_reduction <add>, %212, %cst_77 [1] : vector<16x128xf32> to vector<16xf32>
    %214 = vector.shape_cast %213 : vector<16xf32> to vector<16x1xf32>
    %cst_78 = arith.constant 1.280000e+02 : f32
    %215 = vector.broadcast %cst_78 : f32 to vector<16x1xf32>
    %216 = arith.divf %214, %215 : vector<16x1xf32>
    %217 = vector.broadcast %209 : vector<16x1xf32> to vector<16x128xf32>
    %218 = arith.subf %201, %217 : vector<16x128xf32>
    %cst_79 = arith.constant 9.99999974E-6 : f32
    %219 = vector.broadcast %cst_79 : f32 to vector<16x1xf32>
    %220 = arith.addf %216, %219 : vector<16x1xf32>
    %221 = math.rsqrt %220 : vector<16x1xf32>
    %222 = vector.broadcast %221 : vector<16x1xf32> to vector<16x128xf32>
    %223 = arith.mulf %218, %222 : vector<16x128xf32>
    %224 = vector.shape_cast %203 : vector<128xf32> to vector<1x128xf32>
    %225 = vector.broadcast %224 : vector<1x128xf32> to vector<16x128xf32>
    %226 = arith.mulf %223, %225 : vector<16x128xf32>
    %227 = vector.shape_cast %205 : vector<128xf32> to vector<1x128xf32>
    %228 = vector.broadcast %227 : vector<1x128xf32> to vector<16x128xf32>
    %229 = arith.addf %226, %228 : vector<16x128xf32>
    %230 = arith.truncf %229 : vector<16x128xf32> to vector<16x128xbf16>
    %c1_80 = arith.constant 1 : index
    %c0_81 = arith.constant 0 : index
    %c0_82 = arith.constant 0 : index
    %231 = vector.load %arg9[%c1_80, %c0_81, %c0_82] : memref<2x128x512xbf16, #tpu.memory_space<vmem>>, vector<1x128x512xbf16>
    %232 = vector.shape_cast %231 : vector<1x128x512xbf16> to vector<128x512xbf16>
    %cst_83 = arith.constant dense<0.000000e+00> : vector<16x512xf32>
    %233 = tpu.matmul %230, %232, %cst_83 {dimension_numbers = #tpu.dot_dimension_numbers<[1], [0], [0], [1], [0, 0, 1, 1], [], []>} : vector<16x128xbf16>, vector<128x512xbf16>, vector<16x512xf32> -> vector<16x512xf32>
    %c1_84 = arith.constant 1 : index
    %c0_85 = arith.constant 0 : index
    %234 = vector.load %arg10[%c1_84, %c0_85] : memref<2x512xf32, #tpu.memory_space<vmem>>, vector<1x512xf32>
    %235 = vector.shape_cast %234 : vector<1x512xf32> to vector<512xf32>
    %236 = vector.shape_cast %235 : vector<512xf32> to vector<1x512xf32>
    %237 = vector.broadcast %236 : vector<1x512xf32> to vector<16x512xf32>
    %238 = arith.addf %233, %237 : vector<16x512xf32>
    %cst_86 = arith.constant 5.000000e-01 : f32
    %239 = vector.broadcast %cst_86 : f32 to vector<16x512xf32>
    %240 = arith.mulf %239, %238 : vector<16x512xf32>
    %cst_87 = arith.constant 0.707106769 : f32
    %241 = vector.broadcast %cst_87 : f32 to vector<16x512xf32>
    %242 = arith.mulf %238, %241 : vector<16x512xf32>
    %243 = math.erf %242 : vector<16x512xf32>
    %cst_88 = arith.constant 1.000000e+00 : f32
    %244 = vector.broadcast %cst_88 : f32 to vector<16x512xf32>
    %245 = arith.addf %244, %243 : vector<16x512xf32>
    %246 = arith.mulf %240, %245 : vector<16x512xf32>
    %247 = arith.truncf %246 : vector<16x512xf32> to vector<16x512xbf16>
    %c1_89 = arith.constant 1 : index
    %c0_90 = arith.constant 0 : index
    %c0_91 = arith.constant 0 : index
    %248 = vector.load %arg11[%c1_89, %c0_90, %c0_91] : memref<2x512x128xbf16, #tpu.memory_space<vmem>>, vector<1x512x128xbf16>
    %249 = vector.shape_cast %248 : vector<1x512x128xbf16> to vector<512x128xbf16>
    %cst_92 = arith.constant dense<0.000000e+00> : vector<16x128xf32>
    %250 = tpu.matmul %247, %249, %cst_92 {dimension_numbers = #tpu.dot_dimension_numbers<[1], [0], [0], [1], [0, 0, 1, 1], [], []>} : vector<16x512xbf16>, vector<512x128xbf16>, vector<16x128xf32> -> vector<16x128xf32>
    %c1_93 = arith.constant 1 : index
    %c0_94 = arith.constant 0 : index
    %251 = vector.load %arg12[%c1_93, %c0_94] : memref<2x128xf32, #tpu.memory_space<vmem>>, vector<1x128xf32>
    %252 = vector.shape_cast %251 : vector<1x128xf32> to vector<128xf32>
    %253 = vector.shape_cast %252 : vector<128xf32> to vector<1x128xf32>
    %254 = vector.broadcast %253 : vector<1x128xf32> to vector<16x128xf32>
    %255 = arith.addf %250, %254 : vector<16x128xf32>
    %256 = arith.addf %229, %255 : vector<16x128xf32>
    %c0_95 = arith.constant 0 : index
    %c0_96 = arith.constant 0 : index
    %257 = vector.load %arg13[%c0_95, %c0_96] : memref<1x128xf32, #tpu.memory_space<vmem>>, vector<1x128xf32>
    %258 = vector.shape_cast %257 : vector<1x128xf32> to vector<128xf32>
    %c0_97 = arith.constant 0 : index
    %c0_98 = arith.constant 0 : index
    %259 = vector.load %arg14[%c0_97, %c0_98] : memref<1x128xf32, #tpu.memory_space<vmem>>, vector<1x128xf32>
    %260 = vector.shape_cast %259 : vector<1x128xf32> to vector<128xf32>
    %cst_99 = arith.constant dense<0.000000e+00> : vector<16xf32>
    %261 = vector.multi_reduction <add>, %256, %cst_99 [1] : vector<16x128xf32> to vector<16xf32>
    %262 = vector.shape_cast %261 : vector<16xf32> to vector<16x1xf32>
    %cst_100 = arith.constant 1.280000e+02 : f32
    %263 = vector.broadcast %cst_100 : f32 to vector<16x1xf32>
    %264 = arith.divf %262, %263 : vector<16x1xf32>
    %265 = vector.broadcast %264 : vector<16x1xf32> to vector<16x128xf32>
    %266 = arith.subf %256, %265 : vector<16x128xf32>
    %267 = arith.mulf %266, %266 : vector<16x128xf32>
    %cst_101 = arith.constant dense<0.000000e+00> : vector<16xf32>
    %268 = vector.multi_reduction <add>, %267, %cst_101 [1] : vector<16x128xf32> to vector<16xf32>
    %269 = vector.shape_cast %268 : vector<16xf32> to vector<16x1xf32>
    %cst_102 = arith.constant 1.280000e+02 : f32
    %270 = vector.broadcast %cst_102 : f32 to vector<16x1xf32>
    %271 = arith.divf %269, %270 : vector<16x1xf32>
    %272 = vector.broadcast %264 : vector<16x1xf32> to vector<16x128xf32>
    %273 = arith.subf %256, %272 : vector<16x128xf32>
    %cst_103 = arith.constant 9.99999974E-6 : f32
    %274 = vector.broadcast %cst_103 : f32 to vector<16x1xf32>
    %275 = arith.addf %271, %274 : vector<16x1xf32>
    %276 = math.rsqrt %275 : vector<16x1xf32>
    %277 = vector.broadcast %276 : vector<16x1xf32> to vector<16x128xf32>
    %278 = arith.mulf %273, %277 : vector<16x128xf32>
    %279 = vector.shape_cast %258 : vector<128xf32> to vector<1x128xf32>
    %280 = vector.broadcast %279 : vector<1x128xf32> to vector<16x128xf32>
    %281 = arith.mulf %278, %280 : vector<16x128xf32>
    %282 = vector.shape_cast %260 : vector<128xf32> to vector<1x128xf32>
    %283 = vector.broadcast %282 : vector<1x128xf32> to vector<16x128xf32>
    %284 = arith.addf %281, %283 : vector<16x128xf32>
    %c0_104 = arith.constant 0 : index
    %c0_105 = arith.constant 0 : index
    %285 = vector.load %arg15[%c0_104, %c0_105] : memref<16x128xf32, #tpu.memory_space<vmem>>, vector<16x128xf32>
    tpu.vector_store %arg15[%c0_104, %c0_105], %284 {strides = array<i32>} : memref<16x128xf32, #tpu.memory_space<vmem>>, vector<16x128xf32>,
    return
  }
}

</mosaic_0001>

<llo_original>
// kernel: tpu_custom_call.1
$region0: #{tpu_custom_call.1}
  #allocation0 [shape = 'u32[]', space=smem, size = 0x4, offset = 0x4, fixed_abs, tag = 'smem constant byte address 0x4 - core index']
  #allocation1 [shape = 'u32[144,128]{1,0:T(1,128)}', space=vmem, size = 0x12000, scoped, tag = 'internal scratch']
  %s0 = inlined_call_operand.hbm [shape: f32[16,128], index: 0, kind: input, shape index: {}]
  %s1 = inlined_call_operand.hbm [shape: f32[16,128], index: 1, kind: input, shape index: {}]
  %s2 = inlined_call_operand.vmem [shape: f32[2,128], index: 2, kind: input, shape index: {}]
  %s3 = inlined_call_operand.vmem [shape: f32[2,128], index: 3, kind: input, shape index: {}]
  %s4 = inlined_call_operand.hbm [shape: bf16[2,128,384], index: 4, kind: input, shape index: {}]
  %s5 = inlined_call_operand.hbm [shape: bf16[2,128,128], index: 5, kind: input, shape index: {}]
  %s6 = inlined_call_operand.vmem [shape: f32[2,128], index: 6, kind: input, shape index: {}]
  %s7 = inlined_call_operand.vmem [shape: f32[2,128], index: 7, kind: input, shape index: {}]
  %s8 = inlined_call_operand.vmem [shape: f32[2,128], index: 8, kind: input, shape index: {}]
  %s9 = inlined_call_operand.hbm [shape: bf16[2,128,512], index: 9, kind: input, shape index: {}]
  %s10 = inlined_call_operand.vmem [shape: f32[2,512], index: 10, kind: input, shape index: {}]
  %s11 = inlined_call_operand.hbm [shape: bf16[2,512,128], index: 11, kind: input, shape index: {}]
  %s12 = inlined_call_operand.vmem [shape: f32[2,128], index: 12, kind: input, shape index: {}]
  %s13 = inlined_call_operand.vmem [shape: f32[1,128], index: 13, kind: input, shape index: {}]
  %s14 = inlined_call_operand.vmem [shape: f32[1,128], index: 14, kind: input, shape index: {}]
  %s15 = inlined_call_operand.hbm [shape: f32[16,128], index: 15, kind: output, shape index: {}]
  %s16 = sld [smem:[#allocation0]]
  $region94: #{tpu_custom_call.1} parent=0
    _
  %s18 = ssub.s32 1, %s16
  %s19 = scalar_select 0, %s18, %s16
  $region1: #{tpu_custom_call.1} parent=0
    #allocation2 [shape = 'u8[8192]{0}', space=vmem, size = 0x2000, scoped, tag = 'input window, operand 0, single buffered']
    #allocation3 [shape = 's32[1]{0}', space=sflag, size = 0x4, scoped, tag = 'scoped memory for tpu_custom_call.1']
    #allocation4 [shape = 's32[1]{0}', space=sflag, size = 0x4, scoped, tag = 'scoped memory for tpu_custom_call.1']
    #allocation5 [shape = 'u8[8192]{0}', space=vmem, size = 0x2000, scoped, tag = 'input window, operand 1, single buffered']
    #allocation6 [shape = 's32[1]{0}', space=sflag, size = 0x4, scoped, tag = 'scoped memory for tpu_custom_call.1']
    #allocation7 [shape = 'u8[196608]{0}', space=vmem, size = 0x30000, scoped, tag = 'input window, operand 4, single buffered']
    #allocation8 [shape = 'u8[65536]{0}', space=vmem, size = 0x10000, scoped, tag = 'input window, operand 5, single buffered']
    #allocation9 [shape = 's32[1]{0}', space=sflag, size = 0x4, scoped, tag = 'scoped memory for tpu_custom_call.1']
    #allocation10 [shape = 'u8[262144]{0}', space=vmem, size = 0x40000, scoped, tag = 'input window, operand 9, single buffered']
    #allocation11 [shape = 'u8[262144]{0}', space=vmem, size = 0x40000, scoped, tag = 'input window, operand 11, single buffered']
    #allocation12 [shape = 's32[1]{0}', space=sflag, size = 0x4, scoped, tag = 'scoped memory for tpu_custom_call.1']
    #allocation13 [shape = 'u8[8192]{0}', space=vmem, size = 0x2000, scoped, tag = 'output window, operand 0, single buffered']
    %20 = vsyncpa [#allocation3], 0
    %21 = vsyncpa [#allocation6], 0
    %22 = vsyncpa [#allocation9], 0
    %23 = vsyncpa [#allocation12], 0
    %24 = vsyncpa [#allocation4], 0
    // Predicated region
    $region2: #{tpu_custom_call.1} parent=1 // pred_check
      _
    $region3: #{tpu_custom_call.1} parent=1 // pred_check_branch
      %26 = sbr.rel (0) target = $region5
    $region4: #{tpu_custom_call.1} parent=1 // pred_region
      %s28 = ssub.s32 256, 256
      %29 = vsyncadd [#allocation3], %s28
      %s30 = sshll.u32 [#allocation2], 4
      %s31 = int_to_ptr.vmem [resolvable:$true] %s30
      %36 = dma.hbm_to_vmem [thread:$0]  %s0, 256, %s31, [#allocation3], 128, 128, 8
    $region5: #{tpu_custom_call.1} parent=1 // pred_fallthru
      _
    // Predicated region
    $region6: #{tpu_custom_call.1} parent=1 // pred_check
      _
    $region7: #{tpu_custom_call.1} parent=1 // pred_check_branch
      %38 = sbr.rel (0) target = $region9
    $region8: #{tpu_custom_call.1} parent=1 // pred_region
      %s40 = ssub.s32 256, 256
      %41 = vsyncadd [#allocation6], %s40
      %s42 = sshll.u32 [#allocation5], 4
      %s43 = int_to_ptr.vmem [resolvable:$true] %s42
      %48 = dma.hbm_to_vmem [thread:$0]  %s1, 256, %s43, [#allocation6], 128, 128, 8
    $region9: #{tpu_custom_call.1} parent=1 // pred_fallthru
      _
    // Predicated region
    $region10: #{tpu_custom_call.1} parent=1 // pred_check
      _
    $region11: #{tpu_custom_call.1} parent=1 // pred_check_branch
      %50 = sbr.rel (0) target = $region13
    $region12: #{tpu_custom_call.1} parent=1 // pred_region
      _
    $region13: #{tpu_custom_call.1} parent=1 // pred_fallthru
      _
    // Predicated region
    $region14: #{tpu_custom_call.1} parent=1 // pred_check
      _
    $region15: #{tpu_custom_call.1} parent=1 // pred_check_branch
      %52 = sbr.rel (0) target = $region17
    $region16: #{tpu_custom_call.1} parent=1 // pred_region
      _
    $region17: #{tpu_custom_call.1} parent=1 // pred_fallthru
      _
    // Predicated region
    $region18: #{tpu_custom_call.1} parent=1 // pred_check
      _
    $region19: #{tpu_custom_call.1} parent=1 // pred_check_branch
      %54 = sbr.rel (0) target = $region21
    $region20: #{tpu_custom_call.1} parent=1 // pred_region
      %s56 = ssub.s32 6144, 6144
      %57 = vsyncadd [#allocation6], %s56
      %s58 = sshll.u32 [#allocation7], 4
      %s59 = int_to_ptr.vmem [resolvable:$true] %s58
      %64 = dma.hbm_to_vmem [thread:$0]  %s4, 6144, %s59, [#allocation6], 192, 192, 12
    $region21: #{tpu_custom_call.1} parent=1 // pred_fallthru
      _
    // Predicated region
    $region22: #{tpu_custom_call.1} parent=1 // pred_check
      _
    $region23: #{tpu_custom_call.1} parent=1 // pred_check_branch
      %66 = sbr.rel (0) target = $region25
    $region24: #{tpu_custom_call.1} parent=1 // pred_region
      %s68 = ssub.s32 2048, 2048
      %69 = vsyncadd [#allocation9], %s68
      %s70 = sshll.u32 [#allocation8], 4
      %s71 = int_to_ptr.vmem [resolvable:$true] %s70
      %76 = dma.hbm_to_vmem [thread:$0]  %s5, 2048, %s71, [#allocation9], 64, 64, 4
    $region25: #{tpu_custom_call.1} parent=1 // pred_fallthru
      _
    // Predicated region
    $region26: #{tpu_custom_call.1} parent=1 // pred_check
      _
    $region27: #{tpu_custom_call.1} parent=1 // pred_check_branch
      %78 = sbr.rel (0) target = $region29
    $region28: #{tpu_custom_call.1} parent=1 // pred_region
      _
    $region29: #{tpu_custom_call.1} parent=1 // pred_fallthru
      _
    // Predicated region
    $region30: #{tpu_custom_call.1} parent=1 // pred_check
      _
    $region31: #{tpu_custom_call.1} parent=1 // pred_check_branch
      %80 = sbr.rel (0) target = $region33
    $region32: #{tpu_custom_call.1} parent=1 // pred_region
      _
    $region33: #{tpu_custom_call.1} parent=1 // pred_fallthru
      _
    // Predicated region
    $region34: #{tpu_custom_call.1} parent=1 // pred_check
      _
    $region35: #{tpu_custom_call.1} parent=1 // pred_check_branch
      %82 = sbr.rel (0) target = $region37
    $region36: #{tpu_custom_call.1} parent=1 // pred_region
      _
    $region37: #{tpu_custom_call.1} parent=1 // pred_fallthru
      _
    // Predicated region
    $region38: #{tpu_custom_call.1} parent=1 // pred_check
      _
    $region39: #{tpu_custom_call.1} parent=1 // pred_check_branch
      %84 = sbr.rel (0) target = $region41
    $region40: #{tpu_custom_call.1} parent=1 // pred_region
      %s86 = ssub.s32 8192, 8192
      %87 = vsyncadd [#allocation9], %s86
      %s88 = sshll.u32 [#allocation10], 4
      %s89 = int_to_ptr.vmem [resolvable:$true] %s88
      %94 = dma.hbm_to_vmem [thread:$0]  %s9, 8192, %s89, [#allocation9], 256, 256, 16
    $region41: #{tpu_custom_call.1} parent=1 // pred_fallthru
      _
    // Predicated region
    $region42: #{tpu_custom_call.1} parent=1 // pred_check
      _
    $region43: #{tpu_custom_call.1} parent=1 // pred_check_branch
      %96 = sbr.rel (0) target = $region45
    $region44: #{tpu_custom_call.1} parent=1 // pred_region
      _
    $region45: #{tpu_custom_call.1} parent=1 // pred_fallthru
      _
    // Predicated region
    $region46: #{tpu_custom_call.1} parent=1 // pred_check
      _
    $region47: #{tpu_custom_call.1} parent=1 // pred_check_branch
      %98 = sbr.rel (0) target = $region49
    $region48: #{tpu_custom_call.1} parent=1 // pred_region
      %s100 = ssub.s32 8192, 8192
      %101 = vsyncadd [#allocation12], %s100
      %s102 = sshll.u32 [#allocation11], 4
      %s103 = int_to_ptr.vmem [resolvable:$true] %s102
      %108 = dma.hbm_to_vmem [thread:$0]  %s11, 8192, %s103, [#allocation12], 64, 64, 4
    $region49: #{tpu_custom_call.1} parent=1 // pred_fallthru
      _
    // Predicated region
    $region50: #{tpu_custom_call.1} parent=1 // pred_check
      _
    $region51: #{tpu_custom_call.1} parent=1 // pred_check_branch
      %110 = sbr.rel (0) target = $region53
    $region52: #{tpu_custom_call.1} parent=1 // pred_region
      _
    $region53: #{tpu_custom_call.1} parent=1 // pred_fallthru
      _
    // Predicated region
    $region54: #{tpu_custom_call.1} parent=1 // pred_check
      _
    $region55: #{tpu_custom_call.1} parent=1 // pred_check_branch
      %112 = sbr.rel (0) target = $region57
    $region56: #{tpu_custom_call.1} parent=1 // pred_region
      _
    $region57: #{tpu_custom_call.1} parent=1 // pred_fallthru
      _
    // Predicated region
    $region58: #{tpu_custom_call.1} parent=1 // pred_check
      _
    $region59: #{tpu_custom_call.1} parent=1 // pred_check_branch
      %114 = sbr.rel (0) target = $region61
    $region60: #{tpu_custom_call.1} parent=1 // pred_region
      _
    $region61: #{tpu_custom_call.1} parent=1 // pred_fallthru
      _
    // Predicated region
    $region62: #{tpu_custom_call.1} parent=1 // pred_check
      _
    $region63: #{tpu_custom_call.1} parent=1 // pred_check_branch
      %116 = sbr.rel (0) target = $region65
    $region64: #{tpu_custom_call.1} parent=1 // pred_region
      %117 = dma.done [#allocation3], 256
    $region65: #{tpu_custom_call.1} parent=1 // pred_fallthru
      _
    // Predicated region
    $region66: #{tpu_custom_call.1} parent=1 // pred_check
      _
    $region67: #{tpu_custom_call.1} parent=1 // pred_check_branch
      %119 = sbr.rel (0) target = $region69
    $region68: #{tpu_custom_call.1} parent=1 // pred_region
      %120 = dma.done [#allocation6], 256
    $region69: #{tpu_custom_call.1} parent=1 // pred_fallthru
      _
    // Predicated region
    $region70: #{tpu_custom_call.1} parent=1 // pred_check
      _
    $region71: #{tpu_custom_call.1} parent=1 // pred_check_branch
      %122 = sbr.rel (0) target = $region73
    $region72: #{tpu_custom_call.1} parent=1 // pred_region
      %123 = dma.done [#allocation6], 6144
    $region73: #{tpu_custom_call.1} parent=1 // pred_fallthru
      _
    // Predicated region
    $region74: #{tpu_custom_call.1} parent=1 // pred_check
      _
    $region75: #{tpu_custom_call.1} parent=1 // pred_check_branch
      %125 = sbr.rel (0) target = $region77
    $region76: #{tpu_custom_call.1} parent=1 // pred_region
      %126 = dma.done [#allocation9], 2048
    $region77: #{tpu_custom_call.1} parent=1 // pred_fallthru
      _
    // Predicated region
    $region78: #{tpu_custom_call.1} parent=1 // pred_check
      _
    $region79: #{tpu_custom_call.1} parent=1 // pred_check_branch
      %128 = sbr.rel (0) target = $region81
    $region80: #{tpu_custom_call.1} parent=1 // pred_region
      %129 = dma.done [#allocation9], 8192
    $region81: #{tpu_custom_call.1} parent=1 // pred_fallthru
      _
    // Predicated region
    $region82: #{tpu_custom_call.1} parent=1 // pred_check
      _
    $region83: #{tpu_custom_call.1} parent=1 // pred_check_branch
      %131 = sbr.rel (0) target = $region85
    $region84: #{tpu_custom_call.1} parent=1 // pred_region
      %132 = dma.done [#allocation12], 8192
    $region85: #{tpu_custom_call.1} parent=1 // pred_fallthru
      _
    %v134 = vld [vmem:[#allocation2] sm:$0xff]
    %v135 = vld [vmem:[#allocation2 + $0x8] sm:$0xff]
    %v136 = vld [vmem:[#allocation5] sm:$0xff]
    %v137 = vld [vmem:[#allocation5 + $0x8] sm:$0xff]
    %v138 = vadd.f32 %v134, %v136
    %v139 = vadd.f32 %v135, %v137
    %v140 = vld [vmem:[%s2] sm:$0x1]
    %v141 = vld [vmem:[%s3] sm:$0x1]
    %142 = vadd.xlane.f32.xlu0 %v138
    %v143 = vpop.xlane.xlu0 %142
    %144 = vadd.xlane.f32.xlu0 %v139
    %v145 = vpop.xlane.xlu0 %144
    %v146 = vrcp.pop 128.0
    %v147 = vmul.f32 %v143, %v146
    %v148 = vmul.f32 %v145, %v146
    %v149 = vsub.f32 %v138, %v147
    %v150 = vsub.f32 %v139, %v148
    %v151 = vmul.f32 %v149, %v149
    %v152 = vmul.f32 %v150, %v150
    %153 = vadd.xlane.f32.xlu0 %v151
    %v154 = vpop.xlane.xlu0 %153
    %155 = vadd.xlane.f32.xlu0 %v152
    %v156 = vpop.xlane.xlu0 %155
    %v157 = vmul.f32 %v154, %v146
    %v158 = vmul.f32 %v156, %v146
    %v159 = vadd.f32 %v157, 1e-05
    %v160 = vadd.f32 %v158, 1e-05
    %v161 = vrsqrt.pop %v159
    %v162 = vrsqrt.pop %v160
    %v163 = vmul.f32 %v149, %v161
    %v164 = vmul.f32 %v150, %v162
    %v165 = vlaneseq
    %v166 = vshrl.u32 %v165, 7
    %v167 = vsub.s32 0, %v166
    %v168 = vrot.slane %v140, %v167
    %v169 = vmul.f32 %v163, %v168
    %v170 = vmul.f32 %v164, %v168
    %v171 = vlaneseq
    %v172 = vshrl.u32 %v171, 7
    %v173 = vsub.s32 0, %v172
    %v174 = vrot.slane %v141, %v173
    %v175 = vadd.f32 %v169, %v174
    %v176 = vadd.f32 %v170, %v174
    %v177 = vpack.c.bf16 %v176, %v175
    %v178 = vld [vmem:[#allocation7] sm:$0xff]
    %v179 = vld [vmem:[#allocation7 + $0x8] sm:$0xf]
    %v180 = vld [vmem:[#allocation7 + $0xc] sm:$0xff]
    %v181 = vld [vmem:[#allocation7 + $0x14] sm:$0xf]
    %v182 = vld [vmem:[#allocation7 + $0x18] sm:$0xff]
    %v183 = vld [vmem:[#allocation7 + $0x20] sm:$0xf]
    %v184 = vld [vmem:[#allocation7 + $0x24] sm:$0xff]
    %v185 = vld [vmem:[#allocation7 + $0x2c] sm:$0xf]
    %v186 = vld [vmem:[#allocation7 + $0x30] sm:$0xff]
    %v187 = vld [vmem:[#allocation7 + $0x38] sm:$0xf]
    %v188 = vld [vmem:[#allocation7 + $0x3c] sm:$0xff]
    %v189 = vld [vmem:[#allocation7 + $0x44] sm:$0xf]
    %v190 = vld [vmem:[#allocation7 + $0x48] sm:$0xff]
    %v191 = vld [vmem:[#allocation7 + $0x50] sm:$0xf]
    %v192 = vld [vmem:[#allocation7 + $0x54] sm:$0xff]
    %v193 = vld [vmem:[#allocation7 + $0x5c] sm:$0xf]
    %v194 = vld [vmem:[#allocation7 + $0x60] sm:$0xff]
    %v195 = vld [vmem:[#allocation7 + $0x68] sm:$0xf]
    %v196 = vld [vmem:[#allocation7 + $0x6c] sm:$0xff]
    %v197 = vld [vmem:[#allocation7 + $0x74] sm:$0xf]
    %v198 = vld [vmem:[#allocation7 + $0x78] sm:$0xff]
    %v199 = vld [vmem:[#allocation7 + $0x80] sm:$0xf]
    %v200 = vld [vmem:[#allocation7 + $0x84] sm:$0xff]
    %v201 = vld [vmem:[#allocation7 + $0x8c] sm:$0xf]
    %v202 = vld [vmem:[#allocation7 + $0x90] sm:$0xff]
    %v203 = vld [vmem:[#allocation7 + $0x98] sm:$0xf]
    %v204 = vld [vmem:[#allocation7 + $0x9c] sm:$0xff]
    %v205 = vld [vmem:[#allocation7 + $0xa4] sm:$0xf]
    %v206 = vld [vmem:[#allocation7 + $0xa8] sm:$0xff]
    %v207 = vld [vmem:[#allocation7 + $0xb0] sm:$0xf]
    %v208 = vld [vmem:[#allocation7 + $0xb4] sm:$0xff]
    %v209 = vld [vmem:[#allocation7 + $0xbc] sm:$0xf]
    %v242 = vunpack.c.l.b16 %v178
    %v243 = vunpack.c.h.b16 %v178
    %v244 = vunpack.c.l.b16 %v179
    %v245 = vunpack.c.l.b16 %v180
    %v246 = vunpack.c.h.b16 %v180
    %v247 = vunpack.c.l.b16 %v181
    %v248 = vunpack.c.l.b16 %v182
    %v249 = vunpack.c.h.b16 %v182
    %v250 = vunpack.c.l.b16 %v183
    %v251 = vunpack.c.l.b16 %v184
    %v252 = vunpack.c.h.b16 %v184
    %v253 = vunpack.c.l.b16 %v185
    %v254 = vunpack.c.l.b16 %v186
    %v255 = vunpack.c.h.b16 %v186
    %v256 = vunpack.c.l.b16 %v187
    %v257 = vunpack.c.l.b16 %v188
    %v258 = vunpack.c.h.b16 %v188
    %v259 = vunpack.c.l.b16 %v189
    %v260 = vunpack.c.l.b16 %v190
    %v261 = vunpack.c.h.b16 %v190
    %v262 = vunpack.c.l.b16 %v191
    %v263 = vunpack.c.l.b16 %v192
    %v264 = vunpack.c.h.b16 %v192
    %v265 = vunpack.c.l.b16 %v193
    %v266 = vunpack.c.l.b16 %v194
    %v267 = vunpack.c.h.b16 %v194
    %v268 = vunpack.c.l.b16 %v195
    %v269 = vunpack.c.l.b16 %v196
    %v270 = vunpack.c.h.b16 %v196
    %v271 = vunpack.c.l.b16 %v197
    %v272 = vunpack.c.l.b16 %v198
    %v273 = vunpack.c.h.b16 %v198
    %v274 = vunpack.c.l.b16 %v199
    %v275 = vunpack.c.l.b16 %v200
    %v276 = vunpack.c.h.b16 %v200
    %v277 = vunpack.c.l.b16 %v201
    %v278 = vunpack.c.l.b16 %v202
    %v279 = vunpack.c.h.b16 %v202
    %v280 = vunpack.c.l.b16 %v203
    %v281 = vunpack.c.l.b16 %v204
    %v282 = vunpack.c.h.b16 %v204
    %v283 = vunpack.c.l.b16 %v205
    %v284 = vunpack.c.l.b16 %v206
    %v285 = vunpack.c.h.b16 %v206
    %v286 = vunpack.c.l.b16 %v207
    %v287 = vunpack.c.l.b16 %v208
    %v288 = vunpack.c.h.b16 %v208
    %v289 = vunpack.c.l.b16 %v209
    %v290 = vpack.c.b16 %v245, %v242
    %v291 = vpack.c.b16 %v246, %v243
    %v292 = vpack.c.b16 %v247, %v244
    %v293 = vpack.c.b16 %v251, %v248
    %v294 = vpack.c.b16 %v252, %v249
    %v295 = vpack.c.b16 %v253, %v250
    %v296 = vpack.c.b16 %v257, %v254
    %v297 = vpack.c.b16 %v258, %v255
    %v298 = vpack.c.b16 %v259, %v256
    %v299 = vpack.c.b16 %v263, %v260
    %v300 = vpack.c.b16 %v264, %v261
    %v301 = vpack.c.b16 %v265, %v262
    %v302 = vpack.c.b16 %v269, %v266
    %v303 = vpack.c.b16 %v270, %v267
    %v304 = vpack.c.b16 %v271, %v268
    %v305 = vpack.c.b16 %v275, %v272
    %v306 = vpack.c.b16 %v276, %v273
    %v307 = vpack.c.b16 %v277, %v274
    %v308 = vpack.c.b16 %v281, %v278
    %v309 = vpack.c.b16 %v282, %v279
    %v310 = vpack.c.b16 %v283, %v280
    %v311 = vpack.c.b16 %v287, %v284
    %v312 = vpack.c.b16 %v288, %v285
    %v313 = vpack.c.b16 %v289, %v286
    %338 = vmatprep.subr.bf16.mxu0 %v291
    %339 = vmatpush1.bf16.msra.mxu0 %v290
    %340 = vmatprep.subr.bf16.mxu0 %v294
    %341 = vmatpush1.bf16.msra.mxu0 %v293
    %342 = vmatprep.subr.bf16.mxu0 %v297
    %343 = vmatpush1.bf16.msra.mxu0 %v296
    %344 = vmatprep.subr.bf16.mxu0 %v300
    %345 = vmatpush1.bf16.msra.mxu0 %v299
    %346 = vmatprep.subr.bf16.mxu0 %v303
    %347 = vmatpush1.bf16.msra.mxu0 %v302
    %348 = vmatprep.subr.bf16.mxu0 %v306
    %349 = vmatpush1.bf16.msra.mxu0 %v305
    %350 = vmatprep.subr.bf16.mxu0 %v309
    %351 = vmatpush1.bf16.msra.mxu0 %v308
    %352 = vmatprep.subr.bf16.mxu0 %v312
    %353 = vmatpush1.bf16.msra.mxu0 %v311
    %354 = vmatprep.subr.bf16.mxu0 0
    %355 = vmatpush1.bf16.msra.mxu0 0
    %356 = vmatprep.subr.bf16.mxu0 0
    %357 = vmatpush1.bf16.msra.mxu0 0
    %358 = vmatprep.subr.bf16.mxu0 0
    %359 = vmatpush1.bf16.msra.mxu0 0
    %360 = vmatprep.subr.bf16.mxu0 0
    %361 = vmatpush1.bf16.msra.mxu0 0
    %362 = vmatprep.subr.bf16.mxu0 0
    %363 = vmatpush1.bf16.msra.mxu0 0
    %364 = vmatprep.subr.bf16.mxu0 0
    %365 = vmatpush1.bf16.msra.mxu0 0
    %366 = vmatprep.subr.bf16.mxu0 0
    %367 = vmatpush1.bf16.msra.mxu0 0
    %368 = vmatprep.subr.bf16.mxu0 0
    %369 = vmatpush1.bf16.msra.mxu0 0
    %370 = vmatprep.mubr.bf16.mxu0 0
    %371 = vmatmul.mubr.bf16.gmra.mrb[0].mxu0 %v177
    %v372 = vpop.f32.mrb[0].mxu0
    %v373 = vadd.f32 0.0, %v372
    %v374 = vpop.f32.mrb[0].mxu0
    %v375 = vadd.f32 0.0, %v374
    %v376 = vpop.f32.mrb[0].mxu0
    %v377 = vadd.f32 0.0, %v376
    %v378 = vpop.f32.mrb[0].mxu0
    %v379 = vadd.f32 0.0, %v378
    %380 = vdwg.mxu0
    %381 = vmatprep.subr.bf16.mxu0 0
    %382 = vmatpush1.bf16.msra.mxu0 %v292
    %383 = vmatprep.subr.bf16.mxu0 0
    %384 = vmatpush1.bf16.msra.mxu0 %v295
    %385 = vmatprep.subr.bf16.mxu0 0
    %386 = vmatpush1.bf16.msra.mxu0 %v298
    %387 = vmatprep.subr.bf16.mxu0 0
    %388 = vmatpush1.bf16.msra.mxu0 %v301
    %389 = vmatprep.subr.bf16.mxu0 0
    %390 = vmatpush1.bf16.msra.mxu0 %v304
    %391 = vmatprep.subr.bf16.mxu0 0
    %392 = vmatpush1.bf16.msra.mxu0 %v307
    %393 = vmatprep.subr.bf16.mxu0 0
    %394 = vmatpush1.bf16.msra.mxu0 %v310
    %395 = vmatprep.subr.bf16.mxu0 0
    %396 = vmatpush1.bf16.msra.mxu0 %v313
    %397 = vmatprep.subr.bf16.mxu0 0
    %398 = vmatpush1.bf16.msra.mxu0 0
    %399 = vmatprep.subr.bf16.mxu0 0
    %400 = vmatpush1.bf16.msra.mxu0 0
    %401 = vmatprep.subr.bf16.mxu0 0
    %402 = vmatpush1.bf16.msra.mxu0 0
    %403 = vmatprep.subr.bf16.mxu0 0
    %404 = vmatpush1.bf16.msra.mxu0 0
    %405 = vmatprep.subr.bf16.mxu0 0
    %406 = vmatpush1.bf16.msra.mxu0 0
    %407 = vmatprep.subr.bf16.mxu0 0
    %408 = vmatpush1.bf16.msra.mxu0 0
    %409 = vmatprep.subr.bf16.mxu0 0
    %410 = vmatpush1.bf16.msra.mxu0 0
    %411 = vmatprep.subr.bf16.mxu0 0
    %412 = vmatpush1.bf16.msra.mxu0 0
    %413 = vmatprep.mubr.bf16.mxu0 0
    %414 = vmatmul.mubr.bf16.gmra.mrb[0].mxu0 %v177
    %v415 = vpop.f32.mrb[0].mxu0
    %v416 = vadd.f32 0.0, %v415
    %v417 = vpop.f32.mrb[0].mxu0
    %v418 = vpop.f32.mrb[0].mxu0
    %v419 = vadd.f32 0.0, %v418
    %v420 = vpop.f32.mrb[0].mxu0
    %421 = vdwg.mxu0
    %424 = vrot.lane.b32.xlu0 %v373, 96
    %v425 = vpop.permute.xlu0 %424
    %426 = vrot.lane.b32.xlu0 %v377, 96
    %v427 = vpop.permute.xlu0 %426
    %430 = vrot.lane.b32.xlu0 %v373, 64
    %v431 = vpop.permute.xlu0 %430
    %432 = vrot.lane.b32.xlu0 %v377, 64
    %v433 = vpop.permute.xlu0 %432
    %436 = vrot.lane.b32.xlu0 %v373, 32
    %v437 = vpop.permute.xlu0 %436
    %438 = vrot.lane.b32.xlu0 %v377, 32
    %v439 = vpop.permute.xlu0 %438
    %v442 = vcombine.low %v373, %v431
    %v443 = vcombine.high %v373, %v431
    %v445 = vunpack.c.l.s4 1983009808
    %v446 = vunpack.c.0.s8 %v445
    %v447 = vlaneseq
    %v448 = vshrl.u32 %v447, 7
    %v449 = vsub.s32 %v446, %v448
    %v450 = vrot.slane %v442, %v449
    %v452 = vunpack.c.l.s4 1983009808
    %v453 = vunpack.c.0.s8 %v452
    %v454 = vlaneseq
    %v455 = vshrl.u32 %v454, 7
    %v456 = vsub.s32 %v453, %v455
    %v457 = vrot.slane %v443, %v456
    %v458 = vcombine.low %v425, %v437
    %v459 = vcombine.high %v425, %v437
    %v461 = vunpack.c.l.s4 1983009808
    %v462 = vunpack.c.0.s8 %v461
    %v463 = vlaneseq
    %v464 = vshrl.u32 %v463, 7
    %v465 = vsub.s32 %v462, %v464
    %v466 = vrot.slane %v458, %v465
    %v468 = vunpack.c.l.s4 1983009808
    %v469 = vunpack.c.0.s8 %v468
    %v470 = vlaneseq
    %v471 = vshrl.u32 %v470, 7
    %v472 = vsub.s32 %v469, %v471
    %v473 = vrot.slane %v459, %v472
    %v474 = vcombine.low %v450, %v466
    %v475 = vcombine.high %v450, %v466
    %v477 = vunpack.c.l.s4 1934713408
    %v478 = vunpack.c.0.s8 %v477
    %v479 = vlaneseq
    %v480 = vshrl.u32 %v479, 7
    %v481 = vsub.s32 %v478, %v480
    %v482 = vrot.slane %v474, %v481
    %v484 = vunpack.c.l.s4 1934713408
    %v485 = vunpack.c.0.s8 %v484
    %v486 = vlaneseq
    %v487 = vshrl.u32 %v486, 7
    %v488 = vsub.s32 %v485, %v487
    %v489 = vrot.slane %v475, %v488
    %v490 = vcombine.low %v457, %v473
    %v491 = vcombine.high %v457, %v473
    %v493 = vunpack.c.l.s4 1934713408
    %v494 = vunpack.c.0.s8 %v493
    %v495 = vlaneseq
    %v496 = vshrl.u32 %v495, 7
    %v497 = vsub.s32 %v494, %v496
    %v498 = vrot.slane %v490, %v497
    %v500 = vunpack.c.l.s4 1934713408
    %v501 = vunpack.c.0.s8 %v500
    %v502 = vlaneseq
    %v503 = vshrl.u32 %v502, 7
    %v504 = vsub.s32 %v501, %v503
    %v505 = vrot.slane %v491, %v504
    %v506 = vcombine.high %v482, 0.0
    %v507 = vcombine.high %v489, 0.0
    %v508 = vcombine.high %v498, 0.0
    %v509 = vcombine.high %v505, 0.0
    %v510 = vcombine.low %v377, %v433
    %v511 = vcombine.high %v377, %v433
    %v513 = vunpack.c.l.s4 1983009808
    %v514 = vunpack.c.0.s8 %v513
    %v515 = vlaneseq
    %v516 = vshrl.u32 %v515, 7
    %v517 = vsub.s32 %v514, %v516
    %v518 = vrot.slane %v510, %v517
    %v520 = vunpack.c.l.s4 1983009808
    %v521 = vunpack.c.0.s8 %v520
    %v522 = vlaneseq
    %v523 = vshrl.u32 %v522, 7
    %v524 = vsub.s32 %v521, %v523
    %v525 = vrot.slane %v511, %v524
    %v526 = vcombine.low %v427, %v439
    %v527 = vcombine.high %v427, %v439
    %v529 = vunpack.c.l.s4 1983009808
    %v530 = vunpack.c.0.s8 %v529
    %v531 = vlaneseq
    %v532 = vshrl.u32 %v531, 7
    %v533 = vsub.s32 %v530, %v532
    %v534 = vrot.slane %v526, %v533
    %v536 = vunpack.c.l.s4 1983009808
    %v537 = vunpack.c.0.s8 %v536
    %v538 = vlaneseq
    %v539 = vshrl.u32 %v538, 7
    %v540 = vsub.s32 %v537, %v539
    %v541 = vrot.slane %v527, %v540
    %v542 = vcombine.low %v518, %v534
    %v543 = vcombine.high %v518, %v534
    %v545 = vunpack.c.l.s4 1934713408
    %v546 = vunpack.c.0.s8 %v545
    %v547 = vlaneseq
    %v548 = vshrl.u32 %v547, 7
    %v549 = vsub.s32 %v546, %v548
    %v550 = vrot.slane %v542, %v549
    %v552 = vunpack.c.l.s4 1934713408
    %v553 = vunpack.c.0.s8 %v552
    %v554 = vlaneseq
    %v555 = vshrl.u32 %v554, 7
    %v556 = vsub.s32 %v553, %v555
    %v557 = vrot.slane %v543, %v556
    %v558 = vcombine.low %v525, %v541
    %v559 = vcombine.high %v525, %v541
    %v561 = vunpack.c.l.s4 1934713408
    %v562 = vunpack.c.0.s8 %v561
    %v563 = vlaneseq
    %v564 = vshrl.u32 %v563, 7
    %v565 = vsub.s32 %v562, %v564
    %v566 = vrot.slane %v558, %v565
    %v568 = vunpack.c.l.s4 1934713408
    %v569 = vunpack.c.0.s8 %v568
    %v570 = vlaneseq
    %v571 = vshrl.u32 %v570, 7
    %v572 = vsub.s32 %v569, %v571
    %v573 = vrot.slane %v559, %v572
    %v574 = vcombine.high %v550, 0.0
    %v575 = vcombine.high %v557, 0.0
    %v576 = vcombine.high %v566, 0.0
    %v577 = vcombine.high %v573, 0.0
    %v578 = vcombine.low %v482, %v489
    %v580 = vunpack.c.l.s4 1983009808
    %v581 = vunpack.c.0.s8 %v580
    %v582 = vlaneseq
    %v583 = vshrl.u32 %v582, 7
    %v584 = vsub.s32 %v581, %v583
    %v585 = vrot.slane %v578, %v584
    %v586 = vcombine.low %v506, %v507
    %v588 = vunpack.c.l.s4 1983009808
    %v589 = vunpack.c.0.s8 %v588
    %v590 = vlaneseq
    %v591 = vshrl.u32 %v590, 7
    %v592 = vsub.s32 %v589, %v591
    %v593 = vrot.slane %v586, %v592
    %v594 = vcombine.low %v498, %v505
    %v596 = vunpack.c.l.s4 1983009808
    %v597 = vunpack.c.0.s8 %v596
    %v598 = vlaneseq
    %v599 = vshrl.u32 %v598, 7
    %v600 = vsub.s32 %v597, %v599
    %v601 = vrot.slane %v594, %v600
    %v602 = vcombine.low %v508, %v509
    %v604 = vunpack.c.l.s4 1983009808
    %v605 = vunpack.c.0.s8 %v604
    %v606 = vlaneseq
    %v607 = vshrl.u32 %v606, 7
    %v608 = vsub.s32 %v605, %v607
    %v609 = vrot.slane %v602, %v608
    %v610 = vcombine.low %v585, %v593
    %v611 = vcombine.high %v585, %v593
    %v613 = vunpack.c.l.s4 1934713408
    %v614 = vunpack.c.0.s8 %v613
    %v615 = vlaneseq
    %v616 = vshrl.u32 %v615, 7
    %v617 = vsub.s32 %v614, %v616
    %v618 = vrot.slane %v610, %v617
    %v620 = vunpack.c.l.s4 1934713408
    %v621 = vunpack.c.0.s8 %v620
    %v622 = vlaneseq
    %v623 = vshrl.u32 %v622, 7
    %v624 = vsub.s32 %v621, %v623
    %v625 = vrot.slane %v611, %v624
    %v626 = vcombine.low %v601, %v609
    %v627 = vcombine.high %v601, %v609
    %v629 = vunpack.c.l.s4 1934713408
    %v630 = vunpack.c.0.s8 %v629
    %v631 = vlaneseq
    %v632 = vshrl.u32 %v631, 7
    %v633 = vsub.s32 %v630, %v632
    %v634 = vrot.slane %v626, %v633
    %v636 = vunpack.c.l.s4 1934713408
    %v637 = vunpack.c.0.s8 %v636
    %v638 = vlaneseq
    %v639 = vshrl.u32 %v638, 7
    %v640 = vsub.s32 %v637, %v639
    %v641 = vrot.slane %v627, %v640
    %v642 = vcombine.low %v618, %v634
    %v643 = vcombine.high %v618, %v634
    %v644 = vcombine.low %v625, %v641
    %v645 = vcombine.high %v625, %v641
    %v646 = vcombine.low %v550, %v557
    %v648 = vunpack.c.l.s4 1983009808
    %v649 = vunpack.c.0.s8 %v648
    %v650 = vlaneseq
    %v651 = vshrl.u32 %v650, 7
    %v652 = vsub.s32 %v649, %v651
    %v653 = vrot.slane %v646, %v652
    %v654 = vcombine.low %v574, %v575
    %v656 = vunpack.c.l.s4 1983009808
    %v657 = vunpack.c.0.s8 %v656
    %v658 = vlaneseq
    %v659 = vshrl.u32 %v658, 7
    %v660 = vsub.s32 %v657, %v659
    %v661 = vrot.slane %v654, %v660
    %v662 = vcombine.low %v566, %v573
    %v664 = vunpack.c.l.s4 1983009808
    %v665 = vunpack.c.0.s8 %v664
    %v666 = vlaneseq
    %v667 = vshrl.u32 %v666, 7
    %v668 = vsub.s32 %v665, %v667
    %v669 = vrot.slane %v662, %v668
    %v670 = vcombine.low %v576, %v577
    %v672 = vunpack.c.l.s4 1983009808
    %v673 = vunpack.c.0.s8 %v672
    %v674 = vlaneseq
    %v675 = vshrl.u32 %v674, 7
    %v676 = vsub.s32 %v673, %v675
    %v677 = vrot.slane %v670, %v676
    %v678 = vcombine.low %v653, %v661
    %v679 = vcombine.high %v653, %v661
    %v681 = vunpack.c.l.s4 1934713408
    %v682 = vunpack.c.0.s8 %v681
    %v683 = vlaneseq
    %v684 = vshrl.u32 %v683, 7
    %v685 = vsub.s32 %v682, %v684
    %v686 = vrot.slane %v678, %v685
    %v688 = vunpack.c.l.s4 1934713408
    %v689 = vunpack.c.0.s8 %v688
    %v690 = vlaneseq
    %v691 = vshrl.u32 %v690, 7
    %v692 = vsub.s32 %v689, %v691
    %v693 = vrot.slane %v679, %v692
    %v694 = vcombine.low %v669, %v677
    %v695 = vcombine.high %v669, %v677
    %v697 = vunpack.c.l.s4 1934713408
    %v698 = vunpack.c.0.s8 %v697
    %v699 = vlaneseq
    %v700 = vshrl.u32 %v699, 7
    %v701 = vsub.s32 %v698, %v700
    %v702 = vrot.slane %v694, %v701
    %v704 = vunpack.c.l.s4 1934713408
    %v705 = vunpack.c.0.s8 %v704
    %v706 = vlaneseq
    %v707 = vshrl.u32 %v706, 7
    %v708 = vsub.s32 %v705, %v707
    %v709 = vrot.slane %v695, %v708
    %v710 = vcombine.low %v686, %v702
    %v711 = vcombine.high %v686, %v702
    %v712 = vcombine.low %v693, %v709
    %v713 = vcombine.high %v693, %v709
    %v714 = vpack.c.bf16 %v642, %v642
    %v715 = vpack.c.bf16 %v643, %v643
    %v716 = vpack.c.bf16 %v644, %v644
    %v717 = vpack.c.bf16 %v645, %v645
    %v718 = vpack.c.bf16 %v710, %v710
    %v719 = vpack.c.bf16 %v711, %v711
    %v720 = vpack.c.bf16 %v712, %v712
    %v721 = vpack.c.bf16 %v713, %v713
    %724 = vrot.lane.b32.xlu0 %v375, 96
    %v725 = vpop.permute.xlu0 %724
    %726 = vrot.lane.b32.xlu0 %v379, 96
    %v727 = vpop.permute.xlu0 %726
    %730 = vrot.lane.b32.xlu0 %v375, 64
    %v731 = vpop.permute.xlu0 %730
    %732 = vrot.lane.b32.xlu0 %v379, 64
    %v733 = vpop.permute.xlu0 %732
    %736 = vrot.lane.b32.xlu0 %v375, 32
    %v737 = vpop.permute.xlu0 %736
    %738 = vrot.lane.b32.xlu0 %v379, 32
    %v739 = vpop.permute.xlu0 %738
    %v742 = vcombine.low %v375, %v731
    %v743 = vcombine.high %v375, %v731
    %v745 = vunpack.c.l.s4 1983009808
    %v746 = vunpack.c.0.s8 %v745
    %v747 = vlaneseq
    %v748 = vshrl.u32 %v747, 7
    %v749 = vsub.s32 %v746, %v748
    %v750 = vrot.slane %v742, %v749
    %v752 = vunpack.c.l.s4 1983009808
    %v753 = vunpack.c.0.s8 %v752
    %v754 = vlaneseq
    %v755 = vshrl.u32 %v754, 7
    %v756 = vsub.s32 %v753, %v755
    %v757 = vrot.slane %v743, %v756
    %v758 = vcombine.low %v725, %v737
    %v759 = vcombine.high %v725, %v737
    %v761 = vunpack.c.l.s4 1983009808
    %v762 = vunpack.c.0.s8 %v761
    %v763 = vlaneseq
    %v764 = vshrl.u32 %v763, 7
    %v765 = vsub.s32 %v762, %v764
    %v766 = vrot.slane %v758, %v765
    %v768 = vunpack.c.l.s4 1983009808
    %v769 = vunpack.c.0.s8 %v768
    %v770 = vlaneseq
    %v771 = vshrl.u32 %v770, 7
    %v772 = vsub.s32 %v769, %v771
    %v773 = vrot.slane %v759, %v772
    %v774 = vcombine.low %v750, %v766
    %v775 = vcombine.high %v750, %v766
    %v777 = vunpack.c.l.s4 1934713408
    %v778 = vunpack.c.0.s8 %v777
    %v779 = vlaneseq
    %v780 = vshrl.u32 %v779, 7
    %v781 = vsub.s32 %v778, %v780
    %v782 = vrot.slane %v774, %v781
    %v784 = vunpack.c.l.s4 1934713408
    %v785 = vunpack.c.0.s8 %v784
    %v786 = vlaneseq
    %v787 = vshrl.u32 %v786, 7
    %v788 = vsub.s32 %v785, %v787
    %v789 = vrot.slane %v775, %v788
    %v790 = vcombine.low %v757, %v773
    %v791 = vcombine.high %v757, %v773
    %v793 = vunpack.c.l.s4 1934713408
    %v794 = vunpack.c.0.s8 %v793
    %v795 = vlaneseq
    %v796 = vshrl.u32 %v795, 7
    %v797 = vsub.s32 %v794, %v796
    %v798 = vrot.slane %v790, %v797
    %v800 = vunpack.c.l.s4 1934713408
    %v801 = vunpack.c.0.s8 %v800
    %v802 = vlaneseq
    %v803 = vshrl.u32 %v802, 7
    %v804 = vsub.s32 %v801, %v803
    %v805 = vrot.slane %v791, %v804
    %v806 = vcombine.high %v782, 0.0
    %v807 = vcombine.high %v789, 0.0
    %v808 = vcombine.high %v798, 0.0
    %v809 = vcombine.high %v805, 0.0
    %v810 = vcombine.low %v379, %v733
    %v811 = vcombine.high %v379, %v733
    %v813 = vunpack.c.l.s4 1983009808
    %v814 = vunpack.c.0.s8 %v813
    %v815 = vlaneseq
    %v816 = vshrl.u32 %v815, 7
    %v817 = vsub.s32 %v814, %v816
    %v818 = vrot.slane %v810, %v817
    %v820 = vunpack.c.l.s4 1983009808
    %v821 = vunpack.c.0.s8 %v820
    %v822 = vlaneseq
    %v823 = vshrl.u32 %v822, 7
    %v824 = vsub.s32 %v821, %v823
    %v825 = vrot.slane %v811, %v824
    %v826 = vcombine.low %v727, %v739
    %v827 = vcombine.high %v727, %v739
    %v829 = vunpack.c.l.s4 1983009808
    %v830 = vunpack.c.0.s8 %v829
    %v831 = vlaneseq
    %v832 = vshrl.u32 %v831, 7
    %v833 = vsub.s32 %v830, %v832
    %v834 = vrot.slane %v826, %v833
    %v836 = vunpack.c.l.s4 1983009808
    %v837 = vunpack.c.0.s8 %v836
    %v838 = vlaneseq
    %v839 = vshrl.u32 %v838, 7
    %v840 = vsub.s32 %v837, %v839
    %v841 = vrot.slane %v827, %v840
    %v842 = vcombine.low %v818, %v834
    %v843 = vcombine.high %v818, %v834
    %v845 = vunpack.c.l.s4 1934713408
    %v846 = vunpack.c.0.s8 %v845
    %v847 = vlaneseq
    %v848 = vshrl.u32 %v847, 7
    %v849 = vsub.s32 %v846, %v848
    %v850 = vrot.slane %v842, %v849
    %v852 = vunpack.c.l.s4 1934713408
    %v853 = vunpack.c.0.s8 %v852
    %v854 = vlaneseq
    %v855 = vshrl.u32 %v854, 7
    %v856 = vsub.s32 %v853, %v855
    %v857 = vrot.slane %v843, %v856
    %v858 = vcombine.low %v825, %v841
    %v859 = vcombine.high %v825, %v841
    %v861 = vunpack.c.l.s4 1934713408
    %v862 = vunpack.c.0.s8 %v861
    %v863 = vlaneseq
    %v864 = vshrl.u32 %v863, 7
    %v865 = vsub.s32 %v862, %v864
    %v866 = vrot.slane %v858, %v865
    %v868 = vunpack.c.l.s4 1934713408
    %v869 = vunpack.c.0.s8 %v868
    %v870 = vlaneseq
    %v871 = vshrl.u32 %v870, 7
    %v872 = vsub.s32 %v869, %v871
    %v873 = vrot.slane %v859, %v872
    %v874 = vcombine.high %v850, 0.0
    %v875 = vcombine.high %v857, 0.0
    %v876 = vcombine.high %v866, 0.0
    %v877 = vcombine.high %v873, 0.0
    %v878 = vcombine.low %v782, %v789
    %v880 = vunpack.c.l.s4 1983009808
    %v881 = vunpack.c.0.s8 %v880
    %v882 = vlaneseq
    %v883 = vshrl.u32 %v882, 7
    %v884 = vsub.s32 %v881, %v883
    %v885 = vrot.slane %v878, %v884
    %v886 = vcombine.low %v806, %v807
    %v888 = vunpack.c.l.s4 1983009808
    %v889 = vunpack.c.0.s8 %v888
    %v890 = vlaneseq
    %v891 = vshrl.u32 %v890, 7
    %v892 = vsub.s32 %v889, %v891
    %v893 = vrot.slane %v886, %v892
    %v894 = vcombine.low %v798, %v805
    %v896 = vunpack.c.l.s4 1983009808
    %v897 = vunpack.c.0.s8 %v896
    %v898 = vlaneseq
    %v899 = vshrl.u32 %v898, 7
    %v900 = vsub.s32 %v897, %v899
    %v901 = vrot.slane %v894, %v900
    %v902 = vcombine.low %v808, %v809
    %v904 = vunpack.c.l.s4 1983009808
    %v905 = vunpack.c.0.s8 %v904
    %v906 = vlaneseq
    %v907 = vshrl.u32 %v906, 7
    %v908 = vsub.s32 %v905, %v907
    %v909 = vrot.slane %v902, %v908
    %v910 = vcombine.low %v885, %v893
    %v911 = vcombine.high %v885, %v893
    %v913 = vunpack.c.l.s4 1934713408
    %v914 = vunpack.c.0.s8 %v913
    %v915 = vlaneseq
    %v916 = vshrl.u32 %v915, 7
    %v917 = vsub.s32 %v914, %v916
    %v918 = vrot.slane %v910, %v917
    %v920 = vunpack.c.l.s4 1934713408
    %v921 = vunpack.c.0.s8 %v920
    %v922 = vlaneseq
    %v923 = vshrl.u32 %v922, 7
    %v924 = vsub.s32 %v921, %v923
    %v925 = vrot.slane %v911, %v924
    %v926 = vcombine.low %v901, %v909
    %v927 = vcombine.high %v901, %v909
    %v929 = vunpack.c.l.s4 1934713408
    %v930 = vunpack.c.0.s8 %v929
    %v931 = vlaneseq
    %v932 = vshrl.u32 %v931, 7
    %v933 = vsub.s32 %v930, %v932
    %v934 = vrot.slane %v926, %v933
    %v936 = vunpack.c.l.s4 1934713408
    %v937 = vunpack.c.0.s8 %v936
    %v938 = vlaneseq
    %v939 = vshrl.u32 %v938, 7
    %v940 = vsub.s32 %v937, %v939
    %v941 = vrot.slane %v927, %v940
    %v942 = vcombine.low %v918, %v934
    %v943 = vcombine.high %v918, %v934
    %v944 = vcombine.low %v925, %v941
    %v945 = vcombine.high %v925, %v941
    %v946 = vcombine.low %v850, %v857
    %v948 = vunpack.c.l.s4 1983009808
    %v949 = vunpack.c.0.s8 %v948
    %v950 = vlaneseq
    %v951 = vshrl.u32 %v950, 7
    %v952 = vsub.s32 %v949, %v951
    %v953 = vrot.slane %v946, %v952
    %v954 = vcombine.low %v874, %v875
    %v956 = vunpack.c.l.s4 1983009808
    %v957 = vunpack.c.0.s8 %v956
    %v958 = vlaneseq
    %v959 = vshrl.u32 %v958, 7
    %v960 = vsub.s32 %v957, %v959
    %v961 = vrot.slane %v954, %v960
    %v962 = vcombine.low %v866, %v873
    %v964 = vunpack.c.l.s4 1983009808
    %v965 = vunpack.c.0.s8 %v964
    %v966 = vlaneseq
    %v967 = vshrl.u32 %v966, 7
    %v968 = vsub.s32 %v965, %v967
    %v969 = vrot.slane %v962, %v968
    %v970 = vcombine.low %v876, %v877
    %v972 = vunpack.c.l.s4 1983009808
    %v973 = vunpack.c.0.s8 %v972
    %v974 = vlaneseq
    %v975 = vshrl.u32 %v974, 7
    %v976 = vsub.s32 %v973, %v975
    %v977 = vrot.slane %v970, %v976
    %v978 = vcombine.low %v953, %v961
    %v979 = vcombine.high %v953, %v961
    %v981 = vunpack.c.l.s4 1934713408
    %v982 = vunpack.c.0.s8 %v981
    %v983 = vlaneseq
    %v984 = vshrl.u32 %v983, 7
    %v985 = vsub.s32 %v982, %v984
    %v986 = vrot.slane %v978, %v985
    %v988 = vunpack.c.l.s4 1934713408
    %v989 = vunpack.c.0.s8 %v988
    %v990 = vlaneseq
    %v991 = vshrl.u32 %v990, 7
    %v992 = vsub.s32 %v989, %v991
    %v993 = vrot.slane %v979, %v992
    %v994 = vcombine.low %v969, %v977
    %v995 = vcombine.high %v969, %v977
    %v997 = vunpack.c.l.s4 1934713408
    %v998 = vunpack.c.0.s8 %v997
    %v999 = vlaneseq
    %v1000 = vshrl.u32 %v999, 7
    %v1001 = vsub.s32 %v998, %v1000
    %v1002 = vrot.slane %v994, %v1001
    %v1004 = vunpack.c.l.s4 1934713408
    %v1005 = vunpack.c.0.s8 %v1004
    %v1006 = vlaneseq
    %v1007 = vshrl.u32 %v1006, 7
    %v1008 = vsub.s32 %v1005, %v1007
    %v1009 = vrot.slane %v995, %v1008
    %v1010 = vcombine.low %v986, %v1002
    %v1011 = vcombine.high %v986, %v1002
    %v1012 = vcombine.low %v993, %v1009
    %v1013 = vcombine.high %v993, %v1009
    %v1014 = vpack.c.bf16 %v942, %v942
    %v1015 = vpack.c.bf16 %v943, %v943
    %v1016 = vpack.c.bf16 %v944, %v944
    %v1017 = vpack.c.bf16 %v945, %v945
    %v1018 = vpack.c.bf16 %v1010, %v1010
    %v1019 = vpack.c.bf16 %v1011, %v1011
    %v1020 = vpack.c.bf16 %v1012, %v1012
    %v1021 = vpack.c.bf16 %v1013, %v1013
    %1024 = vrot.lane.b32.xlu0 %v416, 96
    %v1025 = vpop.permute.xlu0 %1024
    %1026 = vrot.lane.b32.xlu0 %v419, 96
    %v1027 = vpop.permute.xlu0 %1026
    %1030 = vrot.lane.b32.xlu0 %v416, 64
    %v1031 = vpop.permute.xlu0 %1030
    %1032 = vrot.lane.b32.xlu0 %v419, 64
    %v1033 = vpop.permute.xlu0 %1032
    %1036 = vrot.lane.b32.xlu0 %v416, 32
    %v1037 = vpop.permute.xlu0 %1036
    %1038 = vrot.lane.b32.xlu0 %v419, 32
    %v1039 = vpop.permute.xlu0 %1038
    %v1042 = vcombine.low %v416, %v1031
    %v1043 = vcombine.high %v416, %v1031
    %v1045 = vunpack.c.l.s4 1983009808
    %v1046 = vunpack.c.0.s8 %v1045
    %v1047 = vlaneseq
    %v1048 = vshrl.u32 %v1047, 7
    %v1049 = vsub.s32 %v1046, %v1048
    %v1050 = vrot.slane %v1042, %v1049
    %v1052 = vunpack.c.l.s4 1983009808
    %v1053 = vunpack.c.0.s8 %v1052
    %v1054 = vlaneseq
    %v1055 = vshrl.u32 %v1054, 7
    %v1056 = vsub.s32 %v1053, %v1055
    %v1057 = vrot.slane %v1043, %v1056
    %v1058 = vcombine.low %v1025, %v1037
    %v1059 = vcombine.high %v1025, %v1037
    %v1061 = vunpack.c.l.s4 1983009808
    %v1062 = vunpack.c.0.s8 %v1061
    %v1063 = vlaneseq
    %v1064 = vshrl.u32 %v1063, 7
    %v1065 = vsub.s32 %v1062, %v1064
    %v1066 = vrot.slane %v1058, %v1065
    %v1068 = vunpack.c.l.s4 1983009808
    %v1069 = vunpack.c.0.s8 %v1068
    %v1070 = vlaneseq
    %v1071 = vshrl.u32 %v1070, 7
    %v1072 = vsub.s32 %v1069, %v1071
    %v1073 = vrot.slane %v1059, %v1072
    %v1074 = vcombine.low %v1050, %v1066
    %v1075 = vcombine.high %v1050, %v1066
    %v1077 = vunpack.c.l.s4 1934713408
    %v1078 = vunpack.c.0.s8 %v1077
    %v1079 = vlaneseq
    %v1080 = vshrl.u32 %v1079, 7
    %v1081 = vsub.s32 %v1078, %v1080
    %v1082 = vrot.slane %v1074, %v1081
    %v1084 = vunpack.c.l.s4 1934713408
    %v1085 = vunpack.c.0.s8 %v1084
    %v1086 = vlaneseq
    %v1087 = vshrl.u32 %v1086, 7
    %v1088 = vsub.s32 %v1085, %v1087
    %v1089 = vrot.slane %v1075, %v1088
    %v1090 = vcombine.low %v1057, %v1073
    %v1091 = vcombine.high %v1057, %v1073
    %v1093 = vunpack.c.l.s4 1934713408
    %v1094 = vunpack.c.0.s8 %v1093
    %v1095 = vlaneseq
    %v1096 = vshrl.u32 %v1095, 7
    %v1097 = vsub.s32 %v1094, %v1096
    %v1098 = vrot.slane %v1090, %v1097
    %v1100 = vunpack.c.l.s4 1934713408
    %v1101 = vunpack.c.0.s8 %v1100
    %v1102 = vlaneseq
    %v1103 = vshrl.u32 %v1102, 7
    %v1104 = vsub.s32 %v1101, %v1103
    %v1105 = vrot.slane %v1091, %v1104
    %v1106 = vcombine.high %v1082, 0.0
    %v1107 = vcombine.high %v1089, 0.0
    %v1108 = vcombine.high %v1098, 0.0
    %v1109 = vcombine.high %v1105, 0.0
    %v1110 = vcombine.low %v419, %v1033
    %v1111 = vcombine.high %v419, %v1033
    %v1113 = vunpack.c.l.s4 1983009808
    %v1114 = vunpack.c.0.s8 %v1113
    %v1115 = vlaneseq
    %v1116 = vshrl.u32 %v1115, 7
    %v1117 = vsub.s32 %v1114, %v1116
    %v1118 = vrot.slane %v1110, %v1117
    %v1120 = vunpack.c.l.s4 1983009808
    %v1121 = vunpack.c.0.s8 %v1120
    %v1122 = vlaneseq
    %v1123 = vshrl.u32 %v1122, 7
    %v1124 = vsub.s32 %v1121, %v1123
    %v1125 = vrot.slane %v1111, %v1124
    %v1126 = vcombine.low %v1027, %v1039
    %v1127 = vcombine.high %v1027, %v1039
    %v1129 = vunpack.c.l.s4 1983009808
    %v1130 = vunpack.c.0.s8 %v1129
    %v1131 = vlaneseq
    %v1132 = vshrl.u32 %v1131, 7
    %v1133 = vsub.s32 %v1130, %v1132
    %v1134 = vrot.slane %v1126, %v1133
    %v1136 = vunpack.c.l.s4 1983009808
    %v1137 = vunpack.c.0.s8 %v1136
    %v1138 = vlaneseq
    %v1139 = vshrl.u32 %v1138, 7
    %v1140 = vsub.s32 %v1137, %v1139
    %v1141 = vrot.slane %v1127, %v1140
    %v1142 = vcombine.low %v1118, %v1134
    %v1143 = vcombine.high %v1118, %v1134
    %v1145 = vunpack.c.l.s4 1934713408
    %v1146 = vunpack.c.0.s8 %v1145
    %v1147 = vlaneseq
    %v1148 = vshrl.u32 %v1147, 7
    %v1149 = vsub.s32 %v1146, %v1148
    %v1150 = vrot.slane %v1142, %v1149
    %v1152 = vunpack.c.l.s4 1934713408
    %v1153 = vunpack.c.0.s8 %v1152
    %v1154 = vlaneseq
    %v1155 = vshrl.u32 %v1154, 7
    %v1156 = vsub.s32 %v1153, %v1155
    %v1157 = vrot.slane %v1143, %v1156
    %v1158 = vcombine.low %v1125, %v1141
    %v1159 = vcombine.high %v1125, %v1141
    %v1161 = vunpack.c.l.s4 1934713408
    %v1162 = vunpack.c.0.s8 %v1161
    %v1163 = vlaneseq
    %v1164 = vshrl.u32 %v1163, 7
    %v1165 = vsub.s32 %v1162, %v1164
    %v1166 = vrot.slane %v1158, %v1165
    %v1168 = vunpack.c.l.s4 1934713408
    %v1169 = vunpack.c.0.s8 %v1168
    %v1170 = vlaneseq
    %v1171 = vshrl.u32 %v1170, 7
    %v1172 = vsub.s32 %v1169, %v1171
    %v1173 = vrot.slane %v1159, %v1172
    %v1174 = vcombine.high %v1150, 0.0
    %v1175 = vcombine.high %v1157, 0.0
    %v1176 = vcombine.high %v1166, 0.0
    %v1177 = vcombine.high %v1173, 0.0
    %v1178 = vcombine.low %v1082, %v1089
    %v1180 = vunpack.c.l.s4 1983009808
    %v1181 = vunpack.c.0.s8 %v1180
    %v1182 = vlaneseq
    %v1183 = vshrl.u32 %v1182, 7
    %v1184 = vsub.s32 %v1181, %v1183
    %v1185 = vrot.slane %v1178, %v1184
    %v1186 = vcombine.low %v1106, %v1107
    %v1188 = vunpack.c.l.s4 1983009808
    %v1189 = vunpack.c.0.s8 %v1188
    %v1190 = vlaneseq
    %v1191 = vshrl.u32 %v1190, 7
    %v1192 = vsub.s32 %v1189, %v1191
    %v1193 = vrot.slane %v1186, %v1192
    %v1194 = vcombine.low %v1098, %v1105
    %v1196 = vunpack.c.l.s4 1983009808
    %v1197 = vunpack.c.0.s8 %v1196
    %v1198 = vlaneseq
    %v1199 = vshrl.u32 %v1198, 7
    %v1200 = vsub.s32 %v1197, %v1199
    %v1201 = vrot.slane %v1194, %v1200
    %v1202 = vcombine.low %v1108, %v1109
    %v1204 = vunpack.c.l.s4 1983009808
    %v1205 = vunpack.c.0.s8 %v1204
    %v1206 = vlaneseq
    %v1207 = vshrl.u32 %v1206, 7
    %v1208 = vsub.s32 %v1205, %v1207
    %v1209 = vrot.slane %v1202, %v1208
    %v1210 = vcombine.low %v1185, %v1193
    %v1211 = vcombine.high %v1185, %v1193
    %v1213 = vunpack.c.l.s4 1934713408
    %v1214 = vunpack.c.0.s8 %v1213
    %v1215 = vlaneseq
    %v1216 = vshrl.u32 %v1215, 7
    %v1217 = vsub.s32 %v1214, %v1216
    %v1218 = vrot.slane %v1210, %v1217
    %v1220 = vunpack.c.l.s4 1934713408
    %v1221 = vunpack.c.0.s8 %v1220
    %v1222 = vlaneseq
    %v1223 = vshrl.u32 %v1222, 7
    %v1224 = vsub.s32 %v1221, %v1223
    %v1225 = vrot.slane %v1211, %v1224
    %v1226 = vcombine.low %v1201, %v1209
    %v1227 = vcombine.high %v1201, %v1209
    %v1229 = vunpack.c.l.s4 1934713408
    %v1230 = vunpack.c.0.s8 %v1229
    %v1231 = vlaneseq
    %v1232 = vshrl.u32 %v1231, 7
    %v1233 = vsub.s32 %v1230, %v1232
    %v1234 = vrot.slane %v1226, %v1233
    %v1236 = vunpack.c.l.s4 1934713408
    %v1237 = vunpack.c.0.s8 %v1236
    %v1238 = vlaneseq
    %v1239 = vshrl.u32 %v1238, 7
    %v1240 = vsub.s32 %v1237, %v1239
    %v1241 = vrot.slane %v1227, %v1240
    %v1242 = vcombine.low %v1218, %v1234
    %v1243 = vcombine.high %v1218, %v1234
    %v1244 = vcombine.low %v1225, %v1241
    %v1245 = vcombine.high %v1225, %v1241
    %v1246 = vcombine.low %v1150, %v1157
    %v1248 = vunpack.c.l.s4 1983009808
    %v1249 = vunpack.c.0.s8 %v1248
    %v1250 = vlaneseq
    %v1251 = vshrl.u32 %v1250, 7
    %v1252 = vsub.s32 %v1249, %v1251
    %v1253 = vrot.slane %v1246, %v1252
    %v1254 = vcombine.low %v1174, %v1175
    %v1256 = vunpack.c.l.s4 1983009808
    %v1257 = vunpack.c.0.s8 %v1256
    %v1258 = vlaneseq
    %v1259 = vshrl.u32 %v1258, 7
    %v1260 = vsub.s32 %v1257, %v1259
    %v1261 = vrot.slane %v1254, %v1260
    %v1262 = vcombine.low %v1166, %v1173
    %v1264 = vunpack.c.l.s4 1983009808
    %v1265 = vunpack.c.0.s8 %v1264
    %v1266 = vlaneseq
    %v1267 = vshrl.u32 %v1266, 7
    %v1268 = vsub.s32 %v1265, %v1267
    %v1269 = vrot.slane %v1262, %v1268
    %v1270 = vcombine.low %v1176, %v1177
    %v1272 = vunpack.c.l.s4 1983009808
    %v1273 = vunpack.c.0.s8 %v1272
    %v1274 = vlaneseq
    %v1275 = vshrl.u32 %v1274, 7
    %v1276 = vsub.s32 %v1273, %v1275
    %v1277 = vrot.slane %v1270, %v1276
    %v1278 = vcombine.low %v1253, %v1261
    %v1279 = vcombine.high %v1253, %v1261
    %v1281 = vunpack.c.l.s4 1934713408
    %v1282 = vunpack.c.0.s8 %v1281
    %v1283 = vlaneseq
    %v1284 = vshrl.u32 %v1283, 7
    %v1285 = vsub.s32 %v1282, %v1284
    %v1286 = vrot.slane %v1278, %v1285
    %v1288 = vunpack.c.l.s4 1934713408
    %v1289 = vunpack.c.0.s8 %v1288
    %v1290 = vlaneseq
    %v1291 = vshrl.u32 %v1290, 7
    %v1292 = vsub.s32 %v1289, %v1291
    %v1293 = vrot.slane %v1279, %v1292
    %v1294 = vcombine.low %v1269, %v1277
    %v1295 = vcombine.high %v1269, %v1277
    %v1297 = vunpack.c.l.s4 1934713408
    %v1298 = vunpack.c.0.s8 %v1297
    %v1299 = vlaneseq
    %v1300 = vshrl.u32 %v1299, 7
    %v1301 = vsub.s32 %v1298, %v1300
    %v1302 = vrot.slane %v1294, %v1301
    %v1304 = vunpack.c.l.s4 1934713408
    %v1305 = vunpack.c.0.s8 %v1304
    %v1306 = vlaneseq
    %v1307 = vshrl.u32 %v1306, 7
    %v1308 = vsub.s32 %v1305, %v1307
    %v1309 = vrot.slane %v1295, %v1308
    %v1310 = vcombine.low %v1286, %v1302
    %v1311 = vcombine.high %v1286, %v1302
    %v1312 = vcombine.low %v1293, %v1309
    %v1313 = vcombine.high %v1293, %v1309
    %v1314 = vpack.c.bf16 %v1242, %v1242
    %v1315 = vpack.c.bf16 %v1243, %v1243
    %v1316 = vpack.c.bf16 %v1244, %v1244
    %v1317 = vpack.c.bf16 %v1245, %v1245
    %v1318 = vpack.c.bf16 %v1310, %v1310
    %v1319 = vpack.c.bf16 %v1311, %v1311
    %v1320 = vpack.c.bf16 %v1312, %v1312
    %v1321 = vpack.c.bf16 %v1313, %v1313
    %vm1322 = vcmask 261120
    %v1324 = vsel %vm1322, %v714, 0
    %v1327 = vsel %vm1322, %v1014, 0
    %1329 = vmatprep.subr.bf16.mxu0 0
    %1330 = vmatpush1.bf16.xpose.msra.mxu0 %v1327
    %1331 = vmatprep.subr.bf16.mxu0 0
    %1332 = vmatpush1.bf16.xpose.msra.mxu0 0
    %1333 = vmatprep.subr.bf16.mxu0 0
    %1334 = vmatpush1.bf16.xpose.msra.mxu0 0
    %1335 = vmatprep.subr.bf16.mxu0 0
    %1336 = vmatpush1.bf16.xpose.msra.mxu0 0
    %1337 = vmatprep.subr.bf16.mxu0 0
    %1338 = vmatpush1.bf16.xpose.msra.mxu0 0
    %1339 = vmatprep.subr.bf16.mxu0 0
    %1340 = vmatpush1.bf16.xpose.msra.mxu0 0
    %1341 = vmatprep.subr.bf16.mxu0 0
    %1342 = vmatpush1.bf16.xpose.msra.mxu0 0
    %1343 = vmatprep.subr.bf16.mxu0 0
    %1344 = vmatpush1.bf16.xpose.msra.mxu0 0
    %1345 = vmatprep.subr.bf16.mxu0 0
    %1346 = vmatpush1.bf16.xpose.msra.mxu0 0
    %1347 = vmatprep.subr.bf16.mxu0 0
    %1348 = vmatpush1.bf16.xpose.msra.mxu0 0
    %1349 = vmatprep.subr.bf16.mxu0 0
    %1350 = vmatpush1.bf16.xpose.msra.mxu0 0
    %1351 = vmatprep.subr.bf16.mxu0 0
    %1352 = vmatpush1.bf16.xpose.msra.mxu0 0
    %1353 = vmatprep.subr.bf16.mxu0 0
    %1354 = vmatpush1.bf16.xpose.msra.mxu0 0
    %1355 = vmatprep.subr.bf16.mxu0 0
    %1356 = vmatpush1.bf16.xpose.msra.mxu0 0
    %1357 = vmatprep.subr.bf16.mxu0 0
    %1358 = vmatpush1.bf16.xpose.msra.mxu0 0
    %1359 = vmatprep.subr.bf16.mxu0 0
    %1360 = vmatpush1.bf16.xpose.msra.mxu0 0
    %1361 = vmatprep.mubr.bf16.mxu0 0
    %1362 = vmatmul.mubr.bf16.gmra.mrb[0].mxu0 %v1324
    %v1363 = vpop.f32.mrb[0].mxu0
    %v1364 = vadd.f32 0.0, %v1363
    %v1365 = vpop.f32.mrb[0].mxu0
    %v1366 = vpop.f32.mrb[0].mxu0
    %v1367 = vpop.f32.mrb[0].mxu0
    %1368 = vdwg.mxu0
    %v1370 = vsel %vm1322, %v715, 0
    %v1373 = vsel %vm1322, %v1015, 0
    %1375 = vmatprep.subr.bf16.mxu0 0
    %1376 = vmatpush1.bf16.xpose.msra.mxu0 %v1373
    %1377 = vmatprep.subr.bf16.mxu0 0
    %1378 = vmatpush1.bf16.xpose.msra.mxu0 0
    %1379 = vmatprep.subr.bf16.mxu0 0
    %1380 = vmatpush1.bf16.xpose.msra.mxu0 0
    %1381 = vmatprep.subr.bf16.mxu0 0
    %1382 = vmatpush1.bf16.xpose.msra.mxu0 0
    %1383 = vmatprep.subr.bf16.mxu0 0
    %1384 = vmatpush1.bf16.xpose.msra.mxu0 0
    %1385 = vmatprep.subr.bf16.mxu0 0
    %1386 = vmatpush1.bf16.xpose.msra.mxu0 0
    %1387 = vmatprep.subr.bf16.mxu0 0
    %1388 = vmatpush1.bf16.xpose.msra.mxu0 0
    %1389 = vmatprep.subr.bf16.mxu0 0
    %1390 = vmatpush1.bf16.xpose.msra.mxu0 0
    %1391 = vmatprep.subr.bf16.mxu0 0
    %1392 = vmatpush1.bf16.xpose.msra.mxu0 0
    %1393 = vmatprep.subr.bf16.mxu0 0
    %1394 = vmatpush1.bf16.xpose.msra.mxu0 0
    %1395 = vmatprep.subr.bf16.mxu0 0
    %1396 = vmatpush1.bf16.xpose.msra.mxu0 0
    %1397 = vmatprep.subr.bf16.mxu0 0
    %1398 = vmatpush1.bf16.xpose.msra.mxu0 0
    %1399 = vmatprep.subr.bf16.mxu0 0
    %1400 = vmatpush1.bf16.xpose.msra.mxu0 0
    %1401 = vmatprep.subr.bf16.mxu0 0
    %1402 = vmatpush1.bf16.xpose.msra.mxu0 0
    %1403 = vmatprep.subr.bf16.mxu0 0
    %1404 = vmatpush1.bf16.xpose.msra.mxu0 0
    %1405 = vmatprep.subr.bf16.mxu0 0
    %1406 = vmatpush1.bf16.xpose.msra.mxu0 0
    %1407 = vmatprep.mubr.bf16.mxu0 0
    %1408 = vmatmul.mubr.bf16.gmra.mrb[0].mxu0 %v1370
    %v1409 = vpop.f32.mrb[0].mxu0
    %v1410 = vadd.f32 0.0, %v1409
    %v1411 = vpop.f32.mrb[0].mxu0
    %v1412 = vpop.f32.mrb[0].mxu0
    %v1413 = vpop.f32.mrb[0].mxu0
    %1414 = vdwg.mxu0
    %v1416 = vsel %vm1322, %v716, 0
    %v1419 = vsel %vm1322, %v1016, 0
    %1421 = vmatprep.subr.bf16.mxu0 0
    %1422 = vmatpush1.bf16.xpose.msra.mxu0 %v1419
    %1423 = vmatprep.subr.bf16.mxu0 0
    %1424 = vmatpush1.bf16.xpose.msra.mxu0 0
    %1425 = vmatprep.subr.bf16.mxu0 0
    %1426 = vmatpush1.bf16.xpose.msra.mxu0 0
    %1427 = vmatprep.subr.bf16.mxu0 0
    %1428 = vmatpush1.bf16.xpose.msra.mxu0 0
    %1429 = vmatprep.subr.bf16.mxu0 0
    %1430 = vmatpush1.bf16.xpose.msra.mxu0 0
    %1431 = vmatprep.subr.bf16.mxu0 0
    %1432 = vmatpush1.bf16.xpose.msra.mxu0 0
    %1433 = vmatprep.subr.bf16.mxu0 0
    %1434 = vmatpush1.bf16.xpose.msra.mxu0 0
    %1435 = vmatprep.subr.bf16.mxu0 0
    %1436 = vmatpush1.bf16.xpose.msra.mxu0 0
    %1437 = vmatprep.subr.bf16.mxu0 0
    %1438 = vmatpush1.bf16.xpose.msra.mxu0 0
    %1439 = vmatprep.subr.bf16.mxu0 0
    %1440 = vmatpush1.bf16.xpose.msra.mxu0 0
    %1441 = vmatprep.subr.bf16.mxu0 0
    %1442 = vmatpush1.bf16.xpose.msra.mxu0 0
    %1443 = vmatprep.subr.bf16.mxu0 0
    %1444 = vmatpush1.bf16.xpose.msra.mxu0 0
    %1445 = vmatprep.subr.bf16.mxu0 0
    %1446 = vmatpush1.bf16.xpose.msra.mxu0 0
    %1447 = vmatprep.subr.bf16.mxu0 0
    %1448 = vmatpush1.bf16.xpose.msra.mxu0 0
    %1449 = vmatprep.subr.bf16.mxu0 0
    %1450 = vmatpush1.bf16.xpose.msra.mxu0 0
    %1451 = vmatprep.subr.bf16.mxu0 0
    %1452 = vmatpush1.bf16.xpose.msra.mxu0 0
    %1453 = vmatprep.mubr.bf16.mxu0 0
    %1454 = vmatmul.mubr.bf16.gmra.mrb[0].mxu0 %v1416
    %v1455 = vpop.f32.mrb[0].mxu0
    %v1456 = vadd.f32 0.0, %v1455
    %v1457 = vpop.f32.mrb[0].mxu0
    %v1458 = vpop.f32.mrb[0].mxu0
    %v1459 = vpop.f32.mrb[0].mxu0
    %1460 = vdwg.mxu0
    %v1462 = vsel %vm1322, %v717, 0
    %v1465 = vsel %vm1322, %v1017, 0
    %1467 = vmatprep.subr.bf16.mxu0 0
    %1468 = vmatpush1.bf16.xpose.msra.mxu0 %v1465
    %1469 = vmatprep.subr.bf16.mxu0 0
    %1470 = vmatpush1.bf16.xpose.msra.mxu0 0
    %1471 = vmatprep.subr.bf16.mxu0 0
    %1472 = vmatpush1.bf16.xpose.msra.mxu0 0
    %1473 = vmatprep.subr.bf16.mxu0 0
    %1474 = vmatpush1.bf16.xpose.msra.mxu0 0
    %1475 = vmatprep.subr.bf16.mxu0 0
    %1476 = vmatpush1.bf16.xpose.msra.mxu0 0
    %1477 = vmatprep.subr.bf16.mxu0 0
    %1478 = vmatpush1.bf16.xpose.msra.mxu0 0
    %1479 = vmatprep.subr.bf16.mxu0 0
    %1480 = vmatpush1.bf16.xpose.msra.mxu0 0
    %1481 = vmatprep.subr.bf16.mxu0 0
    %1482 = vmatpush1.bf16.xpose.msra.mxu0 0
    %1483 = vmatprep.subr.bf16.mxu0 0
    %1484 = vmatpush1.bf16.xpose.msra.mxu0 0
    %1485 = vmatprep.subr.bf16.mxu0 0
    %1486 = vmatpush1.bf16.xpose.msra.mxu0 0
    %1487 = vmatprep.subr.bf16.mxu0 0
    %1488 = vmatpush1.bf16.xpose.msra.mxu0 0
    %1489 = vmatprep.subr.bf16.mxu0 0
    %1490 = vmatpush1.bf16.xpose.msra.mxu0 0
    %1491 = vmatprep.subr.bf16.mxu0 0
    %1492 = vmatpush1.bf16.xpose.msra.mxu0 0
    %1493 = vmatprep.subr.bf16.mxu0 0
    %1494 = vmatpush1.bf16.xpose.msra.mxu0 0
    %1495 = vmatprep.subr.bf16.mxu0 0
    %1496 = vmatpush1.bf16.xpose.msra.mxu0 0
    %1497 = vmatprep.subr.bf16.mxu0 0
    %1498 = vmatpush1.bf16.xpose.msra.mxu0 0
    %1499 = vmatprep.mubr.bf16.mxu0 0
    %1500 = vmatmul.mubr.bf16.gmra.mrb[0].mxu0 %v1462
    %v1501 = vpop.f32.mrb[0].mxu0
    %v1502 = vadd.f32 0.0, %v1501
    %v1503 = vpop.f32.mrb[0].mxu0
    %v1504 = vpop.f32.mrb[0].mxu0
    %v1505 = vpop.f32.mrb[0].mxu0
    %1506 = vdwg.mxu0
    %v1508 = vsel %vm1322, %v718, 0
    %v1511 = vsel %vm1322, %v1018, 0
    %1513 = vmatprep.subr.bf16.mxu0 0
    %1514 = vmatpush1.bf16.xpose.msra.mxu0 %v1511
    %1515 = vmatprep.subr.bf16.mxu0 0
    %1516 = vmatpush1.bf16.xpose.msra.mxu0 0
    %1517 = vmatprep.subr.bf16.mxu0 0
    %1518 = vmatpush1.bf16.xpose.msra.mxu0 0
    %1519 = vmatprep.subr.bf16.mxu0 0
    %1520 = vmatpush1.bf16.xpose.msra.mxu0 0
    %1521 = vmatprep.subr.bf16.mxu0 0
    %1522 = vmatpush1.bf16.xpose.msra.mxu0 0
    %1523 = vmatprep.subr.bf16.mxu0 0
    %1524 = vmatpush1.bf16.xpose.msra.mxu0 0
    %1525 = vmatprep.subr.bf16.mxu0 0
    %1526 = vmatpush1.bf16.xpose.msra.mxu0 0
    %1527 = vmatprep.subr.bf16.mxu0 0
    %1528 = vmatpush1.bf16.xpose.msra.mxu0 0
    %1529 = vmatprep.subr.bf16.mxu0 0
    %1530 = vmatpush1.bf16.xpose.msra.mxu0 0
    %1531 = vmatprep.subr.bf16.mxu0 0
    %1532 = vmatpush1.bf16.xpose.msra.mxu0 0
    %1533 = vmatprep.subr.bf16.mxu0 0
    %1534 = vmatpush1.bf16.xpose.msra.mxu0 0
    %1535 = vmatprep.subr.bf16.mxu0 0
    %1536 = vmatpush1.bf16.xpose.msra.mxu0 0
    %1537 = vmatprep.subr.bf16.mxu0 0
    %1538 = vmatpush1.bf16.xpose.msra.mxu0 0
    %1539 = vmatprep.subr.bf16.mxu0 0
    %1540 = vmatpush1.bf16.xpose.msra.mxu0 0
    %1541 = vmatprep.subr.bf16.mxu0 0
    %1542 = vmatpush1.bf16.xpose.msra.mxu0 0
    %1543 = vmatprep.subr.bf16.mxu0 0
    %1544 = vmatpush1.bf16.xpose.msra.mxu0 0
    %1545 = vmatprep.mubr.bf16.mxu0 0
    %1546 = vmatmul.mubr.bf16.gmra.mrb[0].mxu0 %v1508
    %v1547 = vpop.f32.mrb[0].mxu0
    %v1548 = vadd.f32 0.0, %v1547
    %v1549 = vpop.f32.mrb[0].mxu0
    %v1550 = vpop.f32.mrb[0].mxu0
    %v1551 = vpop.f32.mrb[0].mxu0
    %1552 = vdwg.mxu0
    %v1554 = vsel %vm1322, %v719, 0
    %v1557 = vsel %vm1322, %v1019, 0
    %1559 = vmatprep.subr.bf16.mxu0 0
    %1560 = vmatpush1.bf16.xpose.msra.mxu0 %v1557
    %1561 = vmatprep.subr.bf16.mxu0 0
    %1562 = vmatpush1.bf16.xpose.msra.mxu0 0
    %1563 = vmatprep.subr.bf16.mxu0 0
    %1564 = vmatpush1.bf16.xpose.msra.mxu0 0
    %1565 = vmatprep.subr.bf16.mxu0 0
    %1566 = vmatpush1.bf16.xpose.msra.mxu0 0
    %1567 = vmatprep.subr.bf16.mxu0 0
    %1568 = vmatpush1.bf16.xpose.msra.mxu0 0
    %1569 = vmatprep.subr.bf16.mxu0 0
    %1570 = vmatpush1.bf16.xpose.msra.mxu0 0
    %1571 = vmatprep.subr.bf16.mxu0 0
    %1572 = vmatpush1.bf16.xpose.msra.mxu0 0
    %1573 = vmatprep.subr.bf16.mxu0 0
    %1574 = vmatpush1.bf16.xpose.msra.mxu0 0
    %1575 = vmatprep.subr.bf16.mxu0 0
    %1576 = vmatpush1.bf16.xpose.msra.mxu0 0
    %1577 = vmatprep.subr.bf16.mxu0 0
    %1578 = vmatpush1.bf16.xpose.msra.mxu0 0
    %1579 = vmatprep.subr.bf16.mxu0 0
    %1580 = vmatpush1.bf16.xpose.msra.mxu0 0
    %1581 = vmatprep.subr.bf16.mxu0 0
    %1582 = vmatpush1.bf16.xpose.msra.mxu0 0
    %1583 = vmatprep.subr.bf16.mxu0 0
    %1584 = vmatpush1.bf16.xpose.msra.mxu0 0
    %1585 = vmatprep.subr.bf16.mxu0 0
    %1586 = vmatpush1.bf16.xpose.msra.mxu0 0
    %1587 = vmatprep.subr.bf16.mxu0 0
    %1588 = vmatpush1.bf16.xpose.msra.mxu0 0
    %1589 = vmatprep.subr.bf16.mxu0 0
    %1590 = vmatpush1.bf16.xpose.msra.mxu0 0
    %1591 = vmatprep.mubr.bf16.mxu0 0
    %1592 = vmatmul.mubr.bf16.gmra.mrb[0].mxu0 %v1554
    %v1593 = vpop.f32.mrb[0].mxu0
    %v1594 = vadd.f32 0.0, %v1593
    %v1595 = vpop.f32.mrb[0].mxu0
    %v1596 = vpop.f32.mrb[0].mxu0
    %v1597 = vpop.f32.mrb[0].mxu0
    %1598 = vdwg.mxu0
    %v1600 = vsel %vm1322, %v720, 0
    %v1603 = vsel %vm1322, %v1020, 0
    %1605 = vmatprep.subr.bf16.mxu0 0
    %1606 = vmatpush1.bf16.xpose.msra.mxu0 %v1603
    %1607 = vmatprep.subr.bf16.mxu0 0
    %1608 = vmatpush1.bf16.xpose.msra.mxu0 0
    %1609 = vmatprep.subr.bf16.mxu0 0
    %1610 = vmatpush1.bf16.xpose.msra.mxu0 0
    %1611 = vmatprep.subr.bf16.mxu0 0
    %1612 = vmatpush1.bf16.xpose.msra.mxu0 0
    %1613 = vmatprep.subr.bf16.mxu0 0
    %1614 = vmatpush1.bf16.xpose.msra.mxu0 0
    %1615 = vmatprep.subr.bf16.mxu0 0
    %1616 = vmatpush1.bf16.xpose.msra.mxu0 0
    %1617 = vmatprep.subr.bf16.mxu0 0
    %1618 = vmatpush1.bf16.xpose.msra.mxu0 0
    %1619 = vmatprep.subr.bf16.mxu0 0
    %1620 = vmatpush1.bf16.xpose.msra.mxu0 0
    %1621 = vmatprep.subr.bf16.mxu0 0
    %1622 = vmatpush1.bf16.xpose.msra.mxu0 0
    %1623 = vmatprep.subr.bf16.mxu0 0
    %1624 = vmatpush1.bf16.xpose.msra.mxu0 0
    %1625 = vmatprep.subr.bf16.mxu0 0
    %1626 = vmatpush1.bf16.xpose.msra.mxu0 0
    %1627 = vmatprep.subr.bf16.mxu0 0
    %1628 = vmatpush1.bf16.xpose.msra.mxu0 0
    %1629 = vmatprep.subr.bf16.mxu0 0
    %1630 = vmatpush1.bf16.xpose.msra.mxu0 0
    %1631 = vmatprep.subr.bf16.mxu0 0
    %1632 = vmatpush1.bf16.xpose.msra.mxu0 0
    %1633 = vmatprep.subr.bf16.mxu0 0
    %1634 = vmatpush1.bf16.xpose.msra.mxu0 0
    %1635 = vmatprep.subr.bf16.mxu0 0
    %1636 = vmatpush1.bf16.xpose.msra.mxu0 0
    %1637 = vmatprep.mubr.bf16.mxu0 0
    %1638 = vmatmul.mubr.bf16.gmra.mrb[0].mxu0 %v1600
    %v1639 = vpop.f32.mrb[0].mxu0
    %v1640 = vadd.f32 0.0, %v1639
    %v1641 = vpop.f32.mrb[0].mxu0
    %v1642 = vpop.f32.mrb[0].mxu0
    %v1643 = vpop.f32.mrb[0].mxu0
    %1644 = vdwg.mxu0
    %v1646 = vsel %vm1322, %v721, 0
    %v1649 = vsel %vm1322, %v1021, 0
    %1651 = vmatprep.subr.bf16.mxu0 0
    %1652 = vmatpush1.bf16.xpose.msra.mxu0 %v1649
    %1653 = vmatprep.subr.bf16.mxu0 0
    %1654 = vmatpush1.bf16.xpose.msra.mxu0 0
    %1655 = vmatprep.subr.bf16.mxu0 0
    %1656 = vmatpush1.bf16.xpose.msra.mxu0 0
    %1657 = vmatprep.subr.bf16.mxu0 0
    %1658 = vmatpush1.bf16.xpose.msra.mxu0 0
    %1659 = vmatprep.subr.bf16.mxu0 0
    %1660 = vmatpush1.bf16.xpose.msra.mxu0 0
    %1661 = vmatprep.subr.bf16.mxu0 0
    %1662 = vmatpush1.bf16.xpose.msra.mxu0 0
    %1663 = vmatprep.subr.bf16.mxu0 0
    %1664 = vmatpush1.bf16.xpose.msra.mxu0 0
    %1665 = vmatprep.subr.bf16.mxu0 0
    %1666 = vmatpush1.bf16.xpose.msra.mxu0 0
    %1667 = vmatprep.subr.bf16.mxu0 0
    %1668 = vmatpush1.bf16.xpose.msra.mxu0 0
    %1669 = vmatprep.subr.bf16.mxu0 0
    %1670 = vmatpush1.bf16.xpose.msra.mxu0 0
    %1671 = vmatprep.subr.bf16.mxu0 0
    %1672 = vmatpush1.bf16.xpose.msra.mxu0 0
    %1673 = vmatprep.subr.bf16.mxu0 0
    %1674 = vmatpush1.bf16.xpose.msra.mxu0 0
    %1675 = vmatprep.subr.bf16.mxu0 0
    %1676 = vmatpush1.bf16.xpose.msra.mxu0 0
    %1677 = vmatprep.subr.bf16.mxu0 0
    %1678 = vmatpush1.bf16.xpose.msra.mxu0 0
    %1679 = vmatprep.subr.bf16.mxu0 0
    %1680 = vmatpush1.bf16.xpose.msra.mxu0 0
    %1681 = vmatprep.subr.bf16.mxu0 0
    %1682 = vmatpush1.bf16.xpose.msra.mxu0 0
    %1683 = vmatprep.mubr.bf16.mxu0 0
    %1684 = vmatmul.mubr.bf16.gmra.mrb[0].mxu0 %v1646
    %v1685 = vpop.f32.mrb[0].mxu0
    %v1686 = vadd.f32 0.0, %v1685
    %v1687 = vpop.f32.mrb[0].mxu0
    %v1688 = vpop.f32.mrb[0].mxu0
    %v1689 = vpop.f32.mrb[0].mxu0
    %1690 = vdwg.mxu0
    %vm1691 = vcmask 64512
    %v1692 = vsel %vm1691, %v1364, -inf
    %1693 = vmax.xlane.f32.xlu0 %v1692
    %v1694 = vpop.xlane.xlu0 %1693
    %v1695 = vsel %vm1691, %v1410, -inf
    %1696 = vmax.xlane.f32.xlu0 %v1695
    %v1697 = vpop.xlane.xlu0 %1696
    %v1698 = vsel %vm1691, %v1456, -inf
    %1699 = vmax.xlane.f32.xlu0 %v1698
    %v1700 = vpop.xlane.xlu0 %1699
    %v1701 = vsel %vm1691, %v1502, -inf
    %1702 = vmax.xlane.f32.xlu0 %v1701
    %v1703 = vpop.xlane.xlu0 %1702
    %v1704 = vsel %vm1691, %v1548, -inf
    %1705 = vmax.xlane.f32.xlu0 %v1704
    %v1706 = vpop.xlane.xlu0 %1705
    %v1707 = vsel %vm1691, %v1594, -inf
    %1708 = vmax.xlane.f32.xlu0 %v1707
    %v1709 = vpop.xlane.xlu0 %1708
    %v1710 = vsel %vm1691, %v1640, -inf
    %1711 = vmax.xlane.f32.xlu0 %v1710
    %v1712 = vpop.xlane.xlu0 %1711
    %v1713 = vsel %vm1691, %v1686, -inf
    %1714 = vmax.xlane.f32.xlu0 %v1713
    %v1715 = vpop.xlane.xlu0 %1714
    %v1716 = vsub.f32 %v1364, %v1694
    %v1717 = vsub.f32 %v1410, %v1697
    %v1718 = vsub.f32 %v1456, %v1700
    %v1719 = vsub.f32 %v1502, %v1703
    %v1720 = vsub.f32 %v1548, %v1706
    %v1721 = vsub.f32 %v1594, %v1709
    %v1722 = vsub.f32 %v1640, %v1712
    %v1723 = vsub.f32 %v1686, %v1715
    %v1724 = vmul.f32 %v1716, 1.442695
    %v1725 = vpow.pop %v1724
    %v1726 = vmul.f32 %v1717, 1.442695
    %v1727 = vpow.pop %v1726
    %v1728 = vmul.f32 %v1718, 1.442695
    %v1729 = vpow.pop %v1728
    %v1730 = vmul.f32 %v1719, 1.442695
    %v1731 = vpow.pop %v1730
    %v1732 = vmul.f32 %v1720, 1.442695
    %v1733 = vpow.pop %v1732
    %v1734 = vmul.f32 %v1721, 1.442695
    %v1735 = vpow.pop %v1734
    %v1736 = vmul.f32 %v1722, 1.442695
    %v1737 = vpow.pop %v1736
    %v1738 = vmul.f32 %v1723, 1.442695
    %v1739 = vpow.pop %v1738
    %v1740 = vsel %vm1691, %v1725, 0.0
    %1741 = vadd.xlane.f32.xlu0 %v1740
    %v1742 = vpop.xlane.xlu0 %1741
    %v1743 = vsel %vm1691, %v1727, 0.0
    %1744 = vadd.xlane.f32.xlu0 %v1743
    %v1745 = vpop.xlane.xlu0 %1744
    %v1746 = vsel %vm1691, %v1729, 0.0
    %1747 = vadd.xlane.f32.xlu0 %v1746
    %v1748 = vpop.xlane.xlu0 %1747
    %v1749 = vsel %vm1691, %v1731, 0.0
    %1750 = vadd.xlane.f32.xlu0 %v1749
    %v1751 = vpop.xlane.xlu0 %1750
    %v1752 = vsel %vm1691, %v1733, 0.0
    %1753 = vadd.xlane.f32.xlu0 %v1752
    %v1754 = vpop.xlane.xlu0 %1753
    %v1755 = vsel %vm1691, %v1735, 0.0
    %1756 = vadd.xlane.f32.xlu0 %v1755
    %v1757 = vpop.xlane.xlu0 %1756
    %v1758 = vsel %vm1691, %v1737, 0.0
    %1759 = vadd.xlane.f32.xlu0 %v1758
    %v1760 = vpop.xlane.xlu0 %1759
    %v1761 = vsel %vm1691, %v1739, 0.0
    %1762 = vadd.xlane.f32.xlu0 %v1761
    %v1763 = vpop.xlane.xlu0 %1762
    %v1764 = vrcp.pop %v1742
    %v1765 = vmul.f32 %v1725, %v1764
    %v1766 = vrcp.pop %v1745
    %v1767 = vmul.f32 %v1727, %v1766
    %v1768 = vrcp.pop %v1748
    %v1769 = vmul.f32 %v1729, %v1768
    %v1770 = vrcp.pop %v1751
    %v1771 = vmul.f32 %v1731, %v1770
    %v1772 = vrcp.pop %v1754
    %v1773 = vmul.f32 %v1733, %v1772
    %v1774 = vrcp.pop %v1757
    %v1775 = vmul.f32 %v1735, %v1774
    %v1776 = vrcp.pop %v1760
    %v1777 = vmul.f32 %v1737, %v1776
    %v1778 = vrcp.pop %v1763
    %v1779 = vmul.f32 %v1739, %v1778
    %v1780 = vpack.c.bf16 %v1765, %v1765
    %v1781 = vpack.c.bf16 %v1767, %v1767
    %v1782 = vpack.c.bf16 %v1769, %v1769
    %v1783 = vpack.c.bf16 %v1771, %v1771
    %v1784 = vpack.c.bf16 %v1773, %v1773
    %v1785 = vpack.c.bf16 %v1775, %v1775
    %v1786 = vpack.c.bf16 %v1777, %v1777
    %v1787 = vpack.c.bf16 %v1779, %v1779
    %v1789 = vsel %vm1691, %v1780, 0
    %vm1791 = vcmask 1043456
    %v1793 = vsel %vm1791, %v1314, 0
    %1795 = vmatprep.subr.bf16.mxu0 0
    %1796 = vmatpush1.bf16.msra.mxu0 %v1793
    %1797 = vmatprep.subr.bf16.mxu0 0
    %1798 = vmatpush1.bf16.msra.mxu0 0
    %1799 = vmatprep.subr.bf16.mxu0 0
    %1800 = vmatpush1.bf16.msra.mxu0 0
    %1801 = vmatprep.subr.bf16.mxu0 0
    %1802 = vmatpush1.bf16.msra.mxu0 0
    %1803 = vmatprep.subr.bf16.mxu0 0
    %1804 = vmatpush1.bf16.msra.mxu0 0
    %1805 = vmatprep.subr.bf16.mxu0 0
    %1806 = vmatpush1.bf16.msra.mxu0 0
    %1807 = vmatprep.subr.bf16.mxu0 0
    %1808 = vmatpush1.bf16.msra.mxu0 0
    %1809 = vmatprep.subr.bf16.mxu0 0
    %1810 = vmatpush1.bf16.msra.mxu0 0
    %1811 = vmatprep.subr.bf16.mxu0 0
    %1812 = vmatpush1.bf16.msra.mxu0 0
    %1813 = vmatprep.subr.bf16.mxu0 0
    %1814 = vmatpush1.bf16.msra.mxu0 0
    %1815 = vmatprep.subr.bf16.mxu0 0
    %1816 = vmatpush1.bf16.msra.mxu0 0
    %1817 = vmatprep.subr.bf16.mxu0 0
    %1818 = vmatpush1.bf16.msra.mxu0 0
    %1819 = vmatprep.subr.bf16.mxu0 0
    %1820 = vmatpush1.bf16.msra.mxu0 0
    %1821 = vmatprep.subr.bf16.mxu0 0
    %1822 = vmatpush1.bf16.msra.mxu0 0
    %1823 = vmatprep.subr.bf16.mxu0 0
    %1824 = vmatpush1.bf16.msra.mxu0 0
    %1825 = vmatprep.subr.bf16.mxu0 0
    %1826 = vmatpush1.bf16.msra.mxu0 0
    %1827 = vmatprep.mubr.bf16.mxu0 0
    %1828 = vmatmul.mubr.bf16.gmra.mrb[0].mxu0 %v1789
    %v1829 = vpop.f32.mrb[0].mxu0
    %v1830 = vadd.f32 0.0, %v1829
    %v1831 = vpop.f32.mrb[0].mxu0
    %v1832 = vpop.f32.mrb[0].mxu0
    %v1833 = vpop.f32.mrb[0].mxu0
    %1834 = vdwg.mxu0
    %v1836 = vsel %vm1691, %v1781, 0
    %v1839 = vsel %vm1791, %v1315, 0
    %1841 = vmatprep.subr.bf16.mxu0 0
    %1842 = vmatpush1.bf16.msra.mxu0 %v1839
    %1843 = vmatprep.subr.bf16.mxu0 0
    %1844 = vmatpush1.bf16.msra.mxu0 0
    %1845 = vmatprep.subr.bf16.mxu0 0
    %1846 = vmatpush1.bf16.msra.mxu0 0
    %1847 = vmatprep.subr.bf16.mxu0 0
    %1848 = vmatpush1.bf16.msra.mxu0 0
    %1849 = vmatprep.subr.bf16.mxu0 0
    %1850 = vmatpush1.bf16.msra.mxu0 0
    %1851 = vmatprep.subr.bf16.mxu0 0
    %1852 = vmatpush1.bf16.msra.mxu0 0
    %1853 = vmatprep.subr.bf16.mxu0 0
    %1854 = vmatpush1.bf16.msra.mxu0 0
    %1855 = vmatprep.subr.bf16.mxu0 0
    %1856 = vmatpush1.bf16.msra.mxu0 0
    %1857 = vmatprep.subr.bf16.mxu0 0
    %1858 = vmatpush1.bf16.msra.mxu0 0
    %1859 = vmatprep.subr.bf16.mxu0 0
    %1860 = vmatpush1.bf16.msra.mxu0 0
    %1861 = vmatprep.subr.bf16.mxu0 0
    %1862 = vmatpush1.bf16.msra.mxu0 0
    %1863 = vmatprep.subr.bf16.mxu0 0
    %1864 = vmatpush1.bf16.msra.mxu0 0
    %1865 = vmatprep.subr.bf16.mxu0 0
    %1866 = vmatpush1.bf16.msra.mxu0 0
    %1867 = vmatprep.subr.bf16.mxu0 0
    %1868 = vmatpush1.bf16.msra.mxu0 0
    %1869 = vmatprep.subr.bf16.mxu0 0
    %1870 = vmatpush1.bf16.msra.mxu0 0
    %1871 = vmatprep.subr.bf16.mxu0 0
    %1872 = vmatpush1.bf16.msra.mxu0 0
    %1873 = vmatprep.mubr.bf16.mxu0 0
    %1874 = vmatmul.mubr.bf16.gmra.mrb[0].mxu0 %v1836
    %v1875 = vpop.f32.mrb[0].mxu0
    %v1876 = vadd.f32 0.0, %v1875
    %v1877 = vpop.f32.mrb[0].mxu0
    %v1878 = vpop.f32.mrb[0].mxu0
    %v1879 = vpop.f32.mrb[0].mxu0
    %1880 = vdwg.mxu0
    %v1882 = vsel %vm1691, %v1782, 0
    %v1885 = vsel %vm1791, %v1316, 0
    %1887 = vmatprep.subr.bf16.mxu0 0
    %1888 = vmatpush1.bf16.msra.mxu0 %v1885
    %1889 = vmatprep.subr.bf16.mxu0 0
    %1890 = vmatpush1.bf16.msra.mxu0 0
    %1891 = vmatprep.subr.bf16.mxu0 0
    %1892 = vmatpush1.bf16.msra.mxu0 0
    %1893 = vmatprep.subr.bf16.mxu0 0
    %1894 = vmatpush1.bf16.msra.mxu0 0
    %1895 = vmatprep.subr.bf16.mxu0 0
    %1896 = vmatpush1.bf16.msra.mxu0 0
    %1897 = vmatprep.subr.bf16.mxu0 0
    %1898 = vmatpush1.bf16.msra.mxu0 0
    %1899 = vmatprep.subr.bf16.mxu0 0
    %1900 = vmatpush1.bf16.msra.mxu0 0
    %1901 = vmatprep.subr.bf16.mxu0 0
    %1902 = vmatpush1.bf16.msra.mxu0 0
    %1903 = vmatprep.subr.bf16.mxu0 0
    %1904 = vmatpush1.bf16.msra.mxu0 0
    %1905 = vmatprep.subr.bf16.mxu0 0
    %1906 = vmatpush1.bf16.msra.mxu0 0
    %1907 = vmatprep.subr.bf16.mxu0 0
    %1908 = vmatpush1.bf16.msra.mxu0 0
    %1909 = vmatprep.subr.bf16.mxu0 0
    %1910 = vmatpush1.bf16.msra.mxu0 0
    %1911 = vmatprep.subr.bf16.mxu0 0
    %1912 = vmatpush1.bf16.msra.mxu0 0
    %1913 = vmatprep.subr.bf16.mxu0 0
    %1914 = vmatpush1.bf16.msra.mxu0 0
    %1915 = vmatprep.subr.bf16.mxu0 0
    %1916 = vmatpush1.bf16.msra.mxu0 0
    %1917 = vmatprep.subr.bf16.mxu0 0
    %1918 = vmatpush1.bf16.msra.mxu0 0
    %1919 = vmatprep.mubr.bf16.mxu0 0
    %1920 = vmatmul.mubr.bf16.gmra.mrb[0].mxu0 %v1882
    %v1921 = vpop.f32.mrb[0].mxu0
    %v1922 = vadd.f32 0.0, %v1921
    %v1923 = vpop.f32.mrb[0].mxu0
    %v1924 = vpop.f32.mrb[0].mxu0
    %v1925 = vpop.f32.mrb[0].mxu0
    %1926 = vdwg.mxu0
    %v1928 = vsel %vm1691, %v1783, 0
    %v1931 = vsel %vm1791, %v1317, 0
    %1933 = vmatprep.subr.bf16.mxu0 0
    %1934 = vmatpush1.bf16.msra.mxu0 %v1931
    %1935 = vmatprep.subr.bf16.mxu0 0
    %1936 = vmatpush1.bf16.msra.mxu0 0
    %1937 = vmatprep.subr.bf16.mxu0 0
    %1938 = vmatpush1.bf16.msra.mxu0 0
    %1939 = vmatprep.subr.bf16.mxu0 0
    %1940 = vmatpush1.bf16.msra.mxu0 0
    %1941 = vmatprep.subr.bf16.mxu0 0
    %1942 = vmatpush1.bf16.msra.mxu0 0
    %1943 = vmatprep.subr.bf16.mxu0 0
    %1944 = vmatpush1.bf16.msra.mxu0 0
    %1945 = vmatprep.subr.bf16.mxu0 0
    %1946 = vmatpush1.bf16.msra.mxu0 0
    %1947 = vmatprep.subr.bf16.mxu0 0
    %1948 = vmatpush1.bf16.msra.mxu0 0
    %1949 = vmatprep.subr.bf16.mxu0 0
    %1950 = vmatpush1.bf16.msra.mxu0 0
    %1951 = vmatprep.subr.bf16.mxu0 0
    %1952 = vmatpush1.bf16.msra.mxu0 0
    %1953 = vmatprep.subr.bf16.mxu0 0
    %1954 = vmatpush1.bf16.msra.mxu0 0
    %1955 = vmatprep.subr.bf16.mxu0 0
    %1956 = vmatpush1.bf16.msra.mxu0 0
    %1957 = vmatprep.subr.bf16.mxu0 0
    %1958 = vmatpush1.bf16.msra.mxu0 0
    %1959 = vmatprep.subr.bf16.mxu0 0
    %1960 = vmatpush1.bf16.msra.mxu0 0
    %1961 = vmatprep.subr.bf16.mxu0 0
    %1962 = vmatpush1.bf16.msra.mxu0 0
    %1963 = vmatprep.subr.bf16.mxu0 0
    %1964 = vmatpush1.bf16.msra.mxu0 0
    %1965 = vmatprep.mubr.bf16.mxu0 0
    %1966 = vmatmul.mubr.bf16.gmra.mrb[0].mxu0 %v1928
    %v1967 = vpop.f32.mrb[0].mxu0
    %v1968 = vadd.f32 0.0, %v1967
    %v1969 = vpop.f32.mrb[0].mxu0
    %v1970 = vpop.f32.mrb[0].mxu0
    %v1971 = vpop.f32.mrb[0].mxu0
    %1972 = vdwg.mxu0
    %v1974 = vsel %vm1691, %v1784, 0
    %v1977 = vsel %vm1791, %v1318, 0
    %1979 = vmatprep.subr.bf16.mxu0 0
    %1980 = vmatpush1.bf16.msra.mxu0 %v1977
    %1981 = vmatprep.subr.bf16.mxu0 0
    %1982 = vmatpush1.bf16.msra.mxu0 0
    %1983 = vmatprep.subr.bf16.mxu0 0
    %1984 = vmatpush1.bf16.msra.mxu0 0
    %1985 = vmatprep.subr.bf16.mxu0 0
    %1986 = vmatpush1.bf16.msra.mxu0 0
    %1987 = vmatprep.subr.bf16.mxu0 0
    %1988 = vmatpush1.bf16.msra.mxu0 0
    %1989 = vmatprep.subr.bf16.mxu0 0
    %1990 = vmatpush1.bf16.msra.mxu0 0
    %1991 = vmatprep.subr.bf16.mxu0 0
    %1992 = vmatpush1.bf16.msra.mxu0 0
    %1993 = vmatprep.subr.bf16.mxu0 0
    %1994 = vmatpush1.bf16.msra.mxu0 0
    %1995 = vmatprep.subr.bf16.mxu0 0
    %1996 = vmatpush1.bf16.msra.mxu0 0
    %1997 = vmatprep.subr.bf16.mxu0 0
    %1998 = vmatpush1.bf16.msra.mxu0 0
    %1999 = vmatprep.subr.bf16.mxu0 0
    %2000 = vmatpush1.bf16.msra.mxu0 0
    %2001 = vmatprep.subr.bf16.mxu0 0
    %2002 = vmatpush1.bf16.msra.mxu0 0
    %2003 = vmatprep.subr.bf16.mxu0 0
    %2004 = vmatpush1.bf16.msra.mxu0 0
    %2005 = vmatprep.subr.bf16.mxu0 0
    %2006 = vmatpush1.bf16.msra.mxu0 0
    %2007 = vmatprep.subr.bf16.mxu0 0
    %2008 = vmatpush1.bf16.msra.mxu0 0
    %2009 = vmatprep.subr.bf16.mxu0 0
    %2010 = vmatpush1.bf16.msra.mxu0 0
    %2011 = vmatprep.mubr.bf16.mxu0 0
    %2012 = vmatmul.mubr.bf16.gmra.mrb[0].mxu0 %v1974
    %v2013 = vpop.f32.mrb[0].mxu0
    %v2014 = vadd.f32 0.0, %v2013
    %v2015 = vpop.f32.mrb[0].mxu0
    %v2016 = vpop.f32.mrb[0].mxu0
    %v2017 = vpop.f32.mrb[0].mxu0
    %2018 = vdwg.mxu0
    %v2020 = vsel %vm1691, %v1785, 0
    %v2023 = vsel %vm1791, %v1319, 0
    %2025 = vmatprep.subr.bf16.mxu0 0
    %2026 = vmatpush1.bf16.msra.mxu0 %v2023
    %2027 = vmatprep.subr.bf16.mxu0 0
    %2028 = vmatpush1.bf16.msra.mxu0 0
    %2029 = vmatprep.subr.bf16.mxu0 0
    %2030 = vmatpush1.bf16.msra.mxu0 0
    %2031 = vmatprep.subr.bf16.mxu0 0
    %2032 = vmatpush1.bf16.msra.mxu0 0
    %2033 = vmatprep.subr.bf16.mxu0 0
    %2034 = vmatpush1.bf16.msra.mxu0 0
    %2035 = vmatprep.subr.bf16.mxu0 0
    %2036 = vmatpush1.bf16.msra.mxu0 0
    %2037 = vmatprep.subr.bf16.mxu0 0
    %2038 = vmatpush1.bf16.msra.mxu0 0
    %2039 = vmatprep.subr.bf16.mxu0 0
    %2040 = vmatpush1.bf16.msra.mxu0 0
    %2041 = vmatprep.subr.bf16.mxu0 0
    %2042 = vmatpush1.bf16.msra.mxu0 0
    %2043 = vmatprep.subr.bf16.mxu0 0
    %2044 = vmatpush1.bf16.msra.mxu0 0
    %2045 = vmatprep.subr.bf16.mxu0 0
    %2046 = vmatpush1.bf16.msra.mxu0 0
    %2047 = vmatprep.subr.bf16.mxu0 0
    %2048 = vmatpush1.bf16.msra.mxu0 0
    %2049 = vmatprep.subr.bf16.mxu0 0
    %2050 = vmatpush1.bf16.msra.mxu0 0
    %2051 = vmatprep.subr.bf16.mxu0 0
    %2052 = vmatpush1.bf16.msra.mxu0 0
    %2053 = vmatprep.subr.bf16.mxu0 0
    %2054 = vmatpush1.bf16.msra.mxu0 0
    %2055 = vmatprep.subr.bf16.mxu0 0
    %2056 = vmatpush1.bf16.msra.mxu0 0
    %2057 = vmatprep.mubr.bf16.mxu0 0
    %2058 = vmatmul.mubr.bf16.gmra.mrb[0].mxu0 %v2020
    %v2059 = vpop.f32.mrb[0].mxu0
    %v2060 = vadd.f32 0.0, %v2059
    %v2061 = vpop.f32.mrb[0].mxu0
    %v2062 = vpop.f32.mrb[0].mxu0
    %v2063 = vpop.f32.mrb[0].mxu0
    %2064 = vdwg.mxu0
    %v2066 = vsel %vm1691, %v1786, 0
    %v2069 = vsel %vm1791, %v1320, 0
    %2071 = vmatprep.subr.bf16.mxu0 0
    %2072 = vmatpush1.bf16.msra.mxu0 %v2069
    %2073 = vmatprep.subr.bf16.mxu0 0
    %2074 = vmatpush1.bf16.msra.mxu0 0
    %2075 = vmatprep.subr.bf16.mxu0 0
    %2076 = vmatpush1.bf16.msra.mxu0 0
    %2077 = vmatprep.subr.bf16.mxu0 0
    %2078 = vmatpush1.bf16.msra.mxu0 0
    %2079 = vmatprep.subr.bf16.mxu0 0
    %2080 = vmatpush1.bf16.msra.mxu0 0
    %2081 = vmatprep.subr.bf16.mxu0 0
    %2082 = vmatpush1.bf16.msra.mxu0 0
    %2083 = vmatprep.subr.bf16.mxu0 0
    %2084 = vmatpush1.bf16.msra.mxu0 0
    %2085 = vmatprep.subr.bf16.mxu0 0
    %2086 = vmatpush1.bf16.msra.mxu0 0
    %2087 = vmatprep.subr.bf16.mxu0 0
    %2088 = vmatpush1.bf16.msra.mxu0 0
    %2089 = vmatprep.subr.bf16.mxu0 0
    %2090 = vmatpush1.bf16.msra.mxu0 0
    %2091 = vmatprep.subr.bf16.mxu0 0
    %2092 = vmatpush1.bf16.msra.mxu0 0
    %2093 = vmatprep.subr.bf16.mxu0 0
    %2094 = vmatpush1.bf16.msra.mxu0 0
    %2095 = vmatprep.subr.bf16.mxu0 0
    %2096 = vmatpush1.bf16.msra.mxu0 0
    %2097 = vmatprep.subr.bf16.mxu0 0
    %2098 = vmatpush1.bf16.msra.mxu0 0
    %2099 = vmatprep.subr.bf16.mxu0 0
    %2100 = vmatpush1.bf16.msra.mxu0 0
    %2101 = vmatprep.subr.bf16.mxu0 0
    %2102 = vmatpush1.bf16.msra.mxu0 0
    %2103 = vmatprep.mubr.bf16.mxu0 0
    %2104 = vmatmul.mubr.bf16.gmra.mrb[0].mxu0 %v2066
    %v2105 = vpop.f32.mrb[0].mxu0
    %v2106 = vadd.f32 0.0, %v2105
    %v2107 = vpop.f32.mrb[0].mxu0
    %v2108 = vpop.f32.mrb[0].mxu0
    %v2109 = vpop.f32.mrb[0].mxu0
    %2110 = vdwg.mxu0
    %v2112 = vsel %vm1691, %v1787, 0
    %v2115 = vsel %vm1791, %v1321, 0
    %2117 = vmatprep.subr.bf16.mxu0 0
    %2118 = vmatpush1.bf16.msra.mxu0 %v2115
    %2119 = vmatprep.subr.bf16.mxu0 0
    %2120 = vmatpush1.bf16.msra.mxu0 0
    %2121 = vmatprep.subr.bf16.mxu0 0
    %2122 = vmatpush1.bf16.msra.mxu0 0
    %2123 = vmatprep.subr.bf16.mxu0 0
    %2124 = vmatpush1.bf16.msra.mxu0 0
    %2125 = vmatprep.subr.bf16.mxu0 0
    %2126 = vmatpush1.bf16.msra.mxu0 0
    %2127 = vmatprep.subr.bf16.mxu0 0
    %2128 = vmatpush1.bf16.msra.mxu0 0
    %2129 = vmatprep.subr.bf16.mxu0 0
    %2130 = vmatpush1.bf16.msra.mxu0 0
    %2131 = vmatprep.subr.bf16.mxu0 0
    %2132 = vmatpush1.bf16.msra.mxu0 0
    %2133 = vmatprep.subr.bf16.mxu0 0
    %2134 = vmatpush1.bf16.msra.mxu0 0
    %2135 = vmatprep.subr.bf16.mxu0 0
    %2136 = vmatpush1.bf16.msra.mxu0 0
    %2137 = vmatprep.subr.bf16.mxu0 0
    %2138 = vmatpush1.bf16.msra.mxu0 0
    %2139 = vmatprep.subr.bf16.mxu0 0
    %2140 = vmatpush1.bf16.msra.mxu0 0
    %2141 = vmatprep.subr.bf16.mxu0 0
    %2142 = vmatpush1.bf16.msra.mxu0 0
    %2143 = vmatprep.subr.bf16.mxu0 0
    %2144 = vmatpush1.bf16.msra.mxu0 0
    %2145 = vmatprep.subr.bf16.mxu0 0
    %2146 = vmatpush1.bf16.msra.mxu0 0
    %2147 = vmatprep.subr.bf16.mxu0 0
    %2148 = vmatpush1.bf16.msra.mxu0 0
    %2149 = vmatprep.mubr.bf16.mxu0 0
    %2150 = vmatmul.mubr.bf16.gmra.mrb[0].mxu0 %v2112
    %v2151 = vpop.f32.mrb[0].mxu0
    %v2152 = vadd.f32 0.0, %v2151
    %v2153 = vpop.f32.mrb[0].mxu0
    %v2154 = vpop.f32.mrb[0].mxu0
    %v2155 = vpop.f32.mrb[0].mxu0
    %2156 = vdwg.mxu0
    %v2157 = vcombine.low %v1830, %v1922
    %v2158 = vcombine.high %v1830, %v1922
    %v2160 = vunpack.c.l.s4 1983009808
    %v2161 = vunpack.c.0.s8 %v2160
    %v2162 = vlaneseq
    %v2163 = vshrl.u32 %v2162, 7
    %v2164 = vsub.s32 %v2161, %v2163
    %v2165 = vrot.slane %v2157, %v2164
    %v2167 = vunpack.c.l.s4 1983009808
    %v2168 = vunpack.c.0.s8 %v2167
    %v2169 = vlaneseq
    %v2170 = vshrl.u32 %v2169, 7
    %v2171 = vsub.s32 %v2168, %v2170
    %v2172 = vrot.slane %v2158, %v2171
    %v2173 = vcombine.low %v1876, %v1968
    %v2174 = vcombine.high %v1876, %v1968
    %v2176 = vunpack.c.l.s4 1983009808
    %v2177 = vunpack.c.0.s8 %v2176
    %v2178 = vlaneseq
    %v2179 = vshrl.u32 %v2178, 7
    %v2180 = vsub.s32 %v2177, %v2179
    %v2181 = vrot.slane %v2173, %v2180
    %v2183 = vunpack.c.l.s4 1983009808
    %v2184 = vunpack.c.0.s8 %v2183
    %v2185 = vlaneseq
    %v2186 = vshrl.u32 %v2185, 7
    %v2187 = vsub.s32 %v2184, %v2186
    %v2188 = vrot.slane %v2174, %v2187
    %v2189 = vcombine.low %v2165, %v2181
    %v2190 = vcombine.high %v2165, %v2181
    %v2192 = vunpack.c.l.s4 1934713408
    %v2193 = vunpack.c.0.s8 %v2192
    %v2194 = vlaneseq
    %v2195 = vshrl.u32 %v2194, 7
    %v2196 = vsub.s32 %v2193, %v2195
    %v2197 = vrot.slane %v2189, %v2196
    %v2199 = vunpack.c.l.s4 1934713408
    %v2200 = vunpack.c.0.s8 %v2199
    %v2201 = vlaneseq
    %v2202 = vshrl.u32 %v2201, 7
    %v2203 = vsub.s32 %v2200, %v2202
    %v2204 = vrot.slane %v2190, %v2203
    %v2205 = vcombine.low %v2172, %v2188
    %v2206 = vcombine.high %v2172, %v2188
    %v2208 = vunpack.c.l.s4 1934713408
    %v2209 = vunpack.c.0.s8 %v2208
    %v2210 = vlaneseq
    %v2211 = vshrl.u32 %v2210, 7
    %v2212 = vsub.s32 %v2209, %v2211
    %v2213 = vrot.slane %v2205, %v2212
    %v2215 = vunpack.c.l.s4 1934713408
    %v2216 = vunpack.c.0.s8 %v2215
    %v2217 = vlaneseq
    %v2218 = vshrl.u32 %v2217, 7
    %v2219 = vsub.s32 %v2216, %v2218
    %v2220 = vrot.slane %v2206, %v2219
    %v2221 = vcombine.high %v2197, 0.0
    %v2222 = vcombine.high %v2204, 0.0
    %v2223 = vcombine.high %v2213, 0.0
    %v2224 = vcombine.high %v2220, 0.0
    %v2225 = vcombine.low %v2014, %v2106
    %v2226 = vcombine.high %v2014, %v2106
    %v2228 = vunpack.c.l.s4 1983009808
    %v2229 = vunpack.c.0.s8 %v2228
    %v2230 = vlaneseq
    %v2231 = vshrl.u32 %v2230, 7
    %v2232 = vsub.s32 %v2229, %v2231
    %v2233 = vrot.slane %v2225, %v2232
    %v2235 = vunpack.c.l.s4 1983009808
    %v2236 = vunpack.c.0.s8 %v2235
    %v2237 = vlaneseq
    %v2238 = vshrl.u32 %v2237, 7
    %v2239 = vsub.s32 %v2236, %v2238
    %v2240 = vrot.slane %v2226, %v2239
    %v2241 = vcombine.low %v2060, %v2152
    %v2242 = vcombine.high %v2060, %v2152
    %v2244 = vunpack.c.l.s4 1983009808
    %v2245 = vunpack.c.0.s8 %v2244
    %v2246 = vlaneseq
    %v2247 = vshrl.u32 %v2246, 7
    %v2248 = vsub.s32 %v2245, %v2247
    %v2249 = vrot.slane %v2241, %v2248
    %v2251 = vunpack.c.l.s4 1983009808
    %v2252 = vunpack.c.0.s8 %v2251
    %v2253 = vlaneseq
    %v2254 = vshrl.u32 %v2253, 7
    %v2255 = vsub.s32 %v2252, %v2254
    %v2256 = vrot.slane %v2242, %v2255
    %v2257 = vcombine.low %v2233, %v2249
    %v2258 = vcombine.high %v2233, %v2249
    %v2260 = vunpack.c.l.s4 1934713408
    %v2261 = vunpack.c.0.s8 %v2260
    %v2262 = vlaneseq
    %v2263 = vshrl.u32 %v2262, 7
    %v2264 = vsub.s32 %v2261, %v2263
    %v2265 = vrot.slane %v2257, %v2264
    %v2267 = vunpack.c.l.s4 1934713408
    %v2268 = vunpack.c.0.s8 %v2267
    %v2269 = vlaneseq
    %v2270 = vshrl.u32 %v2269, 7
    %v2271 = vsub.s32 %v2268, %v2270
    %v2272 = vrot.slane %v2258, %v2271
    %v2273 = vcombine.low %v2240, %v2256
    %v2274 = vcombine.high %v2240, %v2256
    %v2276 = vunpack.c.l.s4 1934713408
    %v2277 = vunpack.c.0.s8 %v2276
    %v2278 = vlaneseq
    %v2279 = vshrl.u32 %v2278, 7
    %v2280 = vsub.s32 %v2277, %v2279
    %v2281 = vrot.slane %v2273, %v2280
    %v2283 = vunpack.c.l.s4 1934713408
    %v2284 = vunpack.c.0.s8 %v2283
    %v2285 = vlaneseq
    %v2286 = vshrl.u32 %v2285, 7
    %v2287 = vsub.s32 %v2284, %v2286
    %v2288 = vrot.slane %v2274, %v2287
    %v2289 = vcombine.high %v2265, 0.0
    %v2290 = vcombine.high %v2272, 0.0
    %v2291 = vcombine.high %v2281, 0.0
    %v2292 = vcombine.high %v2288, 0.0
    %v2293 = vcombine.low %v2197, %v2204
    %v2295 = vunpack.c.l.s4 1983009808
    %v2296 = vunpack.c.0.s8 %v2295
    %v2297 = vlaneseq
    %v2298 = vshrl.u32 %v2297, 7
    %v2299 = vsub.s32 %v2296, %v2298
    %v2300 = vrot.slane %v2293, %v2299
    %v2301 = vcombine.low %v2221, %v2222
    %v2303 = vunpack.c.l.s4 1983009808
    %v2304 = vunpack.c.0.s8 %v2303
    %v2305 = vlaneseq
    %v2306 = vshrl.u32 %v2305, 7
    %v2307 = vsub.s32 %v2304, %v2306
    %v2308 = vrot.slane %v2301, %v2307
    %v2309 = vcombine.low %v2213, %v2220
    %v2311 = vunpack.c.l.s4 1983009808
    %v2312 = vunpack.c.0.s8 %v2311
    %v2313 = vlaneseq
    %v2314 = vshrl.u32 %v2313, 7
    %v2315 = vsub.s32 %v2312, %v2314
    %v2316 = vrot.slane %v2309, %v2315
    %v2317 = vcombine.low %v2223, %v2224
    %v2319 = vunpack.c.l.s4 1983009808
    %v2320 = vunpack.c.0.s8 %v2319
    %v2321 = vlaneseq
    %v2322 = vshrl.u32 %v2321, 7
    %v2323 = vsub.s32 %v2320, %v2322
    %v2324 = vrot.slane %v2317, %v2323
    %v2325 = vcombine.low %v2300, %v2308
    %v2326 = vcombine.high %v2300, %v2308
    %v2328 = vunpack.c.l.s4 1934713408
    %v2329 = vunpack.c.0.s8 %v2328
    %v2330 = vlaneseq
    %v2331 = vshrl.u32 %v2330, 7
    %v2332 = vsub.s32 %v2329, %v2331
    %v2333 = vrot.slane %v2325, %v2332
    %v2335 = vunpack.c.l.s4 1934713408
    %v2336 = vunpack.c.0.s8 %v2335
    %v2337 = vlaneseq
    %v2338 = vshrl.u32 %v2337, 7
    %v2339 = vsub.s32 %v2336, %v2338
    %v2340 = vrot.slane %v2326, %v2339
    %v2341 = vcombine.low %v2316, %v2324
    %v2342 = vcombine.high %v2316, %v2324
    %v2344 = vunpack.c.l.s4 1934713408
    %v2345 = vunpack.c.0.s8 %v2344
    %v2346 = vlaneseq
    %v2347 = vshrl.u32 %v2346, 7
    %v2348 = vsub.s32 %v2345, %v2347
    %v2349 = vrot.slane %v2341, %v2348
    %v2351 = vunpack.c.l.s4 1934713408
    %v2352 = vunpack.c.0.s8 %v2351
    %v2353 = vlaneseq
    %v2354 = vshrl.u32 %v2353, 7
    %v2355 = vsub.s32 %v2352, %v2354
    %v2356 = vrot.slane %v2342, %v2355
    %v2357 = vcombine.low %v2333, %v2349
    %v2358 = vcombine.high %v2333, %v2349
    %v2359 = vcombine.low %v2340, %v2356
    %v2360 = vcombine.high %v2340, %v2356
    %v2361 = vcombine.low %v2265, %v2272
    %v2363 = vunpack.c.l.s4 1983009808
    %v2364 = vunpack.c.0.s8 %v2363
    %v2365 = vlaneseq
    %v2366 = vshrl.u32 %v2365, 7
    %v2367 = vsub.s32 %v2364, %v2366
    %v2368 = vrot.slane %v2361, %v2367
    %v2369 = vcombine.low %v2289, %v2290
    %v2371 = vunpack.c.l.s4 1983009808
    %v2372 = vunpack.c.0.s8 %v2371
    %v2373 = vlaneseq
    %v2374 = vshrl.u32 %v2373, 7
    %v2375 = vsub.s32 %v2372, %v2374
    %v2376 = vrot.slane %v2369, %v2375
    %v2377 = vcombine.low %v2281, %v2288
    %v2379 = vunpack.c.l.s4 1983009808
    %v2380 = vunpack.c.0.s8 %v2379
    %v2381 = vlaneseq
    %v2382 = vshrl.u32 %v2381, 7
    %v2383 = vsub.s32 %v2380, %v2382
    %v2384 = vrot.slane %v2377, %v2383
    %v2385 = vcombine.low %v2291, %v2292
    %v2387 = vunpack.c.l.s4 1983009808
    %v2388 = vunpack.c.0.s8 %v2387
    %v2389 = vlaneseq
    %v2390 = vshrl.u32 %v2389, 7
    %v2391 = vsub.s32 %v2388, %v2390
    %v2392 = vrot.slane %v2385, %v2391
    %v2393 = vcombine.low %v2368, %v2376
    %v2394 = vcombine.high %v2368, %v2376
    %v2396 = vunpack.c.l.s4 1934713408
    %v2397 = vunpack.c.0.s8 %v2396
    %v2398 = vlaneseq
    %v2399 = vshrl.u32 %v2398, 7
    %v2400 = vsub.s32 %v2397, %v2399
    %v2401 = vrot.slane %v2393, %v2400
    %v2403 = vunpack.c.l.s4 1934713408
    %v2404 = vunpack.c.0.s8 %v2403
    %v2405 = vlaneseq
    %v2406 = vshrl.u32 %v2405, 7
    %v2407 = vsub.s32 %v2404, %v2406
    %v2408 = vrot.slane %v2394, %v2407
    %v2409 = vcombine.low %v2384, %v2392
    %v2410 = vcombine.high %v2384, %v2392
    %v2412 = vunpack.c.l.s4 1934713408
    %v2413 = vunpack.c.0.s8 %v2412
    %v2414 = vlaneseq
    %v2415 = vshrl.u32 %v2414, 7
    %v2416 = vsub.s32 %v2413, %v2415
    %v2417 = vrot.slane %v2409, %v2416
    %v2419 = vunpack.c.l.s4 1934713408
    %v2420 = vunpack.c.0.s8 %v2419
    %v2421 = vlaneseq
    %v2422 = vshrl.u32 %v2421, 7
    %v2423 = vsub.s32 %v2420, %v2422
    %v2424 = vrot.slane %v2410, %v2423
    %v2425 = vcombine.low %v2401, %v2417
    %v2426 = vcombine.high %v2401, %v2417
    %v2427 = vcombine.low %v2408, %v2424
    %v2428 = vcombine.high %v2408, %v2424
    %2431 = vrot.lane.b32.xlu0 %v2358, 32
    %v2432 = vpop.permute.xlu0 %2431
    %2433 = vrot.lane.b32.xlu0 %v2426, 32
    %v2434 = vpop.permute.xlu0 %2433
    %2439 = vrot.lane.b32.xlu0 %v2359, 64
    %v2440 = vpop.permute.xlu0 %2439
    %2441 = vrot.lane.b32.xlu0 %v2427, 64
    %v2442 = vpop.permute.xlu0 %2441
    %2447 = vrot.lane.b32.xlu0 %v2360, 96
    %v2448 = vpop.permute.xlu0 %2447
    %2449 = vrot.lane.b32.xlu0 %v2428, 96
    %v2450 = vpop.permute.xlu0 %2449
    %v2453 = vsel %vm1322, %v2357, %v2432
    %v2454 = vsel %vm1322, %v2425, %v2434
    %vm2455 = vcmask 523264
    %v2456 = vsel %vm2455, %v2453, %v2440
    %v2457 = vsel %vm2455, %v2454, %v2442
    %vm2458 = vcmask 785408
    %v2459 = vsel %vm2458, %v2456, %v2448
    %v2460 = vsel %vm2458, %v2457, %v2450
    %v2461 = vpack.c.bf16 %v2460, %v2459
    %v2462 = vld [vmem:[#allocation8] sm:$0xf]
    %v2463 = vld [vmem:[#allocation8 + $0x4] sm:$0xf]
    %v2464 = vld [vmem:[#allocation8 + $0x8] sm:$0xf]
    %v2465 = vld [vmem:[#allocation8 + $0xc] sm:$0xf]
    %v2466 = vld [vmem:[#allocation8 + $0x10] sm:$0xf]
    %v2467 = vld [vmem:[#allocation8 + $0x14] sm:$0xf]
    %v2468 = vld [vmem:[#allocation8 + $0x18] sm:$0xf]
    %v2469 = vld [vmem:[#allocation8 + $0x1c] sm:$0xf]
    %v2470 = vld [vmem:[#allocation8 + $0x20] sm:$0xf]
    %v2471 = vld [vmem:[#allocation8 + $0x24] sm:$0xf]
    %v2472 = vld [vmem:[#allocation8 + $0x28] sm:$0xf]
    %v2473 = vld [vmem:[#allocation8 + $0x2c] sm:$0xf]
    %v2474 = vld [vmem:[#allocation8 + $0x30] sm:$0xf]
    %v2475 = vld [vmem:[#allocation8 + $0x34] sm:$0xf]
    %v2476 = vld [vmem:[#allocation8 + $0x38] sm:$0xf]
    %v2477 = vld [vmem:[#allocation8 + $0x3c] sm:$0xf]
    %v2478 = vld [vmem:[%s6] sm:$0x1]
    %v2479 = vlaneseq
    %v2480 = vshrl.u32 %v2479, 7
    %v2481 = vsub.s32 0, %v2480
    %v2482 = vrot.slane %v2478, %v2481
    %v2499 = vunpack.c.l.b16 %v2462
    %v2500 = vunpack.c.l.b16 %v2463
    %v2501 = vunpack.c.l.b16 %v2464
    %v2502 = vunpack.c.l.b16 %v2465
    %v2503 = vunpack.c.l.b16 %v2466
    %v2504 = vunpack.c.l.b16 %v2467
    %v2505 = vunpack.c.l.b16 %v2468
    %v2506 = vunpack.c.l.b16 %v2469
    %v2507 = vunpack.c.l.b16 %v2470
    %v2508 = vunpack.c.l.b16 %v2471
    %v2509 = vunpack.c.l.b16 %v2472
    %v2510 = vunpack.c.l.b16 %v2473
    %v2511 = vunpack.c.l.b16 %v2474
    %v2512 = vunpack.c.l.b16 %v2475
    %v2513 = vunpack.c.l.b16 %v2476
    %v2514 = vunpack.c.l.b16 %v2477
    %v2515 = vpack.c.b16 %v2500, %v2499
    %v2516 = vpack.c.b16 %v2502, %v2501
    %v2517 = vpack.c.b16 %v2504, %v2503
    %v2518 = vpack.c.b16 %v2506, %v2505
    %v2519 = vpack.c.b16 %v2508, %v2507
    %v2520 = vpack.c.b16 %v2510, %v2509
    %v2521 = vpack.c.b16 %v2512, %v2511
    %v2522 = vpack.c.b16 %v2514, %v2513
    %2531 = vmatprep.subr.bf16.mxu0 0
    %2532 = vmatpush1.bf16.msra.mxu0 %v2515
    %2533 = vmatprep.subr.bf16.mxu0 0
    %2534 = vmatpush1.bf16.msra.mxu0 %v2516
    %2535 = vmatprep.subr.bf16.mxu0 0
    %2536 = vmatpush1.bf16.msra.mxu0 %v2517
    %2537 = vmatprep.subr.bf16.mxu0 0
    %2538 = vmatpush1.bf16.msra.mxu0 %v2518
    %2539 = vmatprep.subr.bf16.mxu0 0
    %2540 = vmatpush1.bf16.msra.mxu0 %v2519
    %2541 = vmatprep.subr.bf16.mxu0 0
    %2542 = vmatpush1.bf16.msra.mxu0 %v2520
    %2543 = vmatprep.subr.bf16.mxu0 0
    %2544 = vmatpush1.bf16.msra.mxu0 %v2521
    %2545 = vmatprep.subr.bf16.mxu0 0
    %2546 = vmatpush1.bf16.msra.mxu0 %v2522
    %2547 = vmatprep.subr.bf16.mxu0 0
    %2548 = vmatpush1.bf16.msra.mxu0 0
    %2549 = vmatprep.subr.bf16.mxu0 0
    %2550 = vmatpush1.bf16.msra.mxu0 0
    %2551 = vmatprep.subr.bf16.mxu0 0
    %2552 = vmatpush1.bf16.msra.mxu0 0
    %2553 = vmatprep.subr.bf16.mxu0 0
    %2554 = vmatpush1.bf16.msra.mxu0 0
    %2555 = vmatprep.subr.bf16.mxu0 0
    %2556 = vmatpush1.bf16.msra.mxu0 0
    %2557 = vmatprep.subr.bf16.mxu0 0
    %2558 = vmatpush1.bf16.msra.mxu0 0
    %2559 = vmatprep.subr.bf16.mxu0 0
    %2560 = vmatpush1.bf16.msra.mxu0 0
    %2561 = vmatprep.subr.bf16.mxu0 0
    %2562 = vmatpush1.bf16.msra.mxu0 0
    %2563 = vmatprep.mubr.bf16.mxu0 0
    %2564 = vmatmul.mubr.bf16.gmra.mrb[0].mxu0 %v2461
    %v2565 = vpop.f32.mrb[0].mxu0
    %v2566 = vadd.f32 %v2482, %v2565
    %v2567 = vpop.f32.mrb[0].mxu0
    %v2568 = vpop.f32.mrb[0].mxu0
    %v2569 = vadd.f32 %v2482, %v2568
    %v2570 = vpop.f32.mrb[0].mxu0
    %2571 = vdwg.mxu0
    %v2572 = vadd.f32 %v138, %v2566
    %v2573 = vadd.f32 %v139, %v2569
    %v2574 = vld [vmem:[%s7] sm:$0x1]
    %v2575 = vld [vmem:[%s8] sm:$0x1]
    %2576 = vadd.xlane.f32.xlu0 %v2572
    %v2577 = vpop.xlane.xlu0 %2576
    %2578 = vadd.xlane.f32.xlu0 %v2573
    %v2579 = vpop.xlane.xlu0 %2578
    %v2580 = vmul.f32 %v2577, %v146
    %v2581 = vmul.f32 %v2579, %v146
    %v2582 = vsub.f32 %v2572, %v2580
    %v2583 = vsub.f32 %v2573, %v2581
    %v2584 = vmul.f32 %v2582, %v2582
    %v2585 = vmul.f32 %v2583, %v2583
    %2586 = vadd.xlane.f32.xlu0 %v2584
    %v2587 = vpop.xlane.xlu0 %2586
    %2588 = vadd.xlane.f32.xlu0 %v2585
    %v2589 = vpop.xlane.xlu0 %2588
    %v2590 = vmul.f32 %v2587, %v146
    %v2591 = vmul.f32 %v2589, %v146
    %v2592 = vadd.f32 %v2590, 1e-05
    %v2593 = vadd.f32 %v2591, 1e-05
    %v2594 = vrsqrt.pop %v2592
    %v2595 = vrsqrt.pop %v2593
    %v2596 = vmul.f32 %v2582, %v2594
    %v2597 = vmul.f32 %v2583, %v2595
    %v2598 = vlaneseq
    %v2599 = vshrl.u32 %v2598, 7
    %v2600 = vsub.s32 0, %v2599
    %v2601 = vrot.slane %v2574, %v2600
    %v2602 = vmul.f32 %v2596, %v2601
    %v2603 = vmul.f32 %v2597, %v2601
    %v2604 = vlaneseq
    %v2605 = vshrl.u32 %v2604, 7
    %v2606 = vsub.s32 0, %v2605
    %v2607 = vrot.slane %v2575, %v2606
    %v2608 = vadd.f32 %v2602, %v2607
    %v2609 = vadd.f32 %v2603, %v2607
    %v2610 = vpack.c.bf16 %v2609, %v2608
    %v2611 = vld [vmem:[#allocation10] sm:$0xff]
    %v2612 = vld [vmem:[#allocation10 + $0x8] sm:$0xff]
    %v2613 = vld [vmem:[#allocation10 + $0x10] sm:$0xff]
    %v2614 = vld [vmem:[#allocation10 + $0x18] sm:$0xff]
    %v2615 = vld [vmem:[#allocation10 + $0x20] sm:$0xff]
    %v2616 = vld [vmem:[#allocation10 + $0x28] sm:$0xff]
    %v2617 = vld [vmem:[#allocation10 + $0x30] sm:$0xff]
    %v2618 = vld [vmem:[#allocation10 + $0x38] sm:$0xff]
    %v2619 = vld [vmem:[#allocation10 + $0x40] sm:$0xff]
    %v2620 = vld [vmem:[#allocation10 + $0x48] sm:$0xff]
    %v2621 = vld [vmem:[#allocation10 + $0x50] sm:$0xff]
    %v2622 = vld [vmem:[#allocation10 + $0x58] sm:$0xff]
    %v2623 = vld [vmem:[#allocation10 + $0x60] sm:$0xff]
    %v2624 = vld [vmem:[#allocation10 + $0x68] sm:$0xff]
    %v2625 = vld [vmem:[#allocation10 + $0x70] sm:$0xff]
    %v2626 = vld [vmem:[#allocation10 + $0x78] sm:$0xff]
    %v2627 = vld [vmem:[#allocation10 + $0x80] sm:$0xff]
    %v2628 = vld [vmem:[#allocation10 + $0x88] sm:$0xff]
    %v2629 = vld [vmem:[#allocation10 + $0x90] sm:$0xff]
    %v2630 = vld [vmem:[#allocation10 + $0x98] sm:$0xff]
    %v2631 = vld [vmem:[#allocation10 + $0xa0] sm:$0xff]
    %v2632 = vld [vmem:[#allocation10 + $0xa8] sm:$0xff]
    %v2633 = vld [vmem:[#allocation10 + $0xb0] sm:$0xff]
    %v2634 = vld [vmem:[#allocation10 + $0xb8] sm:$0xff]
    %v2635 = vld [vmem:[#allocation10 + $0xc0] sm:$0xff]
    %v2636 = vld [vmem:[#allocation10 + $0xc8] sm:$0xff]
    %v2637 = vld [vmem:[#allocation10 + $0xd0] sm:$0xff]
    %v2638 = vld [vmem:[#allocation10 + $0xd8] sm:$0xff]
    %v2639 = vld [vmem:[#allocation10 + $0xe0] sm:$0xff]
    %v2640 = vld [vmem:[#allocation10 + $0xe8] sm:$0xff]
    %v2641 = vld [vmem:[#allocation10 + $0xf0] sm:$0xff]
    %v2642 = vld [vmem:[#allocation10 + $0xf8] sm:$0xff]
    %v2643 = vld [vmem:[%s10] ss:$2 sm:$0xf]
    %v2645 = vlaneseq
    %v2646 = vshrl.u32 %v2645, 7
    %v2647 = vsub.s32 0, %v2646
    %v2648 = vrot.slane %v2643, %v2647
    %v2649 = vlaneseq
    %v2650 = vshrl.u32 %v2649, 7
    %v2651 = vsub.s32 1, %v2650
    %v2652 = vrot.slane %v2643, %v2651
    %v2653 = vlaneseq
    %v2654 = vshrl.u32 %v2653, 7
    %v2655 = vsub.s32 2, %v2654
    %v2656 = vrot.slane %v2643, %v2655
    %v2657 = vlaneseq
    %v2658 = vshrl.u32 %v2657, 7
    %v2659 = vsub.s32 3, %v2658
    %v2660 = vrot.slane %v2643, %v2659
    %v2697 = vunpack.c.l.b16 %v2611
    %v2698 = vunpack.c.h.b16 %v2611
    %v2699 = vunpack.c.l.b16 %v2612
    %v2700 = vunpack.c.h.b16 %v2612
    %v2701 = vunpack.c.l.b16 %v2613
    %v2702 = vunpack.c.h.b16 %v2613
    %v2703 = vunpack.c.l.b16 %v2614
    %v2704 = vunpack.c.h.b16 %v2614
    %v2705 = vunpack.c.l.b16 %v2615
    %v2706 = vunpack.c.h.b16 %v2615
    %v2707 = vunpack.c.l.b16 %v2616
    %v2708 = vunpack.c.h.b16 %v2616
    %v2709 = vunpack.c.l.b16 %v2617
    %v2710 = vunpack.c.h.b16 %v2617
    %v2711 = vunpack.c.l.b16 %v2618
    %v2712 = vunpack.c.h.b16 %v2618
    %v2713 = vunpack.c.l.b16 %v2619
    %v2714 = vunpack.c.h.b16 %v2619
    %v2715 = vunpack.c.l.b16 %v2620
    %v2716 = vunpack.c.h.b16 %v2620
    %v2717 = vunpack.c.l.b16 %v2621
    %v2718 = vunpack.c.h.b16 %v2621
    %v2719 = vunpack.c.l.b16 %v2622
    %v2720 = vunpack.c.h.b16 %v2622
    %v2721 = vunpack.c.l.b16 %v2623
    %v2722 = vunpack.c.h.b16 %v2623
    %v2723 = vunpack.c.l.b16 %v2624
    %v2724 = vunpack.c.h.b16 %v2624
    %v2725 = vunpack.c.l.b16 %v2625
    %v2726 = vunpack.c.h.b16 %v2625
    %v2727 = vunpack.c.l.b16 %v2626
    %v2728 = vunpack.c.h.b16 %v2626
    %v2729 = vunpack.c.l.b16 %v2627
    %v2730 = vunpack.c.h.b16 %v2627
    %v2731 = vunpack.c.l.b16 %v2628
    %v2732 = vunpack.c.h.b16 %v2628
    %v2733 = vunpack.c.l.b16 %v2629
    %v2734 = vunpack.c.h.b16 %v2629
    %v2735 = vunpack.c.l.b16 %v2630
    %v2736 = vunpack.c.h.b16 %v2630
    %v2737 = vunpack.c.l.b16 %v2631
    %v2738 = vunpack.c.h.b16 %v2631
    %v2739 = vunpack.c.l.b16 %v2632
    %v2740 = vunpack.c.h.b16 %v2632
    %v2741 = vunpack.c.l.b16 %v2633
    %v2742 = vunpack.c.h.b16 %v2633
    %v2743 = vunpack.c.l.b16 %v2634
    %v2744 = vunpack.c.h.b16 %v2634
    %v2745 = vunpack.c.l.b16 %v2635
    %v2746 = vunpack.c.h.b16 %v2635
    %v2747 = vunpack.c.l.b16 %v2636
    %v2748 = vunpack.c.h.b16 %v2636
    %v2749 = vunpack.c.l.b16 %v2637
    %v2750 = vunpack.c.h.b16 %v2637
    %v2751 = vunpack.c.l.b16 %v2638
    %v2752 = vunpack.c.h.b16 %v2638
    %v2753 = vunpack.c.l.b16 %v2639
    %v2754 = vunpack.c.h.b16 %v2639
    %v2755 = vunpack.c.l.b16 %v2640
    %v2756 = vunpack.c.h.b16 %v2640
    %v2757 = vunpack.c.l.b16 %v2641
    %v2758 = vunpack.c.h.b16 %v2641
    %v2759 = vunpack.c.l.b16 %v2642
    %v2760 = vunpack.c.h.b16 %v2642
    %v2761 = vpack.c.b16 %v2701, %v2697
    %v2762 = vpack.c.b16 %v2702, %v2698
    %v2763 = vpack.c.b16 %v2703, %v2699
    %v2764 = vpack.c.b16 %v2704, %v2700
    %v2765 = vpack.c.b16 %v2709, %v2705
    %v2766 = vpack.c.b16 %v2710, %v2706
    %v2767 = vpack.c.b16 %v2711, %v2707
    %v2768 = vpack.c.b16 %v2712, %v2708
    %v2769 = vpack.c.b16 %v2717, %v2713
    %v2770 = vpack.c.b16 %v2718, %v2714
    %v2771 = vpack.c.b16 %v2719, %v2715
    %v2772 = vpack.c.b16 %v2720, %v2716
    %v2773 = vpack.c.b16 %v2725, %v2721
    %v2774 = vpack.c.b16 %v2726, %v2722
    %v2775 = vpack.c.b16 %v2727, %v2723
    %v2776 = vpack.c.b16 %v2728, %v2724
    %v2777 = vpack.c.b16 %v2733, %v2729
    %v2778 = vpack.c.b16 %v2734, %v2730
    %v2779 = vpack.c.b16 %v2735, %v2731
    %v2780 = vpack.c.b16 %v2736, %v2732
    %v2781 = vpack.c.b16 %v2741, %v2737
    %v2782 = vpack.c.b16 %v2742, %v2738
    %v2783 = vpack.c.b16 %v2743, %v2739
    %v2784 = vpack.c.b16 %v2744, %v2740
    %v2785 = vpack.c.b16 %v2749, %v2745
    %v2786 = vpack.c.b16 %v2750, %v2746
    %v2787 = vpack.c.b16 %v2751, %v2747
    %v2788 = vpack.c.b16 %v2752, %v2748
    %v2789 = vpack.c.b16 %v2757, %v2753
    %v2790 = vpack.c.b16 %v2758, %v2754
    %v2791 = vpack.c.b16 %v2759, %v2755
    %v2792 = vpack.c.b16 %v2760, %v2756
    %2825 = vmatprep.subr.bf16.mxu0 %v2762
    %2826 = vmatpush1.bf16.msra.mxu0 %v2761
    %2827 = vmatprep.subr.bf16.mxu0 %v2766
    %2828 = vmatpush1.bf16.msra.mxu0 %v2765
    %2829 = vmatprep.subr.bf16.mxu0 %v2770
    %2830 = vmatpush1.bf16.msra.mxu0 %v2769
    %2831 = vmatprep.subr.bf16.mxu0 %v2774
    %2832 = vmatpush1.bf16.msra.mxu0 %v2773
    %2833 = vmatprep.subr.bf16.mxu0 %v2778
    %2834 = vmatpush1.bf16.msra.mxu0 %v2777
    %2835 = vmatprep.subr.bf16.mxu0 %v2782
    %2836 = vmatpush1.bf16.msra.mxu0 %v2781
    %2837 = vmatprep.subr.bf16.mxu0 %v2786
    %2838 = vmatpush1.bf16.msra.mxu0 %v2785
    %2839 = vmatprep.subr.bf16.mxu0 %v2790
    %2840 = vmatpush1.bf16.msra.mxu0 %v2789
    %2841 = vmatprep.subr.bf16.mxu0 0
    %2842 = vmatpush1.bf16.msra.mxu0 0
    %2843 = vmatprep.subr.bf16.mxu0 0
    %2844 = vmatpush1.bf16.msra.mxu0 0
    %2845 = vmatprep.subr.bf16.mxu0 0
    %2846 = vmatpush1.bf16.msra.mxu0 0
    %2847 = vmatprep.subr.bf16.mxu0 0
    %2848 = vmatpush1.bf16.msra.mxu0 0
    %2849 = vmatprep.subr.bf16.mxu0 0
    %2850 = vmatpush1.bf16.msra.mxu0 0
    %2851 = vmatprep.subr.bf16.mxu0 0
    %2852 = vmatpush1.bf16.msra.mxu0 0
    %2853 = vmatprep.subr.bf16.mxu0 0
    %2854 = vmatpush1.bf16.msra.mxu0 0
    %2855 = vmatprep.subr.bf16.mxu0 0
    %2856 = vmatpush1.bf16.msra.mxu0 0
    %2857 = vmatprep.mubr.bf16.mxu0 0
    %2858 = vmatmul.mubr.bf16.gmra.mrb[0].mxu0 %v2610
    %v2859 = vpop.f32.mrb[0].mxu0
    %v2860 = vadd.f32 %v2648, %v2859
    %v2861 = vpop.f32.mrb[0].mxu0
    %v2862 = vadd.f32 %v2652, %v2861
    %v2863 = vpop.f32.mrb[0].mxu0
    %v2864 = vadd.f32 %v2648, %v2863
    %v2865 = vpop.f32.mrb[0].mxu0
    %v2866 = vadd.f32 %v2652, %v2865
    %2867 = vdwg.mxu0
    %2868 = vmatprep.subr.bf16.mxu0 %v2764
    %2869 = vmatpush1.bf16.msra.mxu0 %v2763
    %2870 = vmatprep.subr.bf16.mxu0 %v2768
    %2871 = vmatpush1.bf16.msra.mxu0 %v2767
    %2872 = vmatprep.subr.bf16.mxu0 %v2772
    %2873 = vmatpush1.bf16.msra.mxu0 %v2771
    %2874 = vmatprep.subr.bf16.mxu0 %v2776
    %2875 = vmatpush1.bf16.msra.mxu0 %v2775
    %2876 = vmatprep.subr.bf16.mxu0 %v2780
    %2877 = vmatpush1.bf16.msra.mxu0 %v2779
    %2878 = vmatprep.subr.bf16.mxu0 %v2784
    %2879 = vmatpush1.bf16.msra.mxu0 %v2783
    %2880 = vmatprep.subr.bf16.mxu0 %v2788
    %2881 = vmatpush1.bf16.msra.mxu0 %v2787
    %2882 = vmatprep.subr.bf16.mxu0 %v2792
    %2883 = vmatpush1.bf16.msra.mxu0 %v2791
    %2884 = vmatprep.subr.bf16.mxu0 0
    %2885 = vmatpush1.bf16.msra.mxu0 0
    %2886 = vmatprep.subr.bf16.mxu0 0
    %2887 = vmatpush1.bf16.msra.mxu0 0
    %2888 = vmatprep.subr.bf16.mxu0 0
    %2889 = vmatpush1.bf16.msra.mxu0 0
    %2890 = vmatprep.subr.bf16.mxu0 0
    %2891 = vmatpush1.bf16.msra.mxu0 0
    %2892 = vmatprep.subr.bf16.mxu0 0
    %2893 = vmatpush1.bf16.msra.mxu0 0
    %2894 = vmatprep.subr.bf16.mxu0 0
    %2895 = vmatpush1.bf16.msra.mxu0 0
    %2896 = vmatprep.subr.bf16.mxu0 0
    %2897 = vmatpush1.bf16.msra.mxu0 0
    %2898 = vmatprep.subr.bf16.mxu0 0
    %2899 = vmatpush1.bf16.msra.mxu0 0
    %2900 = vmatprep.mubr.bf16.mxu0 0
    %2901 = vmatmul.mubr.bf16.gmra.mrb[0].mxu0 %v2610
    %v2902 = vpop.f32.mrb[0].mxu0
    %v2903 = vadd.f32 %v2656, %v2902
    %v2904 = vpop.f32.mrb[0].mxu0
    %v2905 = vadd.f32 %v2660, %v2904
    %v2906 = vpop.f32.mrb[0].mxu0
    %v2907 = vadd.f32 %v2656, %v2906
    %v2908 = vpop.f32.mrb[0].mxu0
    %v2909 = vadd.f32 %v2660, %v2908
    %2910 = vdwg.mxu0
    %v2911 = vmul.f32 %v2860, 0.5
    %v2912 = vmul.f32 %v2862, 0.5
    %v2913 = vmul.f32 %v2903, 0.5
    %v2914 = vmul.f32 %v2905, 0.5
    %v2915 = vmul.f32 %v2864, 0.5
    %v2916 = vmul.f32 %v2866, 0.5
    %v2917 = vmul.f32 %v2907, 0.5
    %v2918 = vmul.f32 %v2909, 0.5
    %v2919 = vmul.f32 %v2860, 0.70710677
    %v2920 = vmul.f32 %v2862, 0.70710677
    %v2921 = vmul.f32 %v2903, 0.70710677
    %v2922 = vmul.f32 %v2905, 0.70710677
    %v2923 = vmul.f32 %v2864, 0.70710677
    %v2924 = vmul.f32 %v2866, 0.70710677
    %v2925 = vmul.f32 %v2907, 0.70710677
    %v2926 = vmul.f32 %v2909, 0.70710677
    %v2927 = verf.f32.pop %v2919
    %v2928 = verf.f32.pop %v2920
    %v2929 = verf.f32.pop %v2921
    %v2930 = verf.f32.pop %v2922
    %v2931 = verf.f32.pop %v2923
    %v2932 = verf.f32.pop %v2924
    %v2933 = verf.f32.pop %v2925
    %v2934 = verf.f32.pop %v2926
    %v2935 = vadd.f32 %v2927, 1.0
    %v2936 = vadd.f32 %v2928, 1.0
    %v2937 = vadd.f32 %v2929, 1.0
    %v2938 = vadd.f32 %v2930, 1.0
    %v2939 = vadd.f32 %v2931, 1.0
    %v2940 = vadd.f32 %v2932, 1.0
    %v2941 = vadd.f32 %v2933, 1.0
    %v2942 = vadd.f32 %v2934, 1.0
    %v2943 = vmul.f32 %v2911, %v2935
    %v2944 = vmul.f32 %v2912, %v2936
    %v2945 = vmul.f32 %v2913, %v2937
    %v2946 = vmul.f32 %v2914, %v2938
    %v2947 = vmul.f32 %v2915, %v2939
    %v2948 = vmul.f32 %v2916, %v2940
    %v2949 = vmul.f32 %v2917, %v2941
    %v2950 = vmul.f32 %v2918, %v2942
    %v2951 = vpack.c.bf16 %v2947, %v2943
    %v2952 = vpack.c.bf16 %v2948, %v2944
    %v2953 = vpack.c.bf16 %v2949, %v2945
    %v2954 = vpack.c.bf16 %v2950, %v2946
    %v2955 = vld [vmem:[#allocation11] sm:$0xf]
    %v2956 = vld [vmem:[#allocation11 + $0x4] sm:$0xf]
    %v2957 = vld [vmem:[#allocation11 + $0x8] sm:$0xf]
    %v2958 = vld [vmem:[#allocation11 + $0xc] sm:$0xf]
    %v2959 = vld [vmem:[#allocation11 + $0x10] sm:$0xf]
    %v2960 = vld [vmem:[#allocation11 + $0x14] sm:$0xf]
    %v2961 = vld [vmem:[#allocation11 + $0x18] sm:$0xf]
    %v2962 = vld [vmem:[#allocation11 + $0x1c] sm:$0xf]
    %v2963 = vld [vmem:[#allocation11 + $0x20] sm:$0xf]
    %v2964 = vld [vmem:[#allocation11 + $0x24] sm:$0xf]
    %v2965 = vld [vmem:[#allocation11 + $0x28] sm:$0xf]
    %v2966 = vld [vmem:[#allocation11 + $0x2c] sm:$0xf]
    %v2967 = vld [vmem:[#allocation11 + $0x30] sm:$0xf]
    %v2968 = vld [vmem:[#allocation11 + $0x34] sm:$0xf]
    %v2969 = vld [vmem:[#allocation11 + $0x38] sm:$0xf]
    %v2970 = vld [vmem:[#allocation11 + $0x3c] sm:$0xf]
    %v2971 = vld [vmem:[#allocation11 + $0x40] sm:$0xf]
    %v2972 = vld [vmem:[#allocation11 + $0x44] sm:$0xf]
    %v2973 = vld [vmem:[#allocation11 + $0x48] sm:$0xf]
    %v2974 = vld [vmem:[#allocation11 + $0x4c] sm:$0xf]
    %v2975 = vld [vmem:[#allocation11 + $0x50] sm:$0xf]
    %v2976 = vld [vmem:[#allocation11 + $0x54] sm:$0xf]
    %v2977 = vld [vmem:[#allocation11 + $0x58] sm:$0xf]
    %v2978 = vld [vmem:[#allocation11 + $0x5c] sm:$0xf]
    %v2979 = vld [vmem:[#allocation11 + $0x60] sm:$0xf]
    %v2980 = vld [vmem:[#allocation11 + $0x64] sm:$0xf]
    %v2981 = vld [vmem:[#allocation11 + $0x68] sm:$0xf]
    %v2982 = vld [vmem:[#allocation11 + $0x6c] sm:$0xf]
    %v2983 = vld [vmem:[#allocation11 + $0x70] sm:$0xf]
    %v2984 = vld [vmem:[#allocation11 + $0x74] sm:$0xf]
    %v2985 = vld [vmem:[#allocation11 + $0x78] sm:$0xf]
    %v2986 = vld [vmem:[#allocation11 + $0x7c] sm:$0xf]
    %v2987 = vld [vmem:[#allocation11 + $0x80] sm:$0xf]
    %v2988 = vld [vmem:[#allocation11 + $0x84] sm:$0xf]
    %v2989 = vld [vmem:[#allocation11 + $0x88] sm:$0xf]
    %v2990 = vld [vmem:[#allocation11 + $0x8c] sm:$0xf]
    %v2991 = vld [vmem:[#allocation11 + $0x90] sm:$0xf]
    %v2992 = vld [vmem:[#allocation11 + $0x94] sm:$0xf]
    %v2993 = vld [vmem:[#allocation11 + $0x98] sm:$0xf]
    %v2994 = vld [vmem:[#allocation11 + $0x9c] sm:$0xf]
    %v2995 = vld [vmem:[#allocation11 + $0xa0] sm:$0xf]
    %v2996 = vld [vmem:[#allocation11 + $0xa4] sm:$0xf]
    %v2997 = vld [vmem:[#allocation11 + $0xa8] sm:$0xf]
    %v2998 = vld [vmem:[#allocation11 + $0xac] sm:$0xf]
    %v2999 = vld [vmem:[#allocation11 + $0xb0] sm:$0xf]
    %v3000 = vld [vmem:[#allocation11 + $0xb4] sm:$0xf]
    %v3001 = vld [vmem:[#allocation11 + $0xb8] sm:$0xf]
    %v3002 = vld [vmem:[#allocation11 + $0xbc] sm:$0xf]
    %v3003 = vld [vmem:[#allocation11 + $0xc0] sm:$0xf]
    %v3004 = vld [vmem:[#allocation11 + $0xc4] sm:$0xf]
    %v3005 = vld [vmem:[#allocation11 + $0xc8] sm:$0xf]
    %v3006 = vld [vmem:[#allocation11 + $0xcc] sm:$0xf]
    %v3007 = vld [vmem:[#allocation11 + $0xd0] sm:$0xf]
    %v3008 = vld [vmem:[#allocation11 + $0xd4] sm:$0xf]
    %v3009 = vld [vmem:[#allocation11 + $0xd8] sm:$0xf]
    %v3010 = vld [vmem:[#allocation11 + $0xdc] sm:$0xf]
    %v3011 = vld [vmem:[#allocation11 + $0xe0] sm:$0xf]
    %v3012 = vld [vmem:[#allocation11 + $0xe4] sm:$0xf]
    %v3013 = vld [vmem:[#allocation11 + $0xe8] sm:$0xf]
    %v3014 = vld [vmem:[#allocation11 + $0xec] sm:$0xf]
    %v3015 = vld [vmem:[#allocation11 + $0xf0] sm:$0xf]
    %v3016 = vld [vmem:[#allocation11 + $0xf4] sm:$0xf]
    %v3017 = vld [vmem:[#allocation11 + $0xf8] sm:$0xf]
    %v3018 = vld [vmem:[#allocation11 + $0xfc] sm:$0xf]
    %v3019 = vld [vmem:[%s12] sm:$0x1]
    %v3020 = vlaneseq
    %v3021 = vshrl.u32 %v3020, 7
    %v3022 = vsub.s32 0, %v3021
    %v3023 = vrot.slane %v3019, %v3022
    %v3088 = vunpack.c.l.b16 %v2955
    %v3089 = vunpack.c.l.b16 %v2956
    %v3090 = vunpack.c.l.b16 %v2957
    %v3091 = vunpack.c.l.b16 %v2958
    %v3092 = vunpack.c.l.b16 %v2959
    %v3093 = vunpack.c.l.b16 %v2960
    %v3094 = vunpack.c.l.b16 %v2961
    %v3095 = vunpack.c.l.b16 %v2962
    %v3096 = vunpack.c.l.b16 %v2963
    %v3097 = vunpack.c.l.b16 %v2964
    %v3098 = vunpack.c.l.b16 %v2965
    %v3099 = vunpack.c.l.b16 %v2966
    %v3100 = vunpack.c.l.b16 %v2967
    %v3101 = vunpack.c.l.b16 %v2968
    %v3102 = vunpack.c.l.b16 %v2969
    %v3103 = vunpack.c.l.b16 %v2970
    %v3104 = vunpack.c.l.b16 %v2971
    %v3105 = vunpack.c.l.b16 %v2972
    %v3106 = vunpack.c.l.b16 %v2973
    %v3107 = vunpack.c.l.b16 %v2974
    %v3108 = vunpack.c.l.b16 %v2975
    %v3109 = vunpack.c.l.b16 %v2976
    %v3110 = vunpack.c.l.b16 %v2977
    %v3111 = vunpack.c.l.b16 %v2978
    %v3112 = vunpack.c.l.b16 %v2979
    %v3113 = vunpack.c.l.b16 %v2980
    %v3114 = vunpack.c.l.b16 %v2981
    %v3115 = vunpack.c.l.b16 %v2982
    %v3116 = vunpack.c.l.b16 %v2983
    %v3117 = vunpack.c.l.b16 %v2984
    %v3118 = vunpack.c.l.b16 %v2985
    %v3119 = vunpack.c.l.b16 %v2986
    %v3120 = vunpack.c.l.b16 %v2987
    %v3121 = vunpack.c.l.b16 %v2988
    %v3122 = vunpack.c.l.b16 %v2989
    %v3123 = vunpack.c.l.b16 %v2990
    %v3124 = vunpack.c.l.b16 %v2991
    %v3125 = vunpack.c.l.b16 %v2992
    %v3126 = vunpack.c.l.b16 %v2993
    %v3127 = vunpack.c.l.b16 %v2994
    %v3128 = vunpack.c.l.b16 %v2995
    %v3129 = vunpack.c.l.b16 %v2996
    %v3130 = vunpack.c.l.b16 %v2997
    %v3131 = vunpack.c.l.b16 %v2998
    %v3132 = vunpack.c.l.b16 %v2999
    %v3133 = vunpack.c.l.b16 %v3000
    %v3134 = vunpack.c.l.b16 %v3001
    %v3135 = vunpack.c.l.b16 %v3002
    %v3136 = vunpack.c.l.b16 %v3003
    %v3137 = vunpack.c.l.b16 %v3004
    %v3138 = vunpack.c.l.b16 %v3005
    %v3139 = vunpack.c.l.b16 %v3006
    %v3140 = vunpack.c.l.b16 %v3007
    %v3141 = vunpack.c.l.b16 %v3008
    %v3142 = vunpack.c.l.b16 %v3009
    %v3143 = vunpack.c.l.b16 %v3010
    %v3144 = vunpack.c.l.b16 %v3011
    %v3145 = vunpack.c.l.b16 %v3012
    %v3146 = vunpack.c.l.b16 %v3013
    %v3147 = vunpack.c.l.b16 %v3014
    %v3148 = vunpack.c.l.b16 %v3015
    %v3149 = vunpack.c.l.b16 %v3016
    %v3150 = vunpack.c.l.b16 %v3017
    %v3151 = vunpack.c.l.b16 %v3018
    %v3152 = vpack.c.b16 %v3089, %v3088
    %v3153 = vpack.c.b16 %v3091, %v3090
    %v3154 = vpack.c.b16 %v3093, %v3092
    %v3155 = vpack.c.b16 %v3095, %v3094
    %v3156 = vpack.c.b16 %v3097, %v3096
    %v3157 = vpack.c.b16 %v3099, %v3098
    %v3158 = vpack.c.b16 %v3101, %v3100
    %v3159 = vpack.c.b16 %v3103, %v3102
    %v3160 = vpack.c.b16 %v3105, %v3104
    %v3161 = vpack.c.b16 %v3107, %v3106
    %v3162 = vpack.c.b16 %v3109, %v3108
    %v3163 = vpack.c.b16 %v3111, %v3110
    %v3164 = vpack.c.b16 %v3113, %v3112
    %v3165 = vpack.c.b16 %v3115, %v3114
    %v3166 = vpack.c.b16 %v3117, %v3116
    %v3167 = vpack.c.b16 %v3119, %v3118
    %v3168 = vpack.c.b16 %v3121, %v3120
    %v3169 = vpack.c.b16 %v3123, %v3122
    %v3170 = vpack.c.b16 %v3125, %v3124
    %v3171 = vpack.c.b16 %v3127, %v3126
    %v3172 = vpack.c.b16 %v3129, %v3128
    %v3173 = vpack.c.b16 %v3131, %v3130
    %v3174 = vpack.c.b16 %v3133, %v3132
    %v3175 = vpack.c.b16 %v3135, %v3134
    %v3176 = vpack.c.b16 %v3137, %v3136
    %v3177 = vpack.c.b16 %v3139, %v3138
    %v3178 = vpack.c.b16 %v3141, %v3140
    %v3179 = vpack.c.b16 %v3143, %v3142
    %v3180 = vpack.c.b16 %v3145, %v3144
    %v3181 = vpack.c.b16 %v3147, %v3146
    %v3182 = vpack.c.b16 %v3149, %v3148
    %v3183 = vpack.c.b16 %v3151, %v3150
    %3216 = vmatprep.subr.bf16.mxu0 0
    %3217 = vmatpush1.bf16.msra.mxu0 %v3152
    %3218 = vmatprep.subr.bf16.mxu0 0
    %3219 = vmatpush1.bf16.msra.mxu0 %v3153
    %3220 = vmatprep.subr.bf16.mxu0 0
    %3221 = vmatpush1.bf16.msra.mxu0 %v3154
    %3222 = vmatprep.subr.bf16.mxu0 0
    %3223 = vmatpush1.bf16.msra.mxu0 %v3155
    %3224 = vmatprep.subr.bf16.mxu0 0
    %3225 = vmatpush1.bf16.msra.mxu0 %v3156
    %3226 = vmatprep.subr.bf16.mxu0 0
    %3227 = vmatpush1.bf16.msra.mxu0 %v3157
    %3228 = vmatprep.subr.bf16.mxu0 0
    %3229 = vmatpush1.bf16.msra.mxu0 %v3158
    %3230 = vmatprep.subr.bf16.mxu0 0
    %3231 = vmatpush1.bf16.msra.mxu0 %v3159
    %3232 = vmatprep.subr.bf16.mxu0 0
    %3233 = vmatpush1.bf16.msra.mxu0 %v3160
    %3234 = vmatprep.subr.bf16.mxu0 0
    %3235 = vmatpush1.bf16.msra.mxu0 %v3161
    %3236 = vmatprep.subr.bf16.mxu0 0
    %3237 = vmatpush1.bf16.msra.mxu0 %v3162
    %3238 = vmatprep.subr.bf16.mxu0 0
    %3239 = vmatpush1.bf16.msra.mxu0 %v3163
    %3240 = vmatprep.subr.bf16.mxu0 0
    %3241 = vmatpush1.bf16.msra.mxu0 %v3164
    %3242 = vmatprep.subr.bf16.mxu0 0
    %3243 = vmatpush1.bf16.msra.mxu0 %v3165
    %3244 = vmatprep.subr.bf16.mxu0 0
    %3245 = vmatpush1.bf16.msra.mxu0 %v3166
    %3246 = vmatprep.subr.bf16.mxu0 0
    %3247 = vmatpush1.bf16.msra.mxu0 %v3167
    %3248 = vmatprep.mubr.bf16.mxu0 %v2952
    %3249 = vmatmul.mubr.bf16.gmra.mrb[0].mxu0 %v2951
    %v3250 = vpop.f32.mrb[0].mxu0
    %v3251 = vadd.f32 %v3023, %v3250
    %v3252 = vpop.f32.mrb[0].mxu0
    %v3253 = vpop.f32.mrb[0].mxu0
    %v3254 = vadd.f32 %v3023, %v3253
    %v3255 = vpop.f32.mrb[0].mxu0
    %3256 = vdwg.mxu0
    %3257 = vmatprep.subr.bf16.mxu0 0
    %3258 = vmatpush1.bf16.msra.mxu0 %v3168
    %3259 = vmatprep.subr.bf16.mxu0 0
    %3260 = vmatpush1.bf16.msra.mxu0 %v3169
    %3261 = vmatprep.subr.bf16.mxu0 0
    %3262 = vmatpush1.bf16.msra.mxu0 %v3170
    %3263 = vmatprep.subr.bf16.mxu0 0
    %3264 = vmatpush1.bf16.msra.mxu0 %v3171
    %3265 = vmatprep.subr.bf16.mxu0 0
    %3266 = vmatpush1.bf16.msra.mxu0 %v3172
    %3267 = vmatprep.subr.bf16.mxu0 0
    %3268 = vmatpush1.bf16.msra.mxu0 %v3173
    %3269 = vmatprep.subr.bf16.mxu0 0
    %3270 = vmatpush1.bf16.msra.mxu0 %v3174
    %3271 = vmatprep.subr.bf16.mxu0 0
    %3272 = vmatpush1.bf16.msra.mxu0 %v3175
    %3273 = vmatprep.subr.bf16.mxu0 0
    %3274 = vmatpush1.bf16.msra.mxu0 %v3176
    %3275 = vmatprep.subr.bf16.mxu0 0
    %3276 = vmatpush1.bf16.msra.mxu0 %v3177
    %3277 = vmatprep.subr.bf16.mxu0 0
    %3278 = vmatpush1.bf16.msra.mxu0 %v3178
    %3279 = vmatprep.subr.bf16.mxu0 0
    %3280 = vmatpush1.bf16.msra.mxu0 %v3179
    %3281 = vmatprep.subr.bf16.mxu0 0
    %3282 = vmatpush1.bf16.msra.mxu0 %v3180
    %3283 = vmatprep.subr.bf16.mxu0 0
    %3284 = vmatpush1.bf16.msra.mxu0 %v3181
    %3285 = vmatprep.subr.bf16.mxu0 0
    %3286 = vmatpush1.bf16.msra.mxu0 %v3182
    %3287 = vmatprep.subr.bf16.mxu0 0
    %3288 = vmatpush1.bf16.msra.mxu0 %v3183
    %3289 = vmatprep.mubr.bf16.mxu0 %v2954
    %3290 = vmatmul.mubr.bf16.gmra.mrb[0].mxu0 %v2953
    %v3291 = vpop.f32.mrb[0].mxu0
    %v3292 = vadd.f32 %v3251, %v3291
    %v3293 = vpop.f32.mrb[0].mxu0
    %v3294 = vpop.f32.mrb[0].mxu0
    %v3295 = vadd.f32 %v3254, %v3294
    %v3296 = vpop.f32.mrb[0].mxu0
    %3297 = vdwg.mxu0
    %v3298 = vadd.f32 %v2608, %v3292
    %v3299 = vadd.f32 %v2609, %v3295
    %v3300 = vld [vmem:[%s2 + $0x1] sm:$0x1]
    %v3301 = vld [vmem:[%s3 + $0x1] sm:$0x1]
    %3302 = vadd.xlane.f32.xlu0 %v3298
    %v3303 = vpop.xlane.xlu0 %3302
    %3304 = vadd.xlane.f32.xlu0 %v3299
    %v3305 = vpop.xlane.xlu0 %3304
    %v3306 = vmul.f32 %v3303, %v146
    %v3307 = vmul.f32 %v3305, %v146
    %v3308 = vsub.f32 %v3298, %v3306
    %v3309 = vsub.f32 %v3299, %v3307
    %v3310 = vmul.f32 %v3308, %v3308
    %v3311 = vmul.f32 %v3309, %v3309
    %3312 = vadd.xlane.f32.xlu0 %v3310
    %v3313 = vpop.xlane.xlu0 %3312
    %3314 = vadd.xlane.f32.xlu0 %v3311
    %v3315 = vpop.xlane.xlu0 %3314
    %v3316 = vmul.f32 %v3313, %v146
    %v3317 = vmul.f32 %v3315, %v146
    %v3318 = vadd.f32 %v3316, 1e-05
    %v3319 = vadd.f32 %v3317, 1e-05
    %v3320 = vrsqrt.pop %v3318
    %v3321 = vrsqrt.pop %v3319
    %v3322 = vmul.f32 %v3308, %v3320
    %v3323 = vmul.f32 %v3309, %v3321
    %v3324 = vlaneseq
    %v3325 = vshrl.u32 %v3324, 7
    %v3326 = vsub.s32 0, %v3325
    %v3327 = vrot.slane %v3300, %v3326
    %v3328 = vmul.f32 %v3322, %v3327
    %v3329 = vmul.f32 %v3323, %v3327
    %v3330 = vlaneseq
    %v3331 = vshrl.u32 %v3330, 7
    %v3332 = vsub.s32 0, %v3331
    %v3333 = vrot.slane %v3301, %v3332
    %v3334 = vadd.f32 %v3328, %v3333
    %v3335 = vadd.f32 %v3329, %v3333
    %v3336 = vpack.c.bf16 %v3335, %v3334
    %s3337 = scalar_lea.vmem [#allocation7], 192
    %v3338 = vld [vmem:[%s3337] sm:$0xff]
    %v3339 = vld [vmem:[%s3337 + $0x8] sm:$0xf]
    %v3340 = vld [vmem:[%s3337 + $0xc] sm:$0xff]
    %v3341 = vld [vmem:[%s3337 + $0x14] sm:$0xf]
    %v3342 = vld [vmem:[%s3337 + $0x18] sm:$0xff]
    %v3343 = vld [vmem:[%s3337 + $0x20] sm:$0xf]
    %v3344 = vld [vmem:[%s3337 + $0x24] sm:$0xff]
    %v3345 = vld [vmem:[%s3337 + $0x2c] sm:$0xf]
    %v3346 = vld [vmem:[%s3337 + $0x30] sm:$0xff]
    %v3347 = vld [vmem:[%s3337 + $0x38] sm:$0xf]
    %v3348 = vld [vmem:[%s3337 + $0x3c] sm:$0xff]
    %v3349 = vld [vmem:[%s3337 + $0x44] sm:$0xf]
    %v3350 = vld [vmem:[%s3337 + $0x48] sm:$0xff]
    %v3351 = vld [vmem:[%s3337 + $0x50] sm:$0xf]
    %v3352 = vld [vmem:[%s3337 + $0x54] sm:$0xff]
    %v3353 = vld [vmem:[%s3337 + $0x5c] sm:$0xf]
    %v3354 = vld [vmem:[%s3337 + $0x60] sm:$0xff]
    %v3355 = vld [vmem:[%s3337 + $0x68] sm:$0xf]
    %v3356 = vld [vmem:[%s3337 + $0x6c] sm:$0xff]
    %v3357 = vld [vmem:[%s3337 + $0x74] sm:$0xf]
    %v3358 = vld [vmem:[%s3337 + $0x78] sm:$0xff]
    %v3359 = vld [vmem:[%s3337 + $0x80] sm:$0xf]
    %v3360 = vld [vmem:[%s3337 + $0x84] sm:$0xff]
    %v3361 = vld [vmem:[%s3337 + $0x8c] sm:$0xf]
    %v3362 = vld [vmem:[%s3337 + $0x90] sm:$0xff]
    %v3363 = vld [vmem:[%s3337 + $0x98] sm:$0xf]
    %v3364 = vld [vmem:[%s3337 + $0x9c] sm:$0xff]
    %v3365 = vld [vmem:[%s3337 + $0xa4] sm:$0xf]
    %v3366 = vld [vmem:[%s3337 + $0xa8] sm:$0xff]
    %v3367 = vld [vmem:[%s3337 + $0xb0] sm:$0xf]
    %v3368 = vld [vmem:[%s3337 + $0xb4] sm:$0xff]
    %v3369 = vld [vmem:[%s3337 + $0xbc] sm:$0xf]
    %v3402 = vunpack.c.l.b16 %v3338
    %v3403 = vunpack.c.h.b16 %v3338
    %v3404 = vunpack.c.l.b16 %v3339
    %v3405 = vunpack.c.l.b16 %v3340
    %v3406 = vunpack.c.h.b16 %v3340
    %v3407 = vunpack.c.l.b16 %v3341
    %v3408 = vunpack.c.l.b16 %v3342
    %v3409 = vunpack.c.h.b16 %v3342
    %v3410 = vunpack.c.l.b16 %v3343
    %v3411 = vunpack.c.l.b16 %v3344
    %v3412 = vunpack.c.h.b16 %v3344
    %v3413 = vunpack.c.l.b16 %v3345
    %v3414 = vunpack.c.l.b16 %v3346
    %v3415 = vunpack.c.h.b16 %v3346
    %v3416 = vunpack.c.l.b16 %v3347
    %v3417 = vunpack.c.l.b16 %v3348
    %v3418 = vunpack.c.h.b16 %v3348
    %v3419 = vunpack.c.l.b16 %v3349
    %v3420 = vunpack.c.l.b16 %v3350
    %v3421 = vunpack.c.h.b16 %v3350
    %v3422 = vunpack.c.l.b16 %v3351
    %v3423 = vunpack.c.l.b16 %v3352
    %v3424 = vunpack.c.h.b16 %v3352
    %v3425 = vunpack.c.l.b16 %v3353
    %v3426 = vunpack.c.l.b16 %v3354
    %v3427 = vunpack.c.h.b16 %v3354
    %v3428 = vunpack.c.l.b16 %v3355
    %v3429 = vunpack.c.l.b16 %v3356
    %v3430 = vunpack.c.h.b16 %v3356
    %v3431 = vunpack.c.l.b16 %v3357
    %v3432 = vunpack.c.l.b16 %v3358
    %v3433 = vunpack.c.h.b16 %v3358
    %v3434 = vunpack.c.l.b16 %v3359
    %v3435 = vunpack.c.l.b16 %v3360
    %v3436 = vunpack.c.h.b16 %v3360
    %v3437 = vunpack.c.l.b16 %v3361
    %v3438 = vunpack.c.l.b16 %v3362
    %v3439 = vunpack.c.h.b16 %v3362
    %v3440 = vunpack.c.l.b16 %v3363
    %v3441 = vunpack.c.l.b16 %v3364
    %v3442 = vunpack.c.h.b16 %v3364
    %v3443 = vunpack.c.l.b16 %v3365
    %v3444 = vunpack.c.l.b16 %v3366
    %v3445 = vunpack.c.h.b16 %v3366
    %v3446 = vunpack.c.l.b16 %v3367
    %v3447 = vunpack.c.l.b16 %v3368
    %v3448 = vunpack.c.h.b16 %v3368
    %v3449 = vunpack.c.l.b16 %v3369
    %v3450 = vpack.c.b16 %v3405, %v3402
    %v3451 = vpack.c.b16 %v3406, %v3403
    %v3452 = vpack.c.b16 %v3407, %v3404
    %v3453 = vpack.c.b16 %v3411, %v3408
    %v3454 = vpack.c.b16 %v3412, %v3409
    %v3455 = vpack.c.b16 %v3413, %v3410
    %v3456 = vpack.c.b16 %v3417, %v3414
    %v3457 = vpack.c.b16 %v3418, %v3415
    %v3458 = vpack.c.b16 %v3419, %v3416
    %v3459 = vpack.c.b16 %v3423, %v3420
    %v3460 = vpack.c.b16 %v3424, %v3421
    %v3461 = vpack.c.b16 %v3425, %v3422
    %v3462 = vpack.c.b16 %v3429, %v3426
    %v3463 = vpack.c.b16 %v3430, %v3427
    %v3464 = vpack.c.b16 %v3431, %v3428
    %v3465 = vpack.c.b16 %v3435, %v3432
    %v3466 = vpack.c.b16 %v3436, %v3433
    %v3467 = vpack.c.b16 %v3437, %v3434
    %v3468 = vpack.c.b16 %v3441, %v3438
    %v3469 = vpack.c.b16 %v3442, %v3439
    %v3470 = vpack.c.b16 %v3443, %v3440
    %v3471 = vpack.c.b16 %v3447, %v3444
    %v3472 = vpack.c.b16 %v3448, %v3445
    %v3473 = vpack.c.b16 %v3449, %v3446
    %3498 = vmatprep.subr.bf16.mxu0 %v3451
    %3499 = vmatpush1.bf16.msra.mxu0 %v3450
    %3500 = vmatprep.subr.bf16.mxu0 %v3454
    %3501 = vmatpush1.bf16.msra.mxu0 %v3453
    %3502 = vmatprep.subr.bf16.mxu0 %v3457
    %3503 = vmatpush1.bf16.msra.mxu0 %v3456
    %3504 = vmatprep.subr.bf16.mxu0 %v3460
    %3505 = vmatpush1.bf16.msra.mxu0 %v3459
    %3506 = vmatprep.subr.bf16.mxu0 %v3463
    %3507 = vmatpush1.bf16.msra.mxu0 %v3462
    %3508 = vmatprep.subr.bf16.mxu0 %v3466
    %3509 = vmatpush1.bf16.msra.mxu0 %v3465
    %3510 = vmatprep.subr.bf16.mxu0 %v3469
    %3511 = vmatpush1.bf16.msra.mxu0 %v3468
    %3512 = vmatprep.subr.bf16.mxu0 %v3472
    %3513 = vmatpush1.bf16.msra.mxu0 %v3471
    %3514 = vmatprep.subr.bf16.mxu0 0
    %3515 = vmatpush1.bf16.msra.mxu0 0
    %3516 = vmatprep.subr.bf16.mxu0 0
    %3517 = vmatpush1.bf16.msra.mxu0 0
    %3518 = vmatprep.subr.bf16.mxu0 0
    %3519 = vmatpush1.bf16.msra.mxu0 0
    %3520 = vmatprep.subr.bf16.mxu0 0
    %3521 = vmatpush1.bf16.msra.mxu0 0
    %3522 = vmatprep.subr.bf16.mxu0 0
    %3523 = vmatpush1.bf16.msra.mxu0 0
    %3524 = vmatprep.subr.bf16.mxu0 0
    %3525 = vmatpush1.bf16.msra.mxu0 0
    %3526 = vmatprep.subr.bf16.mxu0 0
    %3527 = vmatpush1.bf16.msra.mxu0 0
    %3528 = vmatprep.subr.bf16.mxu0 0
    %3529 = vmatpush1.bf16.msra.mxu0 0
    %3530 = vmatprep.mubr.bf16.mxu0 0
    %3531 = vmatmul.mubr.bf16.gmra.mrb[0].mxu0 %v3336
    %v3532 = vpop.f32.mrb[0].mxu0
    %v3533 = vadd.f32 0.0, %v3532
    %v3534 = vpop.f32.mrb[0].mxu0
    %v3535 = vadd.f32 0.0, %v3534
    %v3536 = vpop.f32.mrb[0].mxu0
    %v3537 = vadd.f32 0.0, %v3536
    %v3538 = vpop.f32.mrb[0].mxu0
    %v3539 = vadd.f32 0.0, %v3538
    %3540 = vdwg.mxu0
    %3541 = vmatprep.subr.bf16.mxu0 0
    %3542 = vmatpush1.bf16.msra.mxu0 %v3452
    %3543 = vmatprep.subr.bf16.mxu0 0
    %3544 = vmatpush1.bf16.msra.mxu0 %v3455
    %3545 = vmatprep.subr.bf16.mxu0 0
    %3546 = vmatpush1.bf16.msra.mxu0 %v3458
    %3547 = vmatprep.subr.bf16.mxu0 0
    %3548 = vmatpush1.bf16.msra.mxu0 %v3461
    %3549 = vmatprep.subr.bf16.mxu0 0
    %3550 = vmatpush1.bf16.msra.mxu0 %v3464
    %3551 = vmatprep.subr.bf16.mxu0 0
    %3552 = vmatpush1.bf16.msra.mxu0 %v3467
    %3553 = vmatprep.subr.bf16.mxu0 0
    %3554 = vmatpush1.bf16.msra.mxu0 %v3470
    %3555 = vmatprep.subr.bf16.mxu0 0
    %3556 = vmatpush1.bf16.msra.mxu0 %v3473
    %3557 = vmatprep.subr.bf16.mxu0 0
    %3558 = vmatpush1.bf16.msra.mxu0 0
    %3559 = vmatprep.subr.bf16.mxu0 0
    %3560 = vmatpush1.bf16.msra.mxu0 0
    %3561 = vmatprep.subr.bf16.mxu0 0
    %3562 = vmatpush1.bf16.msra.mxu0 0
    %3563 = vmatprep.subr.bf16.mxu0 0
    %3564 = vmatpush1.bf16.msra.mxu0 0
    %3565 = vmatprep.subr.bf16.mxu0 0
    %3566 = vmatpush1.bf16.msra.mxu0 0
    %3567 = vmatprep.subr.bf16.mxu0 0
    %3568 = vmatpush1.bf16.msra.mxu0 0
    %3569 = vmatprep.subr.bf16.mxu0 0
    %3570 = vmatpush1.bf16.msra.mxu0 0
    %3571 = vmatprep.subr.bf16.mxu0 0
    %3572 = vmatpush1.bf16.msra.mxu0 0
    %3573 = vmatprep.mubr.bf16.mxu0 0
    %3574 = vmatmul.mubr.bf16.gmra.mrb[0].mxu0 %v3336
    %v3575 = vpop.f32.mrb[0].mxu0
    %v3576 = vadd.f32 0.0, %v3575
    %v3577 = vpop.f32.mrb[0].mxu0
    %v3578 = vpop.f32.mrb[0].mxu0
    %v3579 = vadd.f32 0.0, %v3578
    %v3580 = vpop.f32.mrb[0].mxu0
    %3581 = vdwg.mxu0
    %3584 = vrot.lane.b32.xlu0 %v3533, 96
    %v3585 = vpop.permute.xlu0 %3584
    %3586 = vrot.lane.b32.xlu0 %v3537, 96
    %v3587 = vpop.permute.xlu0 %3586
    %3590 = vrot.lane.b32.xlu0 %v3533, 64
    %v3591 = vpop.permute.xlu0 %3590
    %3592 = vrot.lane.b32.xlu0 %v3537, 64
    %v3593 = vpop.permute.xlu0 %3592
    %3596 = vrot.lane.b32.xlu0 %v3533, 32
    %v3597 = vpop.permute.xlu0 %3596
    %3598 = vrot.lane.b32.xlu0 %v3537, 32
    %v3599 = vpop.permute.xlu0 %3598
    %v3602 = vcombine.low %v3533, %v3591
    %v3603 = vcombine.high %v3533, %v3591
    %v3605 = vunpack.c.l.s4 1983009808
    %v3606 = vunpack.c.0.s8 %v3605
    %v3607 = vlaneseq
    %v3608 = vshrl.u32 %v3607, 7
    %v3609 = vsub.s32 %v3606, %v3608
    %v3610 = vrot.slane %v3602, %v3609
    %v3612 = vunpack.c.l.s4 1983009808
    %v3613 = vunpack.c.0.s8 %v3612
    %v3614 = vlaneseq
    %v3615 = vshrl.u32 %v3614, 7
    %v3616 = vsub.s32 %v3613, %v3615
    %v3617 = vrot.slane %v3603, %v3616
    %v3618 = vcombine.low %v3585, %v3597
    %v3619 = vcombine.high %v3585, %v3597
    %v3621 = vunpack.c.l.s4 1983009808
    %v3622 = vunpack.c.0.s8 %v3621
    %v3623 = vlaneseq
    %v3624 = vshrl.u32 %v3623, 7
    %v3625 = vsub.s32 %v3622, %v3624
    %v3626 = vrot.slane %v3618, %v3625
    %v3628 = vunpack.c.l.s4 1983009808
    %v3629 = vunpack.c.0.s8 %v3628
    %v3630 = vlaneseq
    %v3631 = vshrl.u32 %v3630, 7
    %v3632 = vsub.s32 %v3629, %v3631
    %v3633 = vrot.slane %v3619, %v3632
    %v3634 = vcombine.low %v3610, %v3626
    %v3635 = vcombine.high %v3610, %v3626
    %v3637 = vunpack.c.l.s4 1934713408
    %v3638 = vunpack.c.0.s8 %v3637
    %v3639 = vlaneseq
    %v3640 = vshrl.u32 %v3639, 7
    %v3641 = vsub.s32 %v3638, %v3640
    %v3642 = vrot.slane %v3634, %v3641
    %v3644 = vunpack.c.l.s4 1934713408
    %v3645 = vunpack.c.0.s8 %v3644
    %v3646 = vlaneseq
    %v3647 = vshrl.u32 %v3646, 7
    %v3648 = vsub.s32 %v3645, %v3647
    %v3649 = vrot.slane %v3635, %v3648
    %v3650 = vcombine.low %v3617, %v3633
    %v3651 = vcombine.high %v3617, %v3633
    %v3653 = vunpack.c.l.s4 1934713408
    %v3654 = vunpack.c.0.s8 %v3653
    %v3655 = vlaneseq
    %v3656 = vshrl.u32 %v3655, 7
    %v3657 = vsub.s32 %v3654, %v3656
    %v3658 = vrot.slane %v3650, %v3657
    %v3660 = vunpack.c.l.s4 1934713408
    %v3661 = vunpack.c.0.s8 %v3660
    %v3662 = vlaneseq
    %v3663 = vshrl.u32 %v3662, 7
    %v3664 = vsub.s32 %v3661, %v3663
    %v3665 = vrot.slane %v3651, %v3664
    %v3666 = vcombine.high %v3642, 0.0
    %v3667 = vcombine.high %v3649, 0.0
    %v3668 = vcombine.high %v3658, 0.0
    %v3669 = vcombine.high %v3665, 0.0
    %v3670 = vcombine.low %v3537, %v3593
    %v3671 = vcombine.high %v3537, %v3593
    %v3673 = vunpack.c.l.s4 1983009808
    %v3674 = vunpack.c.0.s8 %v3673
    %v3675 = vlaneseq
    %v3676 = vshrl.u32 %v3675, 7
    %v3677 = vsub.s32 %v3674, %v3676
    %v3678 = vrot.slane %v3670, %v3677
    %v3680 = vunpack.c.l.s4 1983009808
    %v3681 = vunpack.c.0.s8 %v3680
    %v3682 = vlaneseq
    %v3683 = vshrl.u32 %v3682, 7
    %v3684 = vsub.s32 %v3681, %v3683
    %v3685 = vrot.slane %v3671, %v3684
    %v3686 = vcombine.low %v3587, %v3599
    %v3687 = vcombine.high %v3587, %v3599
    %v3689 = vunpack.c.l.s4 1983009808
    %v3690 = vunpack.c.0.s8 %v3689
    %v3691 = vlaneseq
    %v3692 = vshrl.u32 %v3691, 7
    %v3693 = vsub.s32 %v3690, %v3692
    %v3694 = vrot.slane %v3686, %v3693
    %v3696 = vunpack.c.l.s4 1983009808
    %v3697 = vunpack.c.0.s8 %v3696
    %v3698 = vlaneseq
    %v3699 = vshrl.u32 %v3698, 7
    %v3700 = vsub.s32 %v3697, %v3699
    %v3701 = vrot.slane %v3687, %v3700
    %v3702 = vcombine.low %v3678, %v3694
    %v3703 = vcombine.high %v3678, %v3694
    %v3705 = vunpack.c.l.s4 1934713408
    %v3706 = vunpack.c.0.s8 %v3705
    %v3707 = vlaneseq
    %v3708 = vshrl.u32 %v3707, 7
    %v3709 = vsub.s32 %v3706, %v3708
    %v3710 = vrot.slane %v3702, %v3709
    %v3712 = vunpack.c.l.s4 1934713408
    %v3713 = vunpack.c.0.s8 %v3712
    %v3714 = vlaneseq
    %v3715 = vshrl.u32 %v3714, 7
    %v3716 = vsub.s32 %v3713, %v3715
    %v3717 = vrot.slane %v3703, %v3716
    %v3718 = vcombine.low %v3685, %v3701
    %v3719 = vcombine.high %v3685, %v3701
    %v3721 = vunpack.c.l.s4 1934713408
    %v3722 = vunpack.c.0.s8 %v3721
    %v3723 = vlaneseq
    %v3724 = vshrl.u32 %v3723, 7
    %v3725 = vsub.s32 %v3722, %v3724
    %v3726 = vrot.slane %v3718, %v3725
    %v3728 = vunpack.c.l.s4 1934713408
    %v3729 = vunpack.c.0.s8 %v3728
    %v3730 = vlaneseq
    %v3731 = vshrl.u32 %v3730, 7
    %v3732 = vsub.s32 %v3729, %v3731
    %v3733 = vrot.slane %v3719, %v3732
    %v3734 = vcombine.high %v3710, 0.0
    %v3735 = vcombine.high %v3717, 0.0
    %v3736 = vcombine.high %v3726, 0.0
    %v3737 = vcombine.high %v3733, 0.0
    %v3738 = vcombine.low %v3642, %v3649
    %v3740 = vunpack.c.l.s4 1983009808
    %v3741 = vunpack.c.0.s8 %v3740
    %v3742 = vlaneseq
    %v3743 = vshrl.u32 %v3742, 7
    %v3744 = vsub.s32 %v3741, %v3743
    %v3745 = vrot.slane %v3738, %v3744
    %v3746 = vcombine.low %v3666, %v3667
    %v3748 = vunpack.c.l.s4 1983009808
    %v3749 = vunpack.c.0.s8 %v3748
    %v3750 = vlaneseq
    %v3751 = vshrl.u32 %v3750, 7
    %v3752 = vsub.s32 %v3749, %v3751
    %v3753 = vrot.slane %v3746, %v3752
    %v3754 = vcombine.low %v3658, %v3665
    %v3756 = vunpack.c.l.s4 1983009808
    %v3757 = vunpack.c.0.s8 %v3756
    %v3758 = vlaneseq
    %v3759 = vshrl.u32 %v3758, 7
    %v3760 = vsub.s32 %v3757, %v3759
    %v3761 = vrot.slane %v3754, %v3760
    %v3762 = vcombine.low %v3668, %v3669
    %v3764 = vunpack.c.l.s4 1983009808
    %v3765 = vunpack.c.0.s8 %v3764
    %v3766 = vlaneseq
    %v3767 = vshrl.u32 %v3766, 7
    %v3768 = vsub.s32 %v3765, %v3767
    %v3769 = vrot.slane %v3762, %v3768
    %v3770 = vcombine.low %v3745, %v3753
    %v3771 = vcombine.high %v3745, %v3753
    %v3773 = vunpack.c.l.s4 1934713408
    %v3774 = vunpack.c.0.s8 %v3773
    %v3775 = vlaneseq
    %v3776 = vshrl.u32 %v3775, 7
    %v3777 = vsub.s32 %v3774, %v3776
    %v3778 = vrot.slane %v3770, %v3777
    %v3780 = vunpack.c.l.s4 1934713408
    %v3781 = vunpack.c.0.s8 %v3780
    %v3782 = vlaneseq
    %v3783 = vshrl.u32 %v3782, 7
    %v3784 = vsub.s32 %v3781, %v3783
    %v3785 = vrot.slane %v3771, %v3784
    %v3786 = vcombine.low %v3761, %v3769
    %v3787 = vcombine.high %v3761, %v3769
    %v3789 = vunpack.c.l.s4 1934713408
    %v3790 = vunpack.c.0.s8 %v3789
    %v3791 = vlaneseq
    %v3792 = vshrl.u32 %v3791, 7
    %v3793 = vsub.s32 %v3790, %v3792
    %v3794 = vrot.slane %v3786, %v3793
    %v3796 = vunpack.c.l.s4 1934713408
    %v3797 = vunpack.c.0.s8 %v3796
    %v3798 = vlaneseq
    %v3799 = vshrl.u32 %v3798, 7
    %v3800 = vsub.s32 %v3797, %v3799
    %v3801 = vrot.slane %v3787, %v3800
    %v3802 = vcombine.low %v3778, %v3794
    %v3803 = vcombine.high %v3778, %v3794
    %v3804 = vcombine.low %v3785, %v3801
    %v3805 = vcombine.high %v3785, %v3801
    %v3806 = vcombine.low %v3710, %v3717
    %v3808 = vunpack.c.l.s4 1983009808
    %v3809 = vunpack.c.0.s8 %v3808
    %v3810 = vlaneseq
    %v3811 = vshrl.u32 %v3810, 7
    %v3812 = vsub.s32 %v3809, %v3811
    %v3813 = vrot.slane %v3806, %v3812
    %v3814 = vcombine.low %v3734, %v3735
    %v3816 = vunpack.c.l.s4 1983009808
    %v3817 = vunpack.c.0.s8 %v3816
    %v3818 = vlaneseq
    %v3819 = vshrl.u32 %v3818, 7
    %v3820 = vsub.s32 %v3817, %v3819
    %v3821 = vrot.slane %v3814, %v3820
    %v3822 = vcombine.low %v3726, %v3733
    %v3824 = vunpack.c.l.s4 1983009808
    %v3825 = vunpack.c.0.s8 %v3824
    %v3826 = vlaneseq
    %v3827 = vshrl.u32 %v3826, 7
    %v3828 = vsub.s32 %v3825, %v3827
    %v3829 = vrot.slane %v3822, %v3828
    %v3830 = vcombine.low %v3736, %v3737
    %v3832 = vunpack.c.l.s4 1983009808
    %v3833 = vunpack.c.0.s8 %v3832
    %v3834 = vlaneseq
    %v3835 = vshrl.u32 %v3834, 7
    %v3836 = vsub.s32 %v3833, %v3835
    %v3837 = vrot.slane %v3830, %v3836
    %v3838 = vcombine.low %v3813, %v3821
    %v3839 = vcombine.high %v3813, %v3821
    %v3841 = vunpack.c.l.s4 1934713408
    %v3842 = vunpack.c.0.s8 %v3841
    %v3843 = vlaneseq
    %v3844 = vshrl.u32 %v3843, 7
    %v3845 = vsub.s32 %v3842, %v3844
    %v3846 = vrot.slane %v3838, %v3845
    %v3848 = vunpack.c.l.s4 1934713408
    %v3849 = vunpack.c.0.s8 %v3848
    %v3850 = vlaneseq
    %v3851 = vshrl.u32 %v3850, 7
    %v3852 = vsub.s32 %v3849, %v3851
    %v3853 = vrot.slane %v3839, %v3852
    %v3854 = vcombine.low %v3829, %v3837
    %v3855 = vcombine.high %v3829, %v3837
    %v3857 = vunpack.c.l.s4 1934713408
    %v3858 = vunpack.c.0.s8 %v3857
    %v3859 = vlaneseq
    %v3860 = vshrl.u32 %v3859, 7
    %v3861 = vsub.s32 %v3858, %v3860
    %v3862 = vrot.slane %v3854, %v3861
    %v3864 = vunpack.c.l.s4 1934713408
    %v3865 = vunpack.c.0.s8 %v3864
    %v3866 = vlaneseq
    %v3867 = vshrl.u32 %v3866, 7
    %v3868 = vsub.s32 %v3865, %v3867
    %v3869 = vrot.slane %v3855, %v3868
    %v3870 = vcombine.low %v3846, %v3862
    %v3871 = vcombine.high %v3846, %v3862
    %v3872 = vcombine.low %v3853, %v3869
    %v3873 = vcombine.high %v3853, %v3869
    %v3874 = vpack.c.bf16 %v3802, %v3802
    %v3875 = vpack.c.bf16 %v3803, %v3803
    %v3876 = vpack.c.bf16 %v3804, %v3804
    %v3877 = vpack.c.bf16 %v3805, %v3805
    %v3878 = vpack.c.bf16 %v3870, %v3870
    %v3879 = vpack.c.bf16 %v3871, %v3871
    %v3880 = vpack.c.bf16 %v3872, %v3872
    %v3881 = vpack.c.bf16 %v3873, %v3873
    %3884 = vrot.lane.b32.xlu0 %v3535, 96
    %v3885 = vpop.permute.xlu0 %3884
    %3886 = vrot.lane.b32.xlu0 %v3539, 96
    %v3887 = vpop.permute.xlu0 %3886
    %3890 = vrot.lane.b32.xlu0 %v3535, 64
    %v3891 = vpop.permute.xlu0 %3890
    %3892 = vrot.lane.b32.xlu0 %v3539, 64
    %v3893 = vpop.permute.xlu0 %3892
    %3896 = vrot.lane.b32.xlu0 %v3535, 32
    %v3897 = vpop.permute.xlu0 %3896
    %3898 = vrot.lane.b32.xlu0 %v3539, 32
    %v3899 = vpop.permute.xlu0 %3898
    %v3902 = vcombine.low %v3535, %v3891
    %v3903 = vcombine.high %v3535, %v3891
    %v3905 = vunpack.c.l.s4 1983009808
    %v3906 = vunpack.c.0.s8 %v3905
    %v3907 = vlaneseq
    %v3908 = vshrl.u32 %v3907, 7
    %v3909 = vsub.s32 %v3906, %v3908
    %v3910 = vrot.slane %v3902, %v3909
    %v3912 = vunpack.c.l.s4 1983009808
    %v3913 = vunpack.c.0.s8 %v3912
    %v3914 = vlaneseq
    %v3915 = vshrl.u32 %v3914, 7
    %v3916 = vsub.s32 %v3913, %v3915
    %v3917 = vrot.slane %v3903, %v3916
    %v3918 = vcombine.low %v3885, %v3897
    %v3919 = vcombine.high %v3885, %v3897
    %v3921 = vunpack.c.l.s4 1983009808
    %v3922 = vunpack.c.0.s8 %v3921
    %v3923 = vlaneseq
    %v3924 = vshrl.u32 %v3923, 7
    %v3925 = vsub.s32 %v3922, %v3924
    %v3926 = vrot.slane %v3918, %v3925
    %v3928 = vunpack.c.l.s4 1983009808
    %v3929 = vunpack.c.0.s8 %v3928
    %v3930 = vlaneseq
    %v3931 = vshrl.u32 %v3930, 7
    %v3932 = vsub.s32 %v3929, %v3931
    %v3933 = vrot.slane %v3919, %v3932
    %v3934 = vcombine.low %v3910, %v3926
    %v3935 = vcombine.high %v3910, %v3926
    %v3937 = vunpack.c.l.s4 1934713408
    %v3938 = vunpack.c.0.s8 %v3937
    %v3939 = vlaneseq
    %v3940 = vshrl.u32 %v3939, 7
    %v3941 = vsub.s32 %v3938, %v3940
    %v3942 = vrot.slane %v3934, %v3941
    %v3944 = vunpack.c.l.s4 1934713408
    %v3945 = vunpack.c.0.s8 %v3944
    %v3946 = vlaneseq
    %v3947 = vshrl.u32 %v3946, 7
    %v3948 = vsub.s32 %v3945, %v3947
    %v3949 = vrot.slane %v3935, %v3948
    %v3950 = vcombine.low %v3917, %v3933
    %v3951 = vcombine.high %v3917, %v3933
    %v3953 = vunpack.c.l.s4 1934713408
    %v3954 = vunpack.c.0.s8 %v3953
    %v3955 = vlaneseq
    %v3956 = vshrl.u32 %v3955, 7
    %v3957 = vsub.s32 %v3954, %v3956
    %v3958 = vrot.slane %v3950, %v3957
    %v3960 = vunpack.c.l.s4 1934713408
    %v3961 = vunpack.c.0.s8 %v3960
    %v3962 = vlaneseq
    %v3963 = vshrl.u32 %v3962, 7
    %v3964 = vsub.s32 %v3961, %v3963
    %v3965 = vrot.slane %v3951, %v3964
    %v3966 = vcombine.high %v3942, 0.0
    %v3967 = vcombine.high %v3949, 0.0
    %v3968 = vcombine.high %v3958, 0.0
    %v3969 = vcombine.high %v3965, 0.0
    %v3970 = vcombine.low %v3539, %v3893
    %v3971 = vcombine.high %v3539, %v3893
    %v3973 = vunpack.c.l.s4 1983009808
    %v3974 = vunpack.c.0.s8 %v3973
    %v3975 = vlaneseq
    %v3976 = vshrl.u32 %v3975, 7
    %v3977 = vsub.s32 %v3974, %v3976
    %v3978 = vrot.slane %v3970, %v3977
    %v3980 = vunpack.c.l.s4 1983009808
    %v3981 = vunpack.c.0.s8 %v3980
    %v3982 = vlaneseq
    %v3983 = vshrl.u32 %v3982, 7
    %v3984 = vsub.s32 %v3981, %v3983
    %v3985 = vrot.slane %v3971, %v3984
    %v3986 = vcombine.low %v3887, %v3899
    %v3987 = vcombine.high %v3887, %v3899
    %v3989 = vunpack.c.l.s4 1983009808
    %v3990 = vunpack.c.0.s8 %v3989
    %v3991 = vlaneseq
    %v3992 = vshrl.u32 %v3991, 7
    %v3993 = vsub.s32 %v3990, %v3992
    %v3994 = vrot.slane %v3986, %v3993
    %v3996 = vunpack.c.l.s4 1983009808
    %v3997 = vunpack.c.0.s8 %v3996
    %v3998 = vlaneseq
    %v3999 = vshrl.u32 %v3998, 7
    %v4000 = vsub.s32 %v3997, %v3999
    %v4001 = vrot.slane %v3987, %v4000
    %v4002 = vcombine.low %v3978, %v3994
    %v4003 = vcombine.high %v3978, %v3994
    %v4005 = vunpack.c.l.s4 1934713408
    %v4006 = vunpack.c.0.s8 %v4005
    %v4007 = vlaneseq
    %v4008 = vshrl.u32 %v4007, 7
    %v4009 = vsub.s32 %v4006, %v4008
    %v4010 = vrot.slane %v4002, %v4009
    %v4012 = vunpack.c.l.s4 1934713408
    %v4013 = vunpack.c.0.s8 %v4012
    %v4014 = vlaneseq
    %v4015 = vshrl.u32 %v4014, 7
    %v4016 = vsub.s32 %v4013, %v4015
    %v4017 = vrot.slane %v4003, %v4016
    %v4018 = vcombine.low %v3985, %v4001
    %v4019 = vcombine.high %v3985, %v4001
    %v4021 = vunpack.c.l.s4 1934713408
    %v4022 = vunpack.c.0.s8 %v4021
    %v4023 = vlaneseq
    %v4024 = vshrl.u32 %v4023, 7
    %v4025 = vsub.s32 %v4022, %v4024
    %v4026 = vrot.slane %v4018, %v4025
    %v4028 = vunpack.c.l.s4 1934713408
    %v4029 = vunpack.c.0.s8 %v4028
    %v4030 = vlaneseq
    %v4031 = vshrl.u32 %v4030, 7
    %v4032 = vsub.s32 %v4029, %v4031
    %v4033 = vrot.slane %v4019, %v4032
    %v4034 = vcombine.high %v4010, 0.0
    %v4035 = vcombine.high %v4017, 0.0
    %v4036 = vcombine.high %v4026, 0.0
    %v4037 = vcombine.high %v4033, 0.0
    %v4038 = vcombine.low %v3942, %v3949
    %v4040 = vunpack.c.l.s4 1983009808
    %v4041 = vunpack.c.0.s8 %v4040
    %v4042 = vlaneseq
    %v4043 = vshrl.u32 %v4042, 7
    %v4044 = vsub.s32 %v4041, %v4043
    %v4045 = vrot.slane %v4038, %v4044
    %v4046 = vcombine.low %v3966, %v3967
    %v4048 = vunpack.c.l.s4 1983009808
    %v4049 = vunpack.c.0.s8 %v4048
    %v4050 = vlaneseq
    %v4051 = vshrl.u32 %v4050, 7
    %v4052 = vsub.s32 %v4049, %v4051
    %v4053 = vrot.slane %v4046, %v4052
    %v4054 = vcombine.low %v3958, %v3965
    %v4056 = vunpack.c.l.s4 1983009808
    %v4057 = vunpack.c.0.s8 %v4056
    %v4058 = vlaneseq
    %v4059 = vshrl.u32 %v4058, 7
    %v4060 = vsub.s32 %v4057, %v4059
    %v4061 = vrot.slane %v4054, %v4060
    %v4062 = vcombine.low %v3968, %v3969
    %v4064 = vunpack.c.l.s4 1983009808
    %v4065 = vunpack.c.0.s8 %v4064
    %v4066 = vlaneseq
    %v4067 = vshrl.u32 %v4066, 7
    %v4068 = vsub.s32 %v4065, %v4067
    %v4069 = vrot.slane %v4062, %v4068
    %v4070 = vcombine.low %v4045, %v4053
    %v4071 = vcombine.high %v4045, %v4053
    %v4073 = vunpack.c.l.s4 1934713408
    %v4074 = vunpack.c.0.s8 %v4073
    %v4075 = vlaneseq
    %v4076 = vshrl.u32 %v4075, 7
    %v4077 = vsub.s32 %v4074, %v4076
    %v4078 = vrot.slane %v4070, %v4077
    %v4080 = vunpack.c.l.s4 1934713408
    %v4081 = vunpack.c.0.s8 %v4080
    %v4082 = vlaneseq
    %v4083 = vshrl.u32 %v4082, 7
    %v4084 = vsub.s32 %v4081, %v4083
    %v4085 = vrot.slane %v4071, %v4084
    %v4086 = vcombine.low %v4061, %v4069
    %v4087 = vcombine.high %v4061, %v4069
    %v4089 = vunpack.c.l.s4 1934713408
    %v4090 = vunpack.c.0.s8 %v4089
    %v4091 = vlaneseq
    %v4092 = vshrl.u32 %v4091, 7
    %v4093 = vsub.s32 %v4090, %v4092
    %v4094 = vrot.slane %v4086, %v4093
    %v4096 = vunpack.c.l.s4 1934713408
    %v4097 = vunpack.c.0.s8 %v4096
    %v4098 = vlaneseq
    %v4099 = vshrl.u32 %v4098, 7
    %v4100 = vsub.s32 %v4097, %v4099
    %v4101 = vrot.slane %v4087, %v4100
    %v4102 = vcombine.low %v4078, %v4094
    %v4103 = vcombine.high %v4078, %v4094
    %v4104 = vcombine.low %v4085, %v4101
    %v4105 = vcombine.high %v4085, %v4101
    %v4106 = vcombine.low %v4010, %v4017
    %v4108 = vunpack.c.l.s4 1983009808
    %v4109 = vunpack.c.0.s8 %v4108
    %v4110 = vlaneseq
    %v4111 = vshrl.u32 %v4110, 7
    %v4112 = vsub.s32 %v4109, %v4111
    %v4113 = vrot.slane %v4106, %v4112
    %v4114 = vcombine.low %v4034, %v4035
    %v4116 = vunpack.c.l.s4 1983009808
    %v4117 = vunpack.c.0.s8 %v4116
    %v4118 = vlaneseq
    %v4119 = vshrl.u32 %v4118, 7
    %v4120 = vsub.s32 %v4117, %v4119
    %v4121 = vrot.slane %v4114, %v4120
    %v4122 = vcombine.low %v4026, %v4033
    %v4124 = vunpack.c.l.s4 1983009808
    %v4125 = vunpack.c.0.s8 %v4124
    %v4126 = vlaneseq
    %v4127 = vshrl.u32 %v4126, 7
    %v4128 = vsub.s32 %v4125, %v4127
    %v4129 = vrot.slane %v4122, %v4128
    %v4130 = vcombine.low %v4036, %v4037
    %v4132 = vunpack.c.l.s4 1983009808
    %v4133 = vunpack.c.0.s8 %v4132
    %v4134 = vlaneseq
    %v4135 = vshrl.u32 %v4134, 7
    %v4136 = vsub.s32 %v4133, %v4135
    %v4137 = vrot.slane %v4130, %v4136
    %v4138 = vcombine.low %v4113, %v4121
    %v4139 = vcombine.high %v4113, %v4121
    %v4141 = vunpack.c.l.s4 1934713408
    %v4142 = vunpack.c.0.s8 %v4141
    %v4143 = vlaneseq
    %v4144 = vshrl.u32 %v4143, 7
    %v4145 = vsub.s32 %v4142, %v4144
    %v4146 = vrot.slane %v4138, %v4145
    %v4148 = vunpack.c.l.s4 1934713408
    %v4149 = vunpack.c.0.s8 %v4148
    %v4150 = vlaneseq
    %v4151 = vshrl.u32 %v4150, 7
    %v4152 = vsub.s32 %v4149, %v4151
    %v4153 = vrot.slane %v4139, %v4152
    %v4154 = vcombine.low %v4129, %v4137
    %v4155 = vcombine.high %v4129, %v4137
    %v4157 = vunpack.c.l.s4 1934713408
    %v4158 = vunpack.c.0.s8 %v4157
    %v4159 = vlaneseq
    %v4160 = vshrl.u32 %v4159, 7
    %v4161 = vsub.s32 %v4158, %v4160
    %v4162 = vrot.slane %v4154, %v4161
    %v4164 = vunpack.c.l.s4 1934713408
    %v4165 = vunpack.c.0.s8 %v4164
    %v4166 = vlaneseq
    %v4167 = vshrl.u32 %v4166, 7
    %v4168 = vsub.s32 %v4165, %v4167
    %v4169 = vrot.slane %v4155, %v4168
    %v4170 = vcombine.low %v4146, %v4162
    %v4171 = vcombine.high %v4146, %v4162
    %v4172 = vcombine.low %v4153, %v4169
    %v4173 = vcombine.high %v4153, %v4169
    %v4174 = vpack.c.bf16 %v4102, %v4102
    %v4175 = vpack.c.bf16 %v4103, %v4103
    %v4176 = vpack.c.bf16 %v4104, %v4104
    %v4177 = vpack.c.bf16 %v4105, %v4105
    %v4178 = vpack.c.bf16 %v4170, %v4170
    %v4179 = vpack.c.bf16 %v4171, %v4171
    %v4180 = vpack.c.bf16 %v4172, %v4172
    %v4181 = vpack.c.bf16 %v4173, %v4173
    %4184 = vrot.lane.b32.xlu0 %v3576, 96
    %v4185 = vpop.permute.xlu0 %4184
    %4186 = vrot.lane.b32.xlu0 %v3579, 96
    %v4187 = vpop.permute.xlu0 %4186
    %4190 = vrot.lane.b32.xlu0 %v3576, 64
    %v4191 = vpop.permute.xlu0 %4190
    %4192 = vrot.lane.b32.xlu0 %v3579, 64
    %v4193 = vpop.permute.xlu0 %4192
    %4196 = vrot.lane.b32.xlu0 %v3576, 32
    %v4197 = vpop.permute.xlu0 %4196
    %4198 = vrot.lane.b32.xlu0 %v3579, 32
    %v4199 = vpop.permute.xlu0 %4198
    %v4202 = vcombine.low %v3576, %v4191
    %v4203 = vcombine.high %v3576, %v4191
    %v4205 = vunpack.c.l.s4 1983009808
    %v4206 = vunpack.c.0.s8 %v4205
    %v4207 = vlaneseq
    %v4208 = vshrl.u32 %v4207, 7
    %v4209 = vsub.s32 %v4206, %v4208
    %v4210 = vrot.slane %v4202, %v4209
    %v4212 = vunpack.c.l.s4 1983009808
    %v4213 = vunpack.c.0.s8 %v4212
    %v4214 = vlaneseq
    %v4215 = vshrl.u32 %v4214, 7
    %v4216 = vsub.s32 %v4213, %v4215
    %v4217 = vrot.slane %v4203, %v4216
    %v4218 = vcombine.low %v4185, %v4197
    %v4219 = vcombine.high %v4185, %v4197
    %v4221 = vunpack.c.l.s4 1983009808
    %v4222 = vunpack.c.0.s8 %v4221
    %v4223 = vlaneseq
    %v4224 = vshrl.u32 %v4223, 7
    %v4225 = vsub.s32 %v4222, %v4224
    %v4226 = vrot.slane %v4218, %v4225
    %v4228 = vunpack.c.l.s4 1983009808
    %v4229 = vunpack.c.0.s8 %v4228
    %v4230 = vlaneseq
    %v4231 = vshrl.u32 %v4230, 7
    %v4232 = vsub.s32 %v4229, %v4231
    %v4233 = vrot.slane %v4219, %v4232
    %v4234 = vcombine.low %v4210, %v4226
    %v4235 = vcombine.high %v4210, %v4226
    %v4237 = vunpack.c.l.s4 1934713408
    %v4238 = vunpack.c.0.s8 %v4237
    %v4239 = vlaneseq
    %v4240 = vshrl.u32 %v4239, 7
    %v4241 = vsub.s32 %v4238, %v4240
    %v4242 = vrot.slane %v4234, %v4241
    %v4244 = vunpack.c.l.s4 1934713408
    %v4245 = vunpack.c.0.s8 %v4244
    %v4246 = vlaneseq
    %v4247 = vshrl.u32 %v4246, 7
    %v4248 = vsub.s32 %v4245, %v4247
    %v4249 = vrot.slane %v4235, %v4248
    %v4250 = vcombine.low %v4217, %v4233
    %v4251 = vcombine.high %v4217, %v4233
    %v4253 = vunpack.c.l.s4 1934713408
    %v4254 = vunpack.c.0.s8 %v4253
    %v4255 = vlaneseq
    %v4256 = vshrl.u32 %v4255, 7
    %v4257 = vsub.s32 %v4254, %v4256
    %v4258 = vrot.slane %v4250, %v4257
    %v4260 = vunpack.c.l.s4 1934713408
    %v4261 = vunpack.c.0.s8 %v4260
    %v4262 = vlaneseq
    %v4263 = vshrl.u32 %v4262, 7
    %v4264 = vsub.s32 %v4261, %v4263
    %v4265 = vrot.slane %v4251, %v4264
    %v4266 = vcombine.high %v4242, 0.0
    %v4267 = vcombine.high %v4249, 0.0
    %v4268 = vcombine.high %v4258, 0.0
    %v4269 = vcombine.high %v4265, 0.0
    %v4270 = vcombine.low %v3579, %v4193
    %v4271 = vcombine.high %v3579, %v4193
    %v4273 = vunpack.c.l.s4 1983009808
    %v4274 = vunpack.c.0.s8 %v4273
    %v4275 = vlaneseq
    %v4276 = vshrl.u32 %v4275, 7
    %v4277 = vsub.s32 %v4274, %v4276
    %v4278 = vrot.slane %v4270, %v4277
    %v4280 = vunpack.c.l.s4 1983009808
    %v4281 = vunpack.c.0.s8 %v4280
    %v4282 = vlaneseq
    %v4283 = vshrl.u32 %v4282, 7
    %v4284 = vsub.s32 %v4281, %v4283
    %v4285 = vrot.slane %v4271, %v4284
    %v4286 = vcombine.low %v4187, %v4199
    %v4287 = vcombine.high %v4187, %v4199
    %v4289 = vunpack.c.l.s4 1983009808
    %v4290 = vunpack.c.0.s8 %v4289
    %v4291 = vlaneseq
    %v4292 = vshrl.u32 %v4291, 7
    %v4293 = vsub.s32 %v4290, %v4292
    %v4294 = vrot.slane %v4286, %v4293
    %v4296 = vunpack.c.l.s4 1983009808
    %v4297 = vunpack.c.0.s8 %v4296
    %v4298 = vlaneseq
    %v4299 = vshrl.u32 %v4298, 7
    %v4300 = vsub.s32 %v4297, %v4299
    %v4301 = vrot.slane %v4287, %v4300
    %v4302 = vcombine.low %v4278, %v4294
    %v4303 = vcombine.high %v4278, %v4294
    %v4305 = vunpack.c.l.s4 1934713408
    %v4306 = vunpack.c.0.s8 %v4305
    %v4307 = vlaneseq
    %v4308 = vshrl.u32 %v4307, 7
    %v4309 = vsub.s32 %v4306, %v4308
    %v4310 = vrot.slane %v4302, %v4309
    %v4312 = vunpack.c.l.s4 1934713408
    %v4313 = vunpack.c.0.s8 %v4312
    %v4314 = vlaneseq
    %v4315 = vshrl.u32 %v4314, 7
    %v4316 = vsub.s32 %v4313, %v4315
    %v4317 = vrot.slane %v4303, %v4316
    %v4318 = vcombine.low %v4285, %v4301
    %v4319 = vcombine.high %v4285, %v4301
    %v4321 = vunpack.c.l.s4 1934713408
    %v4322 = vunpack.c.0.s8 %v4321
    %v4323 = vlaneseq
    %v4324 = vshrl.u32 %v4323, 7
    %v4325 = vsub.s32 %v4322, %v4324
    %v4326 = vrot.slane %v4318, %v4325
    %v4328 = vunpack.c.l.s4 1934713408
    %v4329 = vunpack.c.0.s8 %v4328
    %v4330 = vlaneseq
    %v4331 = vshrl.u32 %v4330, 7
    %v4332 = vsub.s32 %v4329, %v4331
    %v4333 = vrot.slane %v4319, %v4332
    %v4334 = vcombine.high %v4310, 0.0
    %v4335 = vcombine.high %v4317, 0.0
    %v4336 = vcombine.high %v4326, 0.0
    %v4337 = vcombine.high %v4333, 0.0
    %v4338 = vcombine.low %v4242, %v4249
    %v4340 = vunpack.c.l.s4 1983009808
    %v4341 = vunpack.c.0.s8 %v4340
    %v4342 = vlaneseq
    %v4343 = vshrl.u32 %v4342, 7
    %v4344 = vsub.s32 %v4341, %v4343
    %v4345 = vrot.slane %v4338, %v4344
    %v4346 = vcombine.low %v4266, %v4267
    %v4348 = vunpack.c.l.s4 1983009808
    %v4349 = vunpack.c.0.s8 %v4348
    %v4350 = vlaneseq
    %v4351 = vshrl.u32 %v4350, 7
    %v4352 = vsub.s32 %v4349, %v4351
    %v4353 = vrot.slane %v4346, %v4352
    %v4354 = vcombine.low %v4258, %v4265
    %v4356 = vunpack.c.l.s4 1983009808
    %v4357 = vunpack.c.0.s8 %v4356
    %v4358 = vlaneseq
    %v4359 = vshrl.u32 %v4358, 7
    %v4360 = vsub.s32 %v4357, %v4359
    %v4361 = vrot.slane %v4354, %v4360
    %v4362 = vcombine.low %v4268, %v4269
    %v4364 = vunpack.c.l.s4 1983009808
    %v4365 = vunpack.c.0.s8 %v4364
    %v4366 = vlaneseq
    %v4367 = vshrl.u32 %v4366, 7
    %v4368 = vsub.s32 %v4365, %v4367
    %v4369 = vrot.slane %v4362, %v4368
    %v4370 = vcombine.low %v4345, %v4353
    %v4371 = vcombine.high %v4345, %v4353
    %v4373 = vunpack.c.l.s4 1934713408
    %v4374 = vunpack.c.0.s8 %v4373
    %v4375 = vlaneseq
    %v4376 = vshrl.u32 %v4375, 7
    %v4377 = vsub.s32 %v4374, %v4376
    %v4378 = vrot.slane %v4370, %v4377
    %v4380 = vunpack.c.l.s4 1934713408
    %v4381 = vunpack.c.0.s8 %v4380
    %v4382 = vlaneseq
    %v4383 = vshrl.u32 %v4382, 7
    %v4384 = vsub.s32 %v4381, %v4383
    %v4385 = vrot.slane %v4371, %v4384
    %v4386 = vcombine.low %v4361, %v4369
    %v4387 = vcombine.high %v4361, %v4369
    %v4389 = vunpack.c.l.s4 1934713408
    %v4390 = vunpack.c.0.s8 %v4389
    %v4391 = vlaneseq
    %v4392 = vshrl.u32 %v4391, 7
    %v4393 = vsub.s32 %v4390, %v4392
    %v4394 = vrot.slane %v4386, %v4393
    %v4396 = vunpack.c.l.s4 1934713408
    %v4397 = vunpack.c.0.s8 %v4396
    %v4398 = vlaneseq
    %v4399 = vshrl.u32 %v4398, 7
    %v4400 = vsub.s32 %v4397, %v4399
    %v4401 = vrot.slane %v4387, %v4400
    %v4402 = vcombine.low %v4378, %v4394
    %v4403 = vcombine.high %v4378, %v4394
    %v4404 = vcombine.low %v4385, %v4401
    %v4405 = vcombine.high %v4385, %v4401
    %v4406 = vcombine.low %v4310, %v4317
    %v4408 = vunpack.c.l.s4 1983009808
    %v4409 = vunpack.c.0.s8 %v4408
    %v4410 = vlaneseq
    %v4411 = vshrl.u32 %v4410, 7
    %v4412 = vsub.s32 %v4409, %v4411
    %v4413 = vrot.slane %v4406, %v4412
    %v4414 = vcombine.low %v4334, %v4335
    %v4416 = vunpack.c.l.s4 1983009808
    %v4417 = vunpack.c.0.s8 %v4416
    %v4418 = vlaneseq
    %v4419 = vshrl.u32 %v4418, 7
    %v4420 = vsub.s32 %v4417, %v4419
    %v4421 = vrot.slane %v4414, %v4420
    %v4422 = vcombine.low %v4326, %v4333
    %v4424 = vunpack.c.l.s4 1983009808
    %v4425 = vunpack.c.0.s8 %v4424
    %v4426 = vlaneseq
    %v4427 = vshrl.u32 %v4426, 7
    %v4428 = vsub.s32 %v4425, %v4427
    %v4429 = vrot.slane %v4422, %v4428
    %v4430 = vcombine.low %v4336, %v4337
    %v4432 = vunpack.c.l.s4 1983009808
    %v4433 = vunpack.c.0.s8 %v4432
    %v4434 = vlaneseq
    %v4435 = vshrl.u32 %v4434, 7
    %v4436 = vsub.s32 %v4433, %v4435
    %v4437 = vrot.slane %v4430, %v4436
    %v4438 = vcombine.low %v4413, %v4421
    %v4439 = vcombine.high %v4413, %v4421
    %v4441 = vunpack.c.l.s4 1934713408
    %v4442 = vunpack.c.0.s8 %v4441
    %v4443 = vlaneseq
    %v4444 = vshrl.u32 %v4443, 7
    %v4445 = vsub.s32 %v4442, %v4444
    %v4446 = vrot.slane %v4438, %v4445
    %v4448 = vunpack.c.l.s4 1934713408
    %v4449 = vunpack.c.0.s8 %v4448
    %v4450 = vlaneseq
    %v4451 = vshrl.u32 %v4450, 7
    %v4452 = vsub.s32 %v4449, %v4451
    %v4453 = vrot.slane %v4439, %v4452
    %v4454 = vcombine.low %v4429, %v4437
    %v4455 = vcombine.high %v4429, %v4437
    %v4457 = vunpack.c.l.s4 1934713408
    %v4458 = vunpack.c.0.s8 %v4457
    %v4459 = vlaneseq
    %v4460 = vshrl.u32 %v4459, 7
    %v4461 = vsub.s32 %v4458, %v4460
    %v4462 = vrot.slane %v4454, %v4461
    %v4464 = vunpack.c.l.s4 1934713408
    %v4465 = vunpack.c.0.s8 %v4464
    %v4466 = vlaneseq
    %v4467 = vshrl.u32 %v4466, 7
    %v4468 = vsub.s32 %v4465, %v4467
    %v4469 = vrot.slane %v4455, %v4468
    %v4470 = vcombine.low %v4446, %v4462
    %v4471 = vcombine.high %v4446, %v4462
    %v4472 = vcombine.low %v4453, %v4469
    %v4473 = vcombine.high %v4453, %v4469
    %v4474 = vpack.c.bf16 %v4402, %v4402
    %v4475 = vpack.c.bf16 %v4403, %v4403
    %v4476 = vpack.c.bf16 %v4404, %v4404
    %v4477 = vpack.c.bf16 %v4405, %v4405
    %v4478 = vpack.c.bf16 %v4470, %v4470
    %v4479 = vpack.c.bf16 %v4471, %v4471
    %v4480 = vpack.c.bf16 %v4472, %v4472
    %v4481 = vpack.c.bf16 %v4473, %v4473
    %v4483 = vsel %vm1322, %v3874, 0
    %v4486 = vsel %vm1322, %v4174, 0
    %4488 = vmatprep.subr.bf16.mxu0 0
    %4489 = vmatpush1.bf16.xpose.msra.mxu0 %v4486
    %4490 = vmatprep.subr.bf16.mxu0 0
    %4491 = vmatpush1.bf16.xpose.msra.mxu0 0
    %4492 = vmatprep.subr.bf16.mxu0 0
    %4493 = vmatpush1.bf16.xpose.msra.mxu0 0
    %4494 = vmatprep.subr.bf16.mxu0 0
    %4495 = vmatpush1.bf16.xpose.msra.mxu0 0
    %4496 = vmatprep.subr.bf16.mxu0 0
    %4497 = vmatpush1.bf16.xpose.msra.mxu0 0
    %4498 = vmatprep.subr.bf16.mxu0 0
    %4499 = vmatpush1.bf16.xpose.msra.mxu0 0
    %4500 = vmatprep.subr.bf16.mxu0 0
    %4501 = vmatpush1.bf16.xpose.msra.mxu0 0
    %4502 = vmatprep.subr.bf16.mxu0 0
    %4503 = vmatpush1.bf16.xpose.msra.mxu0 0
    %4504 = vmatprep.subr.bf16.mxu0 0
    %4505 = vmatpush1.bf16.xpose.msra.mxu0 0
    %4506 = vmatprep.subr.bf16.mxu0 0
    %4507 = vmatpush1.bf16.xpose.msra.mxu0 0
    %4508 = vmatprep.subr.bf16.mxu0 0
    %4509 = vmatpush1.bf16.xpose.msra.mxu0 0
    %4510 = vmatprep.subr.bf16.mxu0 0
    %4511 = vmatpush1.bf16.xpose.msra.mxu0 0
    %4512 = vmatprep.subr.bf16.mxu0 0
    %4513 = vmatpush1.bf16.xpose.msra.mxu0 0
    %4514 = vmatprep.subr.bf16.mxu0 0
    %4515 = vmatpush1.bf16.xpose.msra.mxu0 0
    %4516 = vmatprep.subr.bf16.mxu0 0
    %4517 = vmatpush1.bf16.xpose.msra.mxu0 0
    %4518 = vmatprep.subr.bf16.mxu0 0
    %4519 = vmatpush1.bf16.xpose.msra.mxu0 0
    %4520 = vmatprep.mubr.bf16.mxu0 0
    %4521 = vmatmul.mubr.bf16.gmra.mrb[0].mxu0 %v4483
    %v4522 = vpop.f32.mrb[0].mxu0
    %v4523 = vadd.f32 0.0, %v4522
    %v4524 = vpop.f32.mrb[0].mxu0
    %v4525 = vpop.f32.mrb[0].mxu0
    %v4526 = vpop.f32.mrb[0].mxu0
    %4527 = vdwg.mxu0
    %v4529 = vsel %vm1322, %v3875, 0
    %v4532 = vsel %vm1322, %v4175, 0
    %4534 = vmatprep.subr.bf16.mxu0 0
    %4535 = vmatpush1.bf16.xpose.msra.mxu0 %v4532
    %4536 = vmatprep.subr.bf16.mxu0 0
    %4537 = vmatpush1.bf16.xpose.msra.mxu0 0
    %4538 = vmatprep.subr.bf16.mxu0 0
    %4539 = vmatpush1.bf16.xpose.msra.mxu0 0
    %4540 = vmatprep.subr.bf16.mxu0 0
    %4541 = vmatpush1.bf16.xpose.msra.mxu0 0
    %4542 = vmatprep.subr.bf16.mxu0 0
    %4543 = vmatpush1.bf16.xpose.msra.mxu0 0
    %4544 = vmatprep.subr.bf16.mxu0 0
    %4545 = vmatpush1.bf16.xpose.msra.mxu0 0
    %4546 = vmatprep.subr.bf16.mxu0 0
    %4547 = vmatpush1.bf16.xpose.msra.mxu0 0
    %4548 = vmatprep.subr.bf16.mxu0 0
    %4549 = vmatpush1.bf16.xpose.msra.mxu0 0
    %4550 = vmatprep.subr.bf16.mxu0 0
    %4551 = vmatpush1.bf16.xpose.msra.mxu0 0
    %4552 = vmatprep.subr.bf16.mxu0 0
    %4553 = vmatpush1.bf16.xpose.msra.mxu0 0
    %4554 = vmatprep.subr.bf16.mxu0 0
    %4555 = vmatpush1.bf16.xpose.msra.mxu0 0
    %4556 = vmatprep.subr.bf16.mxu0 0
    %4557 = vmatpush1.bf16.xpose.msra.mxu0 0
    %4558 = vmatprep.subr.bf16.mxu0 0
    %4559 = vmatpush1.bf16.xpose.msra.mxu0 0
    %4560 = vmatprep.subr.bf16.mxu0 0
    %4561 = vmatpush1.bf16.xpose.msra.mxu0 0
    %4562 = vmatprep.subr.bf16.mxu0 0
    %4563 = vmatpush1.bf16.xpose.msra.mxu0 0
    %4564 = vmatprep.subr.bf16.mxu0 0
    %4565 = vmatpush1.bf16.xpose.msra.mxu0 0
    %4566 = vmatprep.mubr.bf16.mxu0 0
    %4567 = vmatmul.mubr.bf16.gmra.mrb[0].mxu0 %v4529
    %v4568 = vpop.f32.mrb[0].mxu0
    %v4569 = vadd.f32 0.0, %v4568
    %v4570 = vpop.f32.mrb[0].mxu0
    %v4571 = vpop.f32.mrb[0].mxu0
    %v4572 = vpop.f32.mrb[0].mxu0
    %4573 = vdwg.mxu0
    %v4575 = vsel %vm1322, %v3876, 0
    %v4578 = vsel %vm1322, %v4176, 0
    %4580 = vmatprep.subr.bf16.mxu0 0
    %4581 = vmatpush1.bf16.xpose.msra.mxu0 %v4578
    %4582 = vmatprep.subr.bf16.mxu0 0
    %4583 = vmatpush1.bf16.xpose.msra.mxu0 0
    %4584 = vmatprep.subr.bf16.mxu0 0
    %4585 = vmatpush1.bf16.xpose.msra.mxu0 0
    %4586 = vmatprep.subr.bf16.mxu0 0
    %4587 = vmatpush1.bf16.xpose.msra.mxu0 0
    %4588 = vmatprep.subr.bf16.mxu0 0
    %4589 = vmatpush1.bf16.xpose.msra.mxu0 0
    %4590 = vmatprep.subr.bf16.mxu0 0
    %4591 = vmatpush1.bf16.xpose.msra.mxu0 0
    %4592 = vmatprep.subr.bf16.mxu0 0
    %4593 = vmatpush1.bf16.xpose.msra.mxu0 0
    %4594 = vmatprep.subr.bf16.mxu0 0
    %4595 = vmatpush1.bf16.xpose.msra.mxu0 0
    %4596 = vmatprep.subr.bf16.mxu0 0
    %4597 = vmatpush1.bf16.xpose.msra.mxu0 0
    %4598 = vmatprep.subr.bf16.mxu0 0
    %4599 = vmatpush1.bf16.xpose.msra.mxu0 0
    %4600 = vmatprep.subr.bf16.mxu0 0
    %4601 = vmatpush1.bf16.xpose.msra.mxu0 0
    %4602 = vmatprep.subr.bf16.mxu0 0
    %4603 = vmatpush1.bf16.xpose.msra.mxu0 0
    %4604 = vmatprep.subr.bf16.mxu0 0
    %4605 = vmatpush1.bf16.xpose.msra.mxu0 0
    %4606 = vmatprep.subr.bf16.mxu0 0
    %4607 = vmatpush1.bf16.xpose.msra.mxu0 0
    %4608 = vmatprep.subr.bf16.mxu0 0
    %4609 = vmatpush1.bf16.xpose.msra.mxu0 0
    %4610 = vmatprep.subr.bf16.mxu0 0
    %4611 = vmatpush1.bf16.xpose.msra.mxu0 0
    %4612 = vmatprep.mubr.bf16.mxu0 0
    %4613 = vmatmul.mubr.bf16.gmra.mrb[0].mxu0 %v4575
    %v4614 = vpop.f32.mrb[0].mxu0
    %v4615 = vadd.f32 0.0, %v4614
    %v4616 = vpop.f32.mrb[0].mxu0
    %v4617 = vpop.f32.mrb[0].mxu0
    %v4618 = vpop.f32.mrb[0].mxu0
    %4619 = vdwg.mxu0
    %v4621 = vsel %vm1322, %v3877, 0
    %v4624 = vsel %vm1322, %v4177, 0
    %4626 = vmatprep.subr.bf16.mxu0 0
    %4627 = vmatpush1.bf16.xpose.msra.mxu0 %v4624
    %4628 = vmatprep.subr.bf16.mxu0 0
    %4629 = vmatpush1.bf16.xpose.msra.mxu0 0
    %4630 = vmatprep.subr.bf16.mxu0 0
    %4631 = vmatpush1.bf16.xpose.msra.mxu0 0
    %4632 = vmatprep.subr.bf16.mxu0 0
    %4633 = vmatpush1.bf16.xpose.msra.mxu0 0
    %4634 = vmatprep.subr.bf16.mxu0 0
    %4635 = vmatpush1.bf16.xpose.msra.mxu0 0
    %4636 = vmatprep.subr.bf16.mxu0 0
    %4637 = vmatpush1.bf16.xpose.msra.mxu0 0
    %4638 = vmatprep.subr.bf16.mxu0 0
    %4639 = vmatpush1.bf16.xpose.msra.mxu0 0
    %4640 = vmatprep.subr.bf16.mxu0 0
    %4641 = vmatpush1.bf16.xpose.msra.mxu0 0
    %4642 = vmatprep.subr.bf16.mxu0 0
    %4643 = vmatpush1.bf16.xpose.msra.mxu0 0
    %4644 = vmatprep.subr.bf16.mxu0 0
    %4645 = vmatpush1.bf16.xpose.msra.mxu0 0
    %4646 = vmatprep.subr.bf16.mxu0 0
    %4647 = vmatpush1.bf16.xpose.msra.mxu0 0
    %4648 = vmatprep.subr.bf16.mxu0 0
    %4649 = vmatpush1.bf16.xpose.msra.mxu0 0
    %4650 = vmatprep.subr.bf16.mxu0 0
    %4651 = vmatpush1.bf16.xpose.msra.mxu0 0
    %4652 = vmatprep.subr.bf16.mxu0 0
    %4653 = vmatpush1.bf16.xpose.msra.mxu0 0
    %4654 = vmatprep.subr.bf16.mxu0 0
    %4655 = vmatpush1.bf16.xpose.msra.mxu0 0
    %4656 = vmatprep.subr.bf16.mxu0 0
    %4657 = vmatpush1.bf16.xpose.msra.mxu0 0
    %4658 = vmatprep.mubr.bf16.mxu0 0
    %4659 = vmatmul.mubr.bf16.gmra.mrb[0].mxu0 %v4621
    %v4660 = vpop.f32.mrb[0].mxu0
    %v4661 = vadd.f32 0.0, %v4660
    %v4662 = vpop.f32.mrb[0].mxu0
    %v4663 = vpop.f32.mrb[0].mxu0
    %v4664 = vpop.f32.mrb[0].mxu0
    %4665 = vdwg.mxu0
    %v4667 = vsel %vm1322, %v3878, 0
    %v4670 = vsel %vm1322, %v4178, 0
    %4672 = vmatprep.subr.bf16.mxu0 0
    %4673 = vmatpush1.bf16.xpose.msra.mxu0 %v4670
    %4674 = vmatprep.subr.bf16.mxu0 0
    %4675 = vmatpush1.bf16.xpose.msra.mxu0 0
    %4676 = vmatprep.subr.bf16.mxu0 0
    %4677 = vmatpush1.bf16.xpose.msra.mxu0 0
    %4678 = vmatprep.subr.bf16.mxu0 0
    %4679 = vmatpush1.bf16.xpose.msra.mxu0 0
    %4680 = vmatprep.subr.bf16.mxu0 0
    %4681 = vmatpush1.bf16.xpose.msra.mxu0 0
    %4682 = vmatprep.subr.bf16.mxu0 0
    %4683 = vmatpush1.bf16.xpose.msra.mxu0 0
    %4684 = vmatprep.subr.bf16.mxu0 0
    %4685 = vmatpush1.bf16.xpose.msra.mxu0 0
    %4686 = vmatprep.subr.bf16.mxu0 0
    %4687 = vmatpush1.bf16.xpose.msra.mxu0 0
    %4688 = vmatprep.subr.bf16.mxu0 0
    %4689 = vmatpush1.bf16.xpose.msra.mxu0 0
    %4690 = vmatprep.subr.bf16.mxu0 0
    %4691 = vmatpush1.bf16.xpose.msra.mxu0 0
    %4692 = vmatprep.subr.bf16.mxu0 0
    %4693 = vmatpush1.bf16.xpose.msra.mxu0 0
    %4694 = vmatprep.subr.bf16.mxu0 0
    %4695 = vmatpush1.bf16.xpose.msra.mxu0 0
    %4696 = vmatprep.subr.bf16.mxu0 0
    %4697 = vmatpush1.bf16.xpose.msra.mxu0 0
    %4698 = vmatprep.subr.bf16.mxu0 0
    %4699 = vmatpush1.bf16.xpose.msra.mxu0 0
    %4700 = vmatprep.subr.bf16.mxu0 0
    %4701 = vmatpush1.bf16.xpose.msra.mxu0 0
    %4702 = vmatprep.subr.bf16.mxu0 0
    %4703 = vmatpush1.bf16.xpose.msra.mxu0 0
    %4704 = vmatprep.mubr.bf16.mxu0 0
    %4705 = vmatmul.mubr.bf16.gmra.mrb[0].mxu0 %v4667
    %v4706 = vpop.f32.mrb[0].mxu0
    %v4707 = vadd.f32 0.0, %v4706
    %v4708 = vpop.f32.mrb[0].mxu0
    %v4709 = vpop.f32.mrb[0].mxu0
    %v4710 = vpop.f32.mrb[0].mxu0
    %4711 = vdwg.mxu0
    %v4713 = vsel %vm1322, %v3879, 0
    %v4716 = vsel %vm1322, %v4179, 0
    %4718 = vmatprep.subr.bf16.mxu0 0
    %4719 = vmatpush1.bf16.xpose.msra.mxu0 %v4716
    %4720 = vmatprep.subr.bf16.mxu0 0
    %4721 = vmatpush1.bf16.xpose.msra.mxu0 0
    %4722 = vmatprep.subr.bf16.mxu0 0
    %4723 = vmatpush1.bf16.xpose.msra.mxu0 0
    %4724 = vmatprep.subr.bf16.mxu0 0
    %4725 = vmatpush1.bf16.xpose.msra.mxu0 0
    %4726 = vmatprep.subr.bf16.mxu0 0
    %4727 = vmatpush1.bf16.xpose.msra.mxu0 0
    %4728 = vmatprep.subr.bf16.mxu0 0
    %4729 = vmatpush1.bf16.xpose.msra.mxu0 0
    %4730 = vmatprep.subr.bf16.mxu0 0
    %4731 = vmatpush1.bf16.xpose.msra.mxu0 0
    %4732 = vmatprep.subr.bf16.mxu0 0
    %4733 = vmatpush1.bf16.xpose.msra.mxu0 0
    %4734 = vmatprep.subr.bf16.mxu0 0
    %4735 = vmatpush1.bf16.xpose.msra.mxu0 0
    %4736 = vmatprep.subr.bf16.mxu0 0
    %4737 = vmatpush1.bf16.xpose.msra.mxu0 0
    %4738 = vmatprep.subr.bf16.mxu0 0
    %4739 = vmatpush1.bf16.xpose.msra.mxu0 0
    %4740 = vmatprep.subr.bf16.mxu0 0
    %4741 = vmatpush1.bf16.xpose.msra.mxu0 0
    %4742 = vmatprep.subr.bf16.mxu0 0
    %4743 = vmatpush1.bf16.xpose.msra.mxu0 0
    %4744 = vmatprep.subr.bf16.mxu0 0
    %4745 = vmatpush1.bf16.xpose.msra.mxu0 0
    %4746 = vmatprep.subr.bf16.mxu0 0
    %4747 = vmatpush1.bf16.xpose.msra.mxu0 0
    %4748 = vmatprep.subr.bf16.mxu0 0
    %4749 = vmatpush1.bf16.xpose.msra.mxu0 0
    %4750 = vmatprep.mubr.bf16.mxu0 0
    %4751 = vmatmul.mubr.bf16.gmra.mrb[0].mxu0 %v4713
    %v4752 = vpop.f32.mrb[0].mxu0
    %v4753 = vadd.f32 0.0, %v4752
    %v4754 = vpop.f32.mrb[0].mxu0
    %v4755 = vpop.f32.mrb[0].mxu0
    %v4756 = vpop.f32.mrb[0].mxu0
    %4757 = vdwg.mxu0
    %v4759 = vsel %vm1322, %v3880, 0
    %v4762 = vsel %vm1322, %v4180, 0
    %4764 = vmatprep.subr.bf16.mxu0 0
    %4765 = vmatpush1.bf16.xpose.msra.mxu0 %v4762
    %4766 = vmatprep.subr.bf16.mxu0 0
    %4767 = vmatpush1.bf16.xpose.msra.mxu0 0
    %4768 = vmatprep.subr.bf16.mxu0 0
    %4769 = vmatpush1.bf16.xpose.msra.mxu0 0
    %4770 = vmatprep.subr.bf16.mxu0 0
    %4771 = vmatpush1.bf16.xpose.msra.mxu0 0
    %4772 = vmatprep.subr.bf16.mxu0 0
    %4773 = vmatpush1.bf16.xpose.msra.mxu0 0
    %4774 = vmatprep.subr.bf16.mxu0 0
    %4775 = vmatpush1.bf16.xpose.msra.mxu0 0
    %4776 = vmatprep.subr.bf16.mxu0 0
    %4777 = vmatpush1.bf16.xpose.msra.mxu0 0
    %4778 = vmatprep.subr.bf16.mxu0 0
    %4779 = vmatpush1.bf16.xpose.msra.mxu0 0
    %4780 = vmatprep.subr.bf16.mxu0 0
    %4781 = vmatpush1.bf16.xpose.msra.mxu0 0
    %4782 = vmatprep.subr.bf16.mxu0 0
    %4783 = vmatpush1.bf16.xpose.msra.mxu0 0
    %4784 = vmatprep.subr.bf16.mxu0 0
    %4785 = vmatpush1.bf16.xpose.msra.mxu0 0
    %4786 = vmatprep.subr.bf16.mxu0 0
    %4787 = vmatpush1.bf16.xpose.msra.mxu0 0
    %4788 = vmatprep.subr.bf16.mxu0 0
    %4789 = vmatpush1.bf16.xpose.msra.mxu0 0
    %4790 = vmatprep.subr.bf16.mxu0 0
    %4791 = vmatpush1.bf16.xpose.msra.mxu0 0
    %4792 = vmatprep.subr.bf16.mxu0 0
    %4793 = vmatpush1.bf16.xpose.msra.mxu0 0
    %4794 = vmatprep.subr.bf16.mxu0 0
    %4795 = vmatpush1.bf16.xpose.msra.mxu0 0
    %4796 = vmatprep.mubr.bf16.mxu0 0
    %4797 = vmatmul.mubr.bf16.gmra.mrb[0].mxu0 %v4759
    %v4798 = vpop.f32.mrb[0].mxu0
    %v4799 = vadd.f32 0.0, %v4798
    %v4800 = vpop.f32.mrb[0].mxu0
    %v4801 = vpop.f32.mrb[0].mxu0
    %v4802 = vpop.f32.mrb[0].mxu0
    %4803 = vdwg.mxu0
    %v4805 = vsel %vm1322, %v3881, 0
    %v4808 = vsel %vm1322, %v4181, 0
    %4810 = vmatprep.subr.bf16.mxu0 0
    %4811 = vmatpush1.bf16.xpose.msra.mxu0 %v4808
    %4812 = vmatprep.subr.bf16.mxu0 0
    %4813 = vmatpush1.bf16.xpose.msra.mxu0 0
    %4814 = vmatprep.subr.bf16.mxu0 0
    %4815 = vmatpush1.bf16.xpose.msra.mxu0 0
    %4816 = vmatprep.subr.bf16.mxu0 0
    %4817 = vmatpush1.bf16.xpose.msra.mxu0 0
    %4818 = vmatprep.subr.bf16.mxu0 0
    %4819 = vmatpush1.bf16.xpose.msra.mxu0 0
    %4820 = vmatprep.subr.bf16.mxu0 0
    %4821 = vmatpush1.bf16.xpose.msra.mxu0 0
    %4822 = vmatprep.subr.bf16.mxu0 0
    %4823 = vmatpush1.bf16.xpose.msra.mxu0 0
    %4824 = vmatprep.subr.bf16.mxu0 0
    %4825 = vmatpush1.bf16.xpose.msra.mxu0 0
    %4826 = vmatprep.subr.bf16.mxu0 0
    %4827 = vmatpush1.bf16.xpose.msra.mxu0 0
    %4828 = vmatprep.subr.bf16.mxu0 0
    %4829 = vmatpush1.bf16.xpose.msra.mxu0 0
    %4830 = vmatprep.subr.bf16.mxu0 0
    %4831 = vmatpush1.bf16.xpose.msra.mxu0 0
    %4832 = vmatprep.subr.bf16.mxu0 0
    %4833 = vmatpush1.bf16.xpose.msra.mxu0 0
    %4834 = vmatprep.subr.bf16.mxu0 0
    %4835 = vmatpush1.bf16.xpose.msra.mxu0 0
    %4836 = vmatprep.subr.bf16.mxu0 0
    %4837 = vmatpush1.bf16.xpose.msra.mxu0 0
    %4838 = vmatprep.subr.bf16.mxu0 0
    %4839 = vmatpush1.bf16.xpose.msra.mxu0 0
    %4840 = vmatprep.subr.bf16.mxu0 0
    %4841 = vmatpush1.bf16.xpose.msra.mxu0 0
    %4842 = vmatprep.mubr.bf16.mxu0 0
    %4843 = vmatmul.mubr.bf16.gmra.mrb[0].mxu0 %v4805
    %v4844 = vpop.f32.mrb[0].mxu0
    %v4845 = vadd.f32 0.0, %v4844
    %v4846 = vpop.f32.mrb[0].mxu0
    %v4847 = vpop.f32.mrb[0].mxu0
    %v4848 = vpop.f32.mrb[0].mxu0
    %4849 = vdwg.mxu0
    %v4850 = vsel %vm1691, %v4523, -inf
    %4851 = vmax.xlane.f32.xlu0 %v4850
    %v4852 = vpop.xlane.xlu0 %4851
    %v4853 = vsel %vm1691, %v4569, -inf
    %4854 = vmax.xlane.f32.xlu0 %v4853
    %v4855 = vpop.xlane.xlu0 %4854
    %v4856 = vsel %vm1691, %v4615, -inf
    %4857 = vmax.xlane.f32.xlu0 %v4856
    %v4858 = vpop.xlane.xlu0 %4857
    %v4859 = vsel %vm1691, %v4661, -inf
    %4860 = vmax.xlane.f32.xlu0 %v4859
    %v4861 = vpop.xlane.xlu0 %4860
    %v4862 = vsel %vm1691, %v4707, -inf
    %4863 = vmax.xlane.f32.xlu0 %v4862
    %v4864 = vpop.xlane.xlu0 %4863
    %v4865 = vsel %vm1691, %v4753, -inf
    %4866 = vmax.xlane.f32.xlu0 %v4865
    %v4867 = vpop.xlane.xlu0 %4866
    %v4868 = vsel %vm1691, %v4799, -inf
    %4869 = vmax.xlane.f32.xlu0 %v4868
    %v4870 = vpop.xlane.xlu0 %4869
    %v4871 = vsel %vm1691, %v4845, -inf
    %4872 = vmax.xlane.f32.xlu0 %v4871
    %v4873 = vpop.xlane.xlu0 %4872
    %v4874 = vsub.f32 %v4523, %v4852
    %v4875 = vsub.f32 %v4569, %v4855
    %v4876 = vsub.f32 %v4615, %v4858
    %v4877 = vsub.f32 %v4661, %v4861
    %v4878 = vsub.f32 %v4707, %v4864
    %v4879 = vsub.f32 %v4753, %v4867
    %v4880 = vsub.f32 %v4799, %v4870
    %v4881 = vsub.f32 %v4845, %v4873
    %v4882 = vmul.f32 %v4874, 1.442695
    %v4883 = vpow.pop %v4882
    %v4884 = vmul.f32 %v4875, 1.442695
    %v4885 = vpow.pop %v4884
    %v4886 = vmul.f32 %v4876, 1.442695
    %v4887 = vpow.pop %v4886
    %v4888 = vmul.f32 %v4877, 1.442695
    %v4889 = vpow.pop %v4888
    %v4890 = vmul.f32 %v4878, 1.442695
    %v4891 = vpow.pop %v4890
    %v4892 = vmul.f32 %v4879, 1.442695
    %v4893 = vpow.pop %v4892
    %v4894 = vmul.f32 %v4880, 1.442695
    %v4895 = vpow.pop %v4894
    %v4896 = vmul.f32 %v4881, 1.442695
    %v4897 = vpow.pop %v4896
    %v4898 = vsel %vm1691, %v4883, 0.0
    %4899 = vadd.xlane.f32.xlu0 %v4898
    %v4900 = vpop.xlane.xlu0 %4899
    %v4901 = vsel %vm1691, %v4885, 0.0
    %4902 = vadd.xlane.f32.xlu0 %v4901
    %v4903 = vpop.xlane.xlu0 %4902
    %v4904 = vsel %vm1691, %v4887, 0.0
    %4905 = vadd.xlane.f32.xlu0 %v4904
    %v4906 = vpop.xlane.xlu0 %4905
    %v4907 = vsel %vm1691, %v4889, 0.0
    %4908 = vadd.xlane.f32.xlu0 %v4907
    %v4909 = vpop.xlane.xlu0 %4908
    %v4910 = vsel %vm1691, %v4891, 0.0
    %4911 = vadd.xlane.f32.xlu0 %v4910
    %v4912 = vpop.xlane.xlu0 %4911
    %v4913 = vsel %vm1691, %v4893, 0.0
    %4914 = vadd.xlane.f32.xlu0 %v4913
    %v4915 = vpop.xlane.xlu0 %4914
    %v4916 = vsel %vm1691, %v4895, 0.0
    %4917 = vadd.xlane.f32.xlu0 %v4916
    %v4918 = vpop.xlane.xlu0 %4917
    %v4919 = vsel %vm1691, %v4897, 0.0
    %4920 = vadd.xlane.f32.xlu0 %v4919
    %v4921 = vpop.xlane.xlu0 %4920
    %v4922 = vrcp.pop %v4900
    %v4923 = vmul.f32 %v4883, %v4922
    %v4924 = vrcp.pop %v4903
    %v4925 = vmul.f32 %v4885, %v4924
    %v4926 = vrcp.pop %v4906
    %v4927 = vmul.f32 %v4887, %v4926
    %v4928 = vrcp.pop %v4909
    %v4929 = vmul.f32 %v4889, %v4928
    %v4930 = vrcp.pop %v4912
    %v4931 = vmul.f32 %v4891, %v4930
    %v4932 = vrcp.pop %v4915
    %v4933 = vmul.f32 %v4893, %v4932
    %v4934 = vrcp.pop %v4918
    %v4935 = vmul.f32 %v4895, %v4934
    %v4936 = vrcp.pop %v4921
    %v4937 = vmul.f32 %v4897, %v4936
    %v4938 = vpack.c.bf16 %v4923, %v4923
    %v4939 = vpack.c.bf16 %v4925, %v4925
    %v4940 = vpack.c.bf16 %v4927, %v4927
    %v4941 = vpack.c.bf16 %v4929, %v4929
    %v4942 = vpack.c.bf16 %v4931, %v4931
    %v4943 = vpack.c.bf16 %v4933, %v4933
    %v4944 = vpack.c.bf16 %v4935, %v4935
    %v4945 = vpack.c.bf16 %v4937, %v4937
    %v4947 = vsel %vm1691, %v4938, 0
    %v4950 = vsel %vm1791, %v4474, 0
    %4952 = vmatprep.subr.bf16.mxu0 0
    %4953 = vmatpush1.bf16.msra.mxu0 %v4950
    %4954 = vmatprep.subr.bf16.mxu0 0
    %4955 = vmatpush1.bf16.msra.mxu0 0
    %4956 = vmatprep.subr.bf16.mxu0 0
    %4957 = vmatpush1.bf16.msra.mxu0 0
    %4958 = vmatprep.subr.bf16.mxu0 0
    %4959 = vmatpush1.bf16.msra.mxu0 0
    %4960 = vmatprep.subr.bf16.mxu0 0
    %4961 = vmatpush1.bf16.msra.mxu0 0
    %4962 = vmatprep.subr.bf16.mxu0 0
    %4963 = vmatpush1.bf16.msra.mxu0 0
    %4964 = vmatprep.subr.bf16.mxu0 0
    %4965 = vmatpush1.bf16.msra.mxu0 0
    %4966 = vmatprep.subr.bf16.mxu0 0
    %4967 = vmatpush1.bf16.msra.mxu0 0
    %4968 = vmatprep.subr.bf16.mxu0 0
    %4969 = vmatpush1.bf16.msra.mxu0 0
    %4970 = vmatprep.subr.bf16.mxu0 0
    %4971 = vmatpush1.bf16.msra.mxu0 0
    %4972 = vmatprep.subr.bf16.mxu0 0
    %4973 = vmatpush1.bf16.msra.mxu0 0
    %4974 = vmatprep.subr.bf16.mxu0 0
    %4975 = vmatpush1.bf16.msra.mxu0 0
    %4976 = vmatprep.subr.bf16.mxu0 0
    %4977 = vmatpush1.bf16.msra.mxu0 0
    %4978 = vmatprep.subr.bf16.mxu0 0
    %4979 = vmatpush1.bf16.msra.mxu0 0
    %4980 = vmatprep.subr.bf16.mxu0 0
    %4981 = vmatpush1.bf16.msra.mxu0 0
    %4982 = vmatprep.subr.bf16.mxu0 0
    %4983 = vmatpush1.bf16.msra.mxu0 0
    %4984 = vmatprep.mubr.bf16.mxu0 0
    %4985 = vmatmul.mubr.bf16.gmra.mrb[0].mxu0 %v4947
    %v4986 = vpop.f32.mrb[0].mxu0
    %v4987 = vadd.f32 0.0, %v4986
    %v4988 = vpop.f32.mrb[0].mxu0
    %v4989 = vpop.f32.mrb[0].mxu0
    %v4990 = vpop.f32.mrb[0].mxu0
    %4991 = vdwg.mxu0
    %v4993 = vsel %vm1691, %v4939, 0
    %v4996 = vsel %vm1791, %v4475, 0
    %4998 = vmatprep.subr.bf16.mxu0 0
    %4999 = vmatpush1.bf16.msra.mxu0 %v4996
    %5000 = vmatprep.subr.bf16.mxu0 0
    %5001 = vmatpush1.bf16.msra.mxu0 0
    %5002 = vmatprep.subr.bf16.mxu0 0
    %5003 = vmatpush1.bf16.msra.mxu0 0
    %5004 = vmatprep.subr.bf16.mxu0 0
    %5005 = vmatpush1.bf16.msra.mxu0 0
    %5006 = vmatprep.subr.bf16.mxu0 0
    %5007 = vmatpush1.bf16.msra.mxu0 0
    %5008 = vmatprep.subr.bf16.mxu0 0
    %5009 = vmatpush1.bf16.msra.mxu0 0
    %5010 = vmatprep.subr.bf16.mxu0 0
    %5011 = vmatpush1.bf16.msra.mxu0 0
    %5012 = vmatprep.subr.bf16.mxu0 0
    %5013 = vmatpush1.bf16.msra.mxu0 0
    %5014 = vmatprep.subr.bf16.mxu0 0
    %5015 = vmatpush1.bf16.msra.mxu0 0
    %5016 = vmatprep.subr.bf16.mxu0 0
    %5017 = vmatpush1.bf16.msra.mxu0 0
    %5018 = vmatprep.subr.bf16.mxu0 0
    %5019 = vmatpush1.bf16.msra.mxu0 0
    %5020 = vmatprep.subr.bf16.mxu0 0
    %5021 = vmatpush1.bf16.msra.mxu0 0
    %5022 = vmatprep.subr.bf16.mxu0 0
    %5023 = vmatpush1.bf16.msra.mxu0 0
    %5024 = vmatprep.subr.bf16.mxu0 0
    %5025 = vmatpush1.bf16.msra.mxu0 0
    %5026 = vmatprep.subr.bf16.mxu0 0
    %5027 = vmatpush1.bf16.msra.mxu0 0
    %5028 = vmatprep.subr.bf16.mxu0 0
    %5029 = vmatpush1.bf16.msra.mxu0 0
    %5030 = vmatprep.mubr.bf16.mxu0 0
    %5031 = vmatmul.mubr.bf16.gmra.mrb[0].mxu0 %v4993
    %v5032 = vpop.f32.mrb[0].mxu0
    %v5033 = vadd.f32 0.0, %v5032
    %v5034 = vpop.f32.mrb[0].mxu0
    %v5035 = vpop.f32.mrb[0].mxu0
    %v5036 = vpop.f32.mrb[0].mxu0
    %5037 = vdwg.mxu0
    %v5039 = vsel %vm1691, %v4940, 0
    %v5042 = vsel %vm1791, %v4476, 0
    %5044 = vmatprep.subr.bf16.mxu0 0
    %5045 = vmatpush1.bf16.msra.mxu0 %v5042
    %5046 = vmatprep.subr.bf16.mxu0 0
    %5047 = vmatpush1.bf16.msra.mxu0 0
    %5048 = vmatprep.subr.bf16.mxu0 0
    %5049 = vmatpush1.bf16.msra.mxu0 0
    %5050 = vmatprep.subr.bf16.mxu0 0
    %5051 = vmatpush1.bf16.msra.mxu0 0
    %5052 = vmatprep.subr.bf16.mxu0 0
    %5053 = vmatpush1.bf16.msra.mxu0 0
    %5054 = vmatprep.subr.bf16.mxu0 0
    %5055 = vmatpush1.bf16.msra.mxu0 0
    %5056 = vmatprep.subr.bf16.mxu0 0
    %5057 = vmatpush1.bf16.msra.mxu0 0
    %5058 = vmatprep.subr.bf16.mxu0 0
    %5059 = vmatpush1.bf16.msra.mxu0 0
    %5060 = vmatprep.subr.bf16.mxu0 0
    %5061 = vmatpush1.bf16.msra.mxu0 0
    %5062 = vmatprep.subr.bf16.mxu0 0
    %5063 = vmatpush1.bf16.msra.mxu0 0
    %5064 = vmatprep.subr.bf16.mxu0 0
    %5065 = vmatpush1.bf16.msra.mxu0 0
    %5066 = vmatprep.subr.bf16.mxu0 0
    %5067 = vmatpush1.bf16.msra.mxu0 0
    %5068 = vmatprep.subr.bf16.mxu0 0
    %5069 = vmatpush1.bf16.msra.mxu0 0
    %5070 = vmatprep.subr.bf16.mxu0 0
    %5071 = vmatpush1.bf16.msra.mxu0 0
    %5072 = vmatprep.subr.bf16.mxu0 0
    %5073 = vmatpush1.bf16.msra.mxu0 0
    %5074 = vmatprep.subr.bf16.mxu0 0
    %5075 = vmatpush1.bf16.msra.mxu0 0
    %5076 = vmatprep.mubr.bf16.mxu0 0
    %5077 = vmatmul.mubr.bf16.gmra.mrb[0].mxu0 %v5039
    %v5078 = vpop.f32.mrb[0].mxu0
    %v5079 = vadd.f32 0.0, %v5078
    %v5080 = vpop.f32.mrb[0].mxu0
    %v5081 = vpop.f32.mrb[0].mxu0
    %v5082 = vpop.f32.mrb[0].mxu0
    %5083 = vdwg.mxu0
    %v5085 = vsel %vm1691, %v4941, 0
    %v5088 = vsel %vm1791, %v4477, 0
    %5090 = vmatprep.subr.bf16.mxu0 0
    %5091 = vmatpush1.bf16.msra.mxu0 %v5088
    %5092 = vmatprep.subr.bf16.mxu0 0
    %5093 = vmatpush1.bf16.msra.mxu0 0
    %5094 = vmatprep.subr.bf16.mxu0 0
    %5095 = vmatpush1.bf16.msra.mxu0 0
    %5096 = vmatprep.subr.bf16.mxu0 0
    %5097 = vmatpush1.bf16.msra.mxu0 0
    %5098 = vmatprep.subr.bf16.mxu0 0
    %5099 = vmatpush1.bf16.msra.mxu0 0
    %5100 = vmatprep.subr.bf16.mxu0 0
    %5101 = vmatpush1.bf16.msra.mxu0 0
    %5102 = vmatprep.subr.bf16.mxu0 0
    %5103 = vmatpush1.bf16.msra.mxu0 0
    %5104 = vmatprep.subr.bf16.mxu0 0
    %5105 = vmatpush1.bf16.msra.mxu0 0
    %5106 = vmatprep.subr.bf16.mxu0 0
    %5107 = vmatpush1.bf16.msra.mxu0 0
    %5108 = vmatprep.subr.bf16.mxu0 0
    %5109 = vmatpush1.bf16.msra.mxu0 0
    %5110 = vmatprep.subr.bf16.mxu0 0
    %5111 = vmatpush1.bf16.msra.mxu0 0
    %5112 = vmatprep.subr.bf16.mxu0 0
    %5113 = vmatpush1.bf16.msra.mxu0 0
    %5114 = vmatprep.subr.bf16.mxu0 0
    %5115 = vmatpush1.bf16.msra.mxu0 0
    %5116 = vmatprep.subr.bf16.mxu0 0
    %5117 = vmatpush1.bf16.msra.mxu0 0
    %5118 = vmatprep.subr.bf16.mxu0 0
    %5119 = vmatpush1.bf16.msra.mxu0 0
    %5120 = vmatprep.subr.bf16.mxu0 0
    %5121 = vmatpush1.bf16.msra.mxu0 0
    %5122 = vmatprep.mubr.bf16.mxu0 0
    %5123 = vmatmul.mubr.bf16.gmra.mrb[0].mxu0 %v5085
    %v5124 = vpop.f32.mrb[0].mxu0
    %v5125 = vadd.f32 0.0, %v5124
    %v5126 = vpop.f32.mrb[0].mxu0
    %v5127 = vpop.f32.mrb[0].mxu0
    %v5128 = vpop.f32.mrb[0].mxu0
    %5129 = vdwg.mxu0
    %v5131 = vsel %vm1691, %v4942, 0
    %v5134 = vsel %vm1791, %v4478, 0
    %5136 = vmatprep.subr.bf16.mxu0 0
    %5137 = vmatpush1.bf16.msra.mxu0 %v5134
    %5138 = vmatprep.subr.bf16.mxu0 0
    %5139 = vmatpush1.bf16.msra.mxu0 0
    %5140 = vmatprep.subr.bf16.mxu0 0
    %5141 = vmatpush1.bf16.msra.mxu0 0
    %5142 = vmatprep.subr.bf16.mxu0 0
    %5143 = vmatpush1.bf16.msra.mxu0 0
    %5144 = vmatprep.subr.bf16.mxu0 0
    %5145 = vmatpush1.bf16.msra.mxu0 0
    %5146 = vmatprep.subr.bf16.mxu0 0
    %5147 = vmatpush1.bf16.msra.mxu0 0
    %5148 = vmatprep.subr.bf16.mxu0 0
    %5149 = vmatpush1.bf16.msra.mxu0 0
    %5150 = vmatprep.subr.bf16.mxu0 0
    %5151 = vmatpush1.bf16.msra.mxu0 0
    %5152 = vmatprep.subr.bf16.mxu0 0
    %5153 = vmatpush1.bf16.msra.mxu0 0
    %5154 = vmatprep.subr.bf16.mxu0 0
    %5155 = vmatpush1.bf16.msra.mxu0 0
    %5156 = vmatprep.subr.bf16.mxu0 0
    %5157 = vmatpush1.bf16.msra.mxu0 0
    %5158 = vmatprep.subr.bf16.mxu0 0
    %5159 = vmatpush1.bf16.msra.mxu0 0
    %5160 = vmatprep.subr.bf16.mxu0 0
    %5161 = vmatpush1.bf16.msra.mxu0 0
    %5162 = vmatprep.subr.bf16.mxu0 0
    %5163 = vmatpush1.bf16.msra.mxu0 0
    %5164 = vmatprep.subr.bf16.mxu0 0
    %5165 = vmatpush1.bf16.msra.mxu0 0
    %5166 = vmatprep.subr.bf16.mxu0 0
    %5167 = vmatpush1.bf16.msra.mxu0 0
    %5168 = vmatprep.mubr.bf16.mxu0 0
    %5169 = vmatmul.mubr.bf16.gmra.mrb[0].mxu0 %v5131
    %v5170 = vpop.f32.mrb[0].mxu0
    %v5171 = vadd.f32 0.0, %v5170
    %v5172 = vpop.f32.mrb[0].mxu0
    %v5173 = vpop.f32.mrb[0].mxu0
    %v5174 = vpop.f32.mrb[0].mxu0
    %5175 = vdwg.mxu0
    %v5177 = vsel %vm1691, %v4943, 0
    %v5180 = vsel %vm1791, %v4479, 0
    %5182 = vmatprep.subr.bf16.mxu0 0
    %5183 = vmatpush1.bf16.msra.mxu0 %v5180
    %5184 = vmatprep.subr.bf16.mxu0 0
    %5185 = vmatpush1.bf16.msra.mxu0 0
    %5186 = vmatprep.subr.bf16.mxu0 0
    %5187 = vmatpush1.bf16.msra.mxu0 0
    %5188 = vmatprep.subr.bf16.mxu0 0
    %5189 = vmatpush1.bf16.msra.mxu0 0
    %5190 = vmatprep.subr.bf16.mxu0 0
    %5191 = vmatpush1.bf16.msra.mxu0 0
    %5192 = vmatprep.subr.bf16.mxu0 0
    %5193 = vmatpush1.bf16.msra.mxu0 0
    %5194 = vmatprep.subr.bf16.mxu0 0
    %5195 = vmatpush1.bf16.msra.mxu0 0
    %5196 = vmatprep.subr.bf16.mxu0 0
    %5197 = vmatpush1.bf16.msra.mxu0 0
    %5198 = vmatprep.subr.bf16.mxu0 0
    %5199 = vmatpush1.bf16.msra.mxu0 0
    %5200 = vmatprep.subr.bf16.mxu0 0
    %5201 = vmatpush1.bf16.msra.mxu0 0
    %5202 = vmatprep.subr.bf16.mxu0 0
    %5203 = vmatpush1.bf16.msra.mxu0 0
    %5204 = vmatprep.subr.bf16.mxu0 0
    %5205 = vmatpush1.bf16.msra.mxu0 0
    %5206 = vmatprep.subr.bf16.mxu0 0
    %5207 = vmatpush1.bf16.msra.mxu0 0
    %5208 = vmatprep.subr.bf16.mxu0 0
    %5209 = vmatpush1.bf16.msra.mxu0 0
    %5210 = vmatprep.subr.bf16.mxu0 0
    %5211 = vmatpush1.bf16.msra.mxu0 0
    %5212 = vmatprep.subr.bf16.mxu0 0
    %5213 = vmatpush1.bf16.msra.mxu0 0
    %5214 = vmatprep.mubr.bf16.mxu0 0
    %5215 = vmatmul.mubr.bf16.gmra.mrb[0].mxu0 %v5177
    %v5216 = vpop.f32.mrb[0].mxu0
    %v5217 = vadd.f32 0.0, %v5216
    %v5218 = vpop.f32.mrb[0].mxu0
    %v5219 = vpop.f32.mrb[0].mxu0
    %v5220 = vpop.f32.mrb[0].mxu0
    %5221 = vdwg.mxu0
    %v5223 = vsel %vm1691, %v4944, 0
    %v5226 = vsel %vm1791, %v4480, 0
    %5228 = vmatprep.subr.bf16.mxu0 0
    %5229 = vmatpush1.bf16.msra.mxu0 %v5226
    %5230 = vmatprep.subr.bf16.mxu0 0
    %5231 = vmatpush1.bf16.msra.mxu0 0
    %5232 = vmatprep.subr.bf16.mxu0 0
    %5233 = vmatpush1.bf16.msra.mxu0 0
    %5234 = vmatprep.subr.bf16.mxu0 0
    %5235 = vmatpush1.bf16.msra.mxu0 0
    %5236 = vmatprep.subr.bf16.mxu0 0
    %5237 = vmatpush1.bf16.msra.mxu0 0
    %5238 = vmatprep.subr.bf16.mxu0 0
    %5239 = vmatpush1.bf16.msra.mxu0 0
    %5240 = vmatprep.subr.bf16.mxu0 0
    %5241 = vmatpush1.bf16.msra.mxu0 0
    %5242 = vmatprep.subr.bf16.mxu0 0
    %5243 = vmatpush1.bf16.msra.mxu0 0
    %5244 = vmatprep.subr.bf16.mxu0 0
    %5245 = vmatpush1.bf16.msra.mxu0 0
    %5246 = vmatprep.subr.bf16.mxu0 0
    %5247 = vmatpush1.bf16.msra.mxu0 0
    %5248 = vmatprep.subr.bf16.mxu0 0
    %5249 = vmatpush1.bf16.msra.mxu0 0
    %5250 = vmatprep.subr.bf16.mxu0 0
    %5251 = vmatpush1.bf16.msra.mxu0 0
    %5252 = vmatprep.subr.bf16.mxu0 0
    %5253 = vmatpush1.bf16.msra.mxu0 0
    %5254 = vmatprep.subr.bf16.mxu0 0
    %5255 = vmatpush1.bf16.msra.mxu0 0
    %5256 = vmatprep.subr.bf16.mxu0 0
    %5257 = vmatpush1.bf16.msra.mxu0 0
    %5258 = vmatprep.subr.bf16.mxu0 0
    %5259 = vmatpush1.bf16.msra.mxu0 0
    %5260 = vmatprep.mubr.bf16.mxu0 0
    %5261 = vmatmul.mubr.bf16.gmra.mrb[0].mxu0 %v5223
    %v5262 = vpop.f32.mrb[0].mxu0
    %v5263 = vadd.f32 0.0, %v5262
    %v5264 = vpop.f32.mrb[0].mxu0
    %v5265 = vpop.f32.mrb[0].mxu0
    %v5266 = vpop.f32.mrb[0].mxu0
    %5267 = vdwg.mxu0
    %v5269 = vsel %vm1691, %v4945, 0
    %v5272 = vsel %vm1791, %v4481, 0
    %5274 = vmatprep.subr.bf16.mxu0 0
    %5275 = vmatpush1.bf16.msra.mxu0 %v5272
    %5276 = vmatprep.subr.bf16.mxu0 0
    %5277 = vmatpush1.bf16.msra.mxu0 0
    %5278 = vmatprep.subr.bf16.mxu0 0
    %5279 = vmatpush1.bf16.msra.mxu0 0
    %5280 = vmatprep.subr.bf16.mxu0 0
    %5281 = vmatpush1.bf16.msra.mxu0 0
    %5282 = vmatprep.subr.bf16.mxu0 0
    %5283 = vmatpush1.bf16.msra.mxu0 0
    %5284 = vmatprep.subr.bf16.mxu0 0
    %5285 = vmatpush1.bf16.msra.mxu0 0
    %5286 = vmatprep.subr.bf16.mxu0 0
    %5287 = vmatpush1.bf16.msra.mxu0 0
    %5288 = vmatprep.subr.bf16.mxu0 0
    %5289 = vmatpush1.bf16.msra.mxu0 0
    %5290 = vmatprep.subr.bf16.mxu0 0
    %5291 = vmatpush1.bf16.msra.mxu0 0
    %5292 = vmatprep.subr.bf16.mxu0 0
    %5293 = vmatpush1.bf16.msra.mxu0 0
    %5294 = vmatprep.subr.bf16.mxu0 0
    %5295 = vmatpush1.bf16.msra.mxu0 0
    %5296 = vmatprep.subr.bf16.mxu0 0
    %5297 = vmatpush1.bf16.msra.mxu0 0
    %5298 = vmatprep.subr.bf16.mxu0 0
    %5299 = vmatpush1.bf16.msra.mxu0 0
    %5300 = vmatprep.subr.bf16.mxu0 0
    %5301 = vmatpush1.bf16.msra.mxu0 0
    %5302 = vmatprep.subr.bf16.mxu0 0
    %5303 = vmatpush1.bf16.msra.mxu0 0
    %5304 = vmatprep.subr.bf16.mxu0 0
    %5305 = vmatpush1.bf16.msra.mxu0 0
    %5306 = vmatprep.mubr.bf16.mxu0 0
    %5307 = vmatmul.mubr.bf16.gmra.mrb[0].mxu0 %v5269
    %v5308 = vpop.f32.mrb[0].mxu0
    %v5309 = vadd.f32 0.0, %v5308
    %v5310 = vpop.f32.mrb[0].mxu0
    %v5311 = vpop.f32.mrb[0].mxu0
    %v5312 = vpop.f32.mrb[0].mxu0
    %5313 = vdwg.mxu0
    %v5314 = vcombine.low %v4987, %v5079
    %v5315 = vcombine.high %v4987, %v5079
    %v5317 = vunpack.c.l.s4 1983009808
    %v5318 = vunpack.c.0.s8 %v5317
    %v5319 = vlaneseq
    %v5320 = vshrl.u32 %v5319, 7
    %v5321 = vsub.s32 %v5318, %v5320
    %v5322 = vrot.slane %v5314, %v5321
    %v5324 = vunpack.c.l.s4 1983009808
    %v5325 = vunpack.c.0.s8 %v5324
    %v5326 = vlaneseq
    %v5327 = vshrl.u32 %v5326, 7
    %v5328 = vsub.s32 %v5325, %v5327
    %v5329 = vrot.slane %v5315, %v5328
    %v5330 = vcombine.low %v5033, %v5125
    %v5331 = vcombine.high %v5033, %v5125
    %v5333 = vunpack.c.l.s4 1983009808
    %v5334 = vunpack.c.0.s8 %v5333
    %v5335 = vlaneseq
    %v5336 = vshrl.u32 %v5335, 7
    %v5337 = vsub.s32 %v5334, %v5336
    %v5338 = vrot.slane %v5330, %v5337
    %v5340 = vunpack.c.l.s4 1983009808
    %v5341 = vunpack.c.0.s8 %v5340
    %v5342 = vlaneseq
    %v5343 = vshrl.u32 %v5342, 7
    %v5344 = vsub.s32 %v5341, %v5343
    %v5345 = vrot.slane %v5331, %v5344
    %v5346 = vcombine.low %v5322, %v5338
    %v5347 = vcombine.high %v5322, %v5338
    %v5349 = vunpack.c.l.s4 1934713408
    %v5350 = vunpack.c.0.s8 %v5349
    %v5351 = vlaneseq
    %v5352 = vshrl.u32 %v5351, 7
    %v5353 = vsub.s32 %v5350, %v5352
    %v5354 = vrot.slane %v5346, %v5353
    %v5356 = vunpack.c.l.s4 1934713408
    %v5357 = vunpack.c.0.s8 %v5356
    %v5358 = vlaneseq
    %v5359 = vshrl.u32 %v5358, 7
    %v5360 = vsub.s32 %v5357, %v5359
    %v5361 = vrot.slane %v5347, %v5360
    %v5362 = vcombine.low %v5329, %v5345
    %v5363 = vcombine.high %v5329, %v5345
    %v5365 = vunpack.c.l.s4 1934713408
    %v5366 = vunpack.c.0.s8 %v5365
    %v5367 = vlaneseq
    %v5368 = vshrl.u32 %v5367, 7
    %v5369 = vsub.s32 %v5366, %v5368
    %v5370 = vrot.slane %v5362, %v5369
    %v5372 = vunpack.c.l.s4 1934713408
    %v5373 = vunpack.c.0.s8 %v5372
    %v5374 = vlaneseq
    %v5375 = vshrl.u32 %v5374, 7
    %v5376 = vsub.s32 %v5373, %v5375
    %v5377 = vrot.slane %v5363, %v5376
    %v5378 = vcombine.high %v5354, 0.0
    %v5379 = vcombine.high %v5361, 0.0
    %v5380 = vcombine.high %v5370, 0.0
    %v5381 = vcombine.high %v5377, 0.0
    %v5382 = vcombine.low %v5171, %v5263
    %v5383 = vcombine.high %v5171, %v5263
    %v5385 = vunpack.c.l.s4 1983009808
    %v5386 = vunpack.c.0.s8 %v5385
    %v5387 = vlaneseq
    %v5388 = vshrl.u32 %v5387, 7
    %v5389 = vsub.s32 %v5386, %v5388
    %v5390 = vrot.slane %v5382, %v5389
    %v5392 = vunpack.c.l.s4 1983009808
    %v5393 = vunpack.c.0.s8 %v5392
    %v5394 = vlaneseq
    %v5395 = vshrl.u32 %v5394, 7
    %v5396 = vsub.s32 %v5393, %v5395
    %v5397 = vrot.slane %v5383, %v5396
    %v5398 = vcombine.low %v5217, %v5309
    %v5399 = vcombine.high %v5217, %v5309
    %v5401 = vunpack.c.l.s4 1983009808
    %v5402 = vunpack.c.0.s8 %v5401
    %v5403 = vlaneseq
    %v5404 = vshrl.u32 %v5403, 7
    %v5405 = vsub.s32 %v5402, %v5404
    %v5406 = vrot.slane %v5398, %v5405
    %v5408 = vunpack.c.l.s4 1983009808
    %v5409 = vunpack.c.0.s8 %v5408
    %v5410 = vlaneseq
    %v5411 = vshrl.u32 %v5410, 7
    %v5412 = vsub.s32 %v5409, %v5411
    %v5413 = vrot.slane %v5399, %v5412
    %v5414 = vcombine.low %v5390, %v5406
    %v5415 = vcombine.high %v5390, %v5406
    %v5417 = vunpack.c.l.s4 1934713408
    %v5418 = vunpack.c.0.s8 %v5417
    %v5419 = vlaneseq
    %v5420 = vshrl.u32 %v5419, 7
    %v5421 = vsub.s32 %v5418, %v5420
    %v5422 = vrot.slane %v5414, %v5421
    %v5424 = vunpack.c.l.s4 1934713408
    %v5425 = vunpack.c.0.s8 %v5424
    %v5426 = vlaneseq
    %v5427 = vshrl.u32 %v5426, 7
    %v5428 = vsub.s32 %v5425, %v5427
    %v5429 = vrot.slane %v5415, %v5428
    %v5430 = vcombine.low %v5397, %v5413
    %v5431 = vcombine.high %v5397, %v5413
    %v5433 = vunpack.c.l.s4 1934713408
    %v5434 = vunpack.c.0.s8 %v5433
    %v5435 = vlaneseq
    %v5436 = vshrl.u32 %v5435, 7
    %v5437 = vsub.s32 %v5434, %v5436
    %v5438 = vrot.slane %v5430, %v5437
    %v5440 = vunpack.c.l.s4 1934713408
    %v5441 = vunpack.c.0.s8 %v5440
    %v5442 = vlaneseq
    %v5443 = vshrl.u32 %v5442, 7
    %v5444 = vsub.s32 %v5441, %v5443
    %v5445 = vrot.slane %v5431, %v5444
    %v5446 = vcombine.high %v5422, 0.0
    %v5447 = vcombine.high %v5429, 0.0
    %v5448 = vcombine.high %v5438, 0.0
    %v5449 = vcombine.high %v5445, 0.0
    %v5450 = vcombine.low %v5354, %v5361
    %v5452 = vunpack.c.l.s4 1983009808
    %v5453 = vunpack.c.0.s8 %v5452
    %v5454 = vlaneseq
    %v5455 = vshrl.u32 %v5454, 7
    %v5456 = vsub.s32 %v5453, %v5455
    %v5457 = vrot.slane %v5450, %v5456
    %v5458 = vcombine.low %v5378, %v5379
    %v5460 = vunpack.c.l.s4 1983009808
    %v5461 = vunpack.c.0.s8 %v5460
    %v5462 = vlaneseq
    %v5463 = vshrl.u32 %v5462, 7
    %v5464 = vsub.s32 %v5461, %v5463
    %v5465 = vrot.slane %v5458, %v5464
    %v5466 = vcombine.low %v5370, %v5377
    %v5468 = vunpack.c.l.s4 1983009808
    %v5469 = vunpack.c.0.s8 %v5468
    %v5470 = vlaneseq
    %v5471 = vshrl.u32 %v5470, 7
    %v5472 = vsub.s32 %v5469, %v5471
    %v5473 = vrot.slane %v5466, %v5472
    %v5474 = vcombine.low %v5380, %v5381
    %v5476 = vunpack.c.l.s4 1983009808
    %v5477 = vunpack.c.0.s8 %v5476
    %v5478 = vlaneseq
    %v5479 = vshrl.u32 %v5478, 7
    %v5480 = vsub.s32 %v5477, %v5479
    %v5481 = vrot.slane %v5474, %v5480
    %v5482 = vcombine.low %v5457, %v5465
    %v5483 = vcombine.high %v5457, %v5465
    %v5485 = vunpack.c.l.s4 1934713408
    %v5486 = vunpack.c.0.s8 %v5485
    %v5487 = vlaneseq
    %v5488 = vshrl.u32 %v5487, 7
    %v5489 = vsub.s32 %v5486, %v5488
    %v5490 = vrot.slane %v5482, %v5489
    %v5492 = vunpack.c.l.s4 1934713408
    %v5493 = vunpack.c.0.s8 %v5492
    %v5494 = vlaneseq
    %v5495 = vshrl.u32 %v5494, 7
    %v5496 = vsub.s32 %v5493, %v5495
    %v5497 = vrot.slane %v5483, %v5496
    %v5498 = vcombine.low %v5473, %v5481
    %v5499 = vcombine.high %v5473, %v5481
    %v5501 = vunpack.c.l.s4 1934713408
    %v5502 = vunpack.c.0.s8 %v5501
    %v5503 = vlaneseq
    %v5504 = vshrl.u32 %v5503, 7
    %v5505 = vsub.s32 %v5502, %v5504
    %v5506 = vrot.slane %v5498, %v5505
    %v5508 = vunpack.c.l.s4 1934713408
    %v5509 = vunpack.c.0.s8 %v5508
    %v5510 = vlaneseq
    %v5511 = vshrl.u32 %v5510, 7
    %v5512 = vsub.s32 %v5509, %v5511
    %v5513 = vrot.slane %v5499, %v5512
    %v5514 = vcombine.low %v5490, %v5506
    %v5515 = vcombine.high %v5490, %v5506
    %v5516 = vcombine.low %v5497, %v5513
    %v5517 = vcombine.high %v5497, %v5513
    %v5518 = vcombine.low %v5422, %v5429
    %v5520 = vunpack.c.l.s4 1983009808
    %v5521 = vunpack.c.0.s8 %v5520
    %v5522 = vlaneseq
    %v5523 = vshrl.u32 %v5522, 7
    %v5524 = vsub.s32 %v5521, %v5523
    %v5525 = vrot.slane %v5518, %v5524
    %v5526 = vcombine.low %v5446, %v5447
    %v5528 = vunpack.c.l.s4 1983009808
    %v5529 = vunpack.c.0.s8 %v5528
    %v5530 = vlaneseq
    %v5531 = vshrl.u32 %v5530, 7
    %v5532 = vsub.s32 %v5529, %v5531
    %v5533 = vrot.slane %v5526, %v5532
    %v5534 = vcombine.low %v5438, %v5445
    %v5536 = vunpack.c.l.s4 1983009808
    %v5537 = vunpack.c.0.s8 %v5536
    %v5538 = vlaneseq
    %v5539 = vshrl.u32 %v5538, 7
    %v5540 = vsub.s32 %v5537, %v5539
    %v5541 = vrot.slane %v5534, %v5540
    %v5542 = vcombine.low %v5448, %v5449
    %v5544 = vunpack.c.l.s4 1983009808
    %v5545 = vunpack.c.0.s8 %v5544
    %v5546 = vlaneseq
    %v5547 = vshrl.u32 %v5546, 7
    %v5548 = vsub.s32 %v5545, %v5547
    %v5549 = vrot.slane %v5542, %v5548
    %v5550 = vcombine.low %v5525, %v5533
    %v5551 = vcombine.high %v5525, %v5533
    %v5553 = vunpack.c.l.s4 1934713408
    %v5554 = vunpack.c.0.s8 %v5553
    %v5555 = vlaneseq
    %v5556 = vshrl.u32 %v5555, 7
    %v5557 = vsub.s32 %v5554, %v5556
    %v5558 = vrot.slane %v5550, %v5557
    %v5560 = vunpack.c.l.s4 1934713408
    %v5561 = vunpack.c.0.s8 %v5560
    %v5562 = vlaneseq
    %v5563 = vshrl.u32 %v5562, 7
    %v5564 = vsub.s32 %v5561, %v5563
    %v5565 = vrot.slane %v5551, %v5564
    %v5566 = vcombine.low %v5541, %v5549
    %v5567 = vcombine.high %v5541, %v5549
    %v5569 = vunpack.c.l.s4 1934713408
    %v5570 = vunpack.c.0.s8 %v5569
    %v5571 = vlaneseq
    %v5572 = vshrl.u32 %v5571, 7
    %v5573 = vsub.s32 %v5570, %v5572
    %v5574 = vrot.slane %v5566, %v5573
    %v5576 = vunpack.c.l.s4 1934713408
    %v5577 = vunpack.c.0.s8 %v5576
    %v5578 = vlaneseq
    %v5579 = vshrl.u32 %v5578, 7
    %v5580 = vsub.s32 %v5577, %v5579
    %v5581 = vrot.slane %v5567, %v5580
    %v5582 = vcombine.low %v5558, %v5574
    %v5583 = vcombine.high %v5558, %v5574
    %v5584 = vcombine.low %v5565, %v5581
    %v5585 = vcombine.high %v5565, %v5581
    %5588 = vrot.lane.b32.xlu0 %v5515, 32
    %v5589 = vpop.permute.xlu0 %5588
    %5590 = vrot.lane.b32.xlu0 %v5583, 32
    %v5591 = vpop.permute.xlu0 %5590
    %5596 = vrot.lane.b32.xlu0 %v5516, 64
    %v5597 = vpop.permute.xlu0 %5596
    %5598 = vrot.lane.b32.xlu0 %v5584, 64
    %v5599 = vpop.permute.xlu0 %5598
    %5604 = vrot.lane.b32.xlu0 %v5517, 96
    %v5605 = vpop.permute.xlu0 %5604
    %5606 = vrot.lane.b32.xlu0 %v5585, 96
    %v5607 = vpop.permute.xlu0 %5606
    %v5610 = vsel %vm1322, %v5514, %v5589
    %v5611 = vsel %vm1322, %v5582, %v5591
    %v5612 = vsel %vm2455, %v5610, %v5597
    %v5613 = vsel %vm2455, %v5611, %v5599
    %v5614 = vsel %vm2458, %v5612, %v5605
    %v5615 = vsel %vm2458, %v5613, %v5607
    %v5616 = vpack.c.bf16 %v5615, %v5614
    %s5617 = scalar_lea.vmem [#allocation8], 64
    %v5618 = vld [vmem:[%s5617] sm:$0xf]
    %v5619 = vld [vmem:[%s5617 + $0x4] sm:$0xf]
    %v5620 = vld [vmem:[%s5617 + $0x8] sm:$0xf]
    %v5621 = vld [vmem:[%s5617 + $0xc] sm:$0xf]
    %v5622 = vld [vmem:[%s5617 + $0x10] sm:$0xf]
    %v5623 = vld [vmem:[%s5617 + $0x14] sm:$0xf]
    %v5624 = vld [vmem:[%s5617 + $0x18] sm:$0xf]
    %v5625 = vld [vmem:[%s5617 + $0x1c] sm:$0xf]
    %v5626 = vld [vmem:[%s5617 + $0x20] sm:$0xf]
    %v5627 = vld [vmem:[%s5617 + $0x24] sm:$0xf]
    %v5628 = vld [vmem:[%s5617 + $0x28] sm:$0xf]
    %v5629 = vld [vmem:[%s5617 + $0x2c] sm:$0xf]
    %v5630 = vld [vmem:[%s5617 + $0x30] sm:$0xf]
    %v5631 = vld [vmem:[%s5617 + $0x34] sm:$0xf]
    %v5632 = vld [vmem:[%s5617 + $0x38] sm:$0xf]
    %v5633 = vld [vmem:[%s5617 + $0x3c] sm:$0xf]
    %v5634 = vld [vmem:[%s6 + $0x1] sm:$0x1]
    %v5635 = vlaneseq
    %v5636 = vshrl.u32 %v5635, 7
    %v5637 = vsub.s32 0, %v5636
    %v5638 = vrot.slane %v5634, %v5637
    %v5655 = vunpack.c.l.b16 %v5618
    %v5656 = vunpack.c.l.b16 %v5619
    %v5657 = vunpack.c.l.b16 %v5620
    %v5658 = vunpack.c.l.b16 %v5621
    %v5659 = vunpack.c.l.b16 %v5622
    %v5660 = vunpack.c.l.b16 %v5623
    %v5661 = vunpack.c.l.b16 %v5624
    %v5662 = vunpack.c.l.b16 %v5625
    %v5663 = vunpack.c.l.b16 %v5626
    %v5664 = vunpack.c.l.b16 %v5627
    %v5665 = vunpack.c.l.b16 %v5628
    %v5666 = vunpack.c.l.b16 %v5629
    %v5667 = vunpack.c.l.b16 %v5630
    %v5668 = vunpack.c.l.b16 %v5631
    %v5669 = vunpack.c.l.b16 %v5632
    %v5670 = vunpack.c.l.b16 %v5633
    %v5671 = vpack.c.b16 %v5656, %v5655
    %v5672 = vpack.c.b16 %v5658, %v5657
    %v5673 = vpack.c.b16 %v5660, %v5659
    %v5674 = vpack.c.b16 %v5662, %v5661
    %v5675 = vpack.c.b16 %v5664, %v5663
    %v5676 = vpack.c.b16 %v5666, %v5665
    %v5677 = vpack.c.b16 %v5668, %v5667
    %v5678 = vpack.c.b16 %v5670, %v5669
    %5687 = vmatprep.subr.bf16.mxu0 0
    %5688 = vmatpush1.bf16.msra.mxu0 %v5671
    %5689 = vmatprep.subr.bf16.mxu0 0
    %5690 = vmatpush1.bf16.msra.mxu0 %v5672
    %5691 = vmatprep.subr.bf16.mxu0 0
    %5692 = vmatpush1.bf16.msra.mxu0 %v5673
    %5693 = vmatprep.subr.bf16.mxu0 0
    %5694 = vmatpush1.bf16.msra.mxu0 %v5674
    %5695 = vmatprep.subr.bf16.mxu0 0
    %5696 = vmatpush1.bf16.msra.mxu0 %v5675
    %5697 = vmatprep.subr.bf16.mxu0 0
    %5698 = vmatpush1.bf16.msra.mxu0 %v5676
    %5699 = vmatprep.subr.bf16.mxu0 0
    %5700 = vmatpush1.bf16.msra.mxu0 %v5677
    %5701 = vmatprep.subr.bf16.mxu0 0
    %5702 = vmatpush1.bf16.msra.mxu0 %v5678
    %5703 = vmatprep.subr.bf16.mxu0 0
    %5704 = vmatpush1.bf16.msra.mxu0 0
    %5705 = vmatprep.subr.bf16.mxu0 0
    %5706 = vmatpush1.bf16.msra.mxu0 0
    %5707 = vmatprep.subr.bf16.mxu0 0
    %5708 = vmatpush1.bf16.msra.mxu0 0
    %5709 = vmatprep.subr.bf16.mxu0 0
    %5710 = vmatpush1.bf16.msra.mxu0 0
    %5711 = vmatprep.subr.bf16.mxu0 0
    %5712 = vmatpush1.bf16.msra.mxu0 0
    %5713 = vmatprep.subr.bf16.mxu0 0
    %5714 = vmatpush1.bf16.msra.mxu0 0
    %5715 = vmatprep.subr.bf16.mxu0 0
    %5716 = vmatpush1.bf16.msra.mxu0 0
    %5717 = vmatprep.subr.bf16.mxu0 0
    %5718 = vmatpush1.bf16.msra.mxu0 0
    %5719 = vmatprep.mubr.bf16.mxu0 0
    %5720 = vmatmul.mubr.bf16.gmra.mrb[0].mxu0 %v5616
    %v5721 = vpop.f32.mrb[0].mxu0
    %v5722 = vadd.f32 %v5638, %v5721
    %v5723 = vpop.f32.mrb[0].mxu0
    %v5724 = vpop.f32.mrb[0].mxu0
    %v5725 = vadd.f32 %v5638, %v5724
    %v5726 = vpop.f32.mrb[0].mxu0
    %5727 = vdwg.mxu0
    %v5728 = vadd.f32 %v3298, %v5722
    %v5729 = vadd.f32 %v3299, %v5725
    %v5730 = vld [vmem:[%s7 + $0x1] sm:$0x1]
    %v5731 = vld [vmem:[%s8 + $0x1] sm:$0x1]
    %5732 = vadd.xlane.f32.xlu0 %v5728
    %v5733 = vpop.xlane.xlu0 %5732
    %5734 = vadd.xlane.f32.xlu0 %v5729
    %v5735 = vpop.xlane.xlu0 %5734
    %v5736 = vmul.f32 %v5733, %v146
    %v5737 = vmul.f32 %v5735, %v146
    %v5738 = vsub.f32 %v5728, %v5736
    %v5739 = vsub.f32 %v5729, %v5737
    %v5740 = vmul.f32 %v5738, %v5738
    %v5741 = vmul.f32 %v5739, %v5739
    %5742 = vadd.xlane.f32.xlu0 %v5740
    %v5743 = vpop.xlane.xlu0 %5742
    %5744 = vadd.xlane.f32.xlu0 %v5741
    %v5745 = vpop.xlane.xlu0 %5744
    %v5746 = vmul.f32 %v5743, %v146
    %v5747 = vmul.f32 %v5745, %v146
    %v5748 = vadd.f32 %v5746, 1e-05
    %v5749 = vadd.f32 %v5747, 1e-05
    %v5750 = vrsqrt.pop %v5748
    %v5751 = vrsqrt.pop %v5749
    %v5752 = vmul.f32 %v5738, %v5750
    %v5753 = vmul.f32 %v5739, %v5751
    %v5754 = vlaneseq
    %v5755 = vshrl.u32 %v5754, 7
    %v5756 = vsub.s32 0, %v5755
    %v5757 = vrot.slane %v5730, %v5756
    %v5758 = vmul.f32 %v5752, %v5757
    %v5759 = vmul.f32 %v5753, %v5757
    %v5760 = vlaneseq
    %v5761 = vshrl.u32 %v5760, 7
    %v5762 = vsub.s32 0, %v5761
    %v5763 = vrot.slane %v5731, %v5762
    %v5764 = vadd.f32 %v5758, %v5763
    %v5765 = vadd.f32 %v5759, %v5763
    %v5766 = vpack.c.bf16 %v5765, %v5764
    %s5767 = scalar_lea.vmem [#allocation10], 256
    %v5768 = vld [vmem:[%s5767] sm:$0xff]
    %v5769 = vld [vmem:[%s5767 + $0x8] sm:$0xff]
    %v5770 = vld [vmem:[%s5767 + $0x10] sm:$0xff]
    %v5771 = vld [vmem:[%s5767 + $0x18] sm:$0xff]
    %v5772 = vld [vmem:[%s5767 + $0x20] sm:$0xff]
    %v5773 = vld [vmem:[%s5767 + $0x28] sm:$0xff]
    %v5774 = vld [vmem:[%s5767 + $0x30] sm:$0xff]
    %v5775 = vld [vmem:[%s5767 + $0x38] sm:$0xff]
    %v5776 = vld [vmem:[%s5767 + $0x40] sm:$0xff]
    %v5777 = vld [vmem:[%s5767 + $0x48] sm:$0xff]
    %v5778 = vld [vmem:[%s5767 + $0x50] sm:$0xff]
    %v5779 = vld [vmem:[%s5767 + $0x58] sm:$0xff]
    %v5780 = vld [vmem:[%s5767 + $0x60] sm:$0xff]
    %v5781 = vld [vmem:[%s5767 + $0x68] sm:$0xff]
    %v5782 = vld [vmem:[%s5767 + $0x70] sm:$0xff]
    %v5783 = vld [vmem:[%s5767 + $0x78] sm:$0xff]
    %v5784 = vld [vmem:[%s5767 + $0x80] sm:$0xff]
    %v5785 = vld [vmem:[%s5767 + $0x88] sm:$0xff]
    %v5786 = vld [vmem:[%s5767 + $0x90] sm:$0xff]
    %v5787 = vld [vmem:[%s5767 + $0x98] sm:$0xff]
    %v5788 = vld [vmem:[%s5767 + $0xa0] sm:$0xff]
    %v5789 = vld [vmem:[%s5767 + $0xa8] sm:$0xff]
    %v5790 = vld [vmem:[%s5767 + $0xb0] sm:$0xff]
    %v5791 = vld [vmem:[%s5767 + $0xb8] sm:$0xff]
    %v5792 = vld [vmem:[%s5767 + $0xc0] sm:$0xff]
    %v5793 = vld [vmem:[%s5767 + $0xc8] sm:$0xff]
    %v5794 = vld [vmem:[%s5767 + $0xd0] sm:$0xff]
    %v5795 = vld [vmem:[%s5767 + $0xd8] sm:$0xff]
    %v5796 = vld [vmem:[%s5767 + $0xe0] sm:$0xff]
    %v5797 = vld [vmem:[%s5767 + $0xe8] sm:$0xff]
    %v5798 = vld [vmem:[%s5767 + $0xf0] sm:$0xff]
    %v5799 = vld [vmem:[%s5767 + $0xf8] sm:$0xff]
    %s5800 = scalar_lea.vmem %s10, 1
    %v5801 = vld [vmem:[%s5800] ss:$2 sm:$0xf]
    %v5803 = vlaneseq
    %v5804 = vshrl.u32 %v5803, 7
    %v5805 = vsub.s32 0, %v5804
    %v5806 = vrot.slane %v5801, %v5805
    %v5807 = vlaneseq
    %v5808 = vshrl.u32 %v5807, 7
    %v5809 = vsub.s32 1, %v5808
    %v5810 = vrot.slane %v5801, %v5809
    %v5811 = vlaneseq
    %v5812 = vshrl.u32 %v5811, 7
    %v5813 = vsub.s32 2, %v5812
    %v5814 = vrot.slane %v5801, %v5813
    %v5815 = vlaneseq
    %v5816 = vshrl.u32 %v5815, 7
    %v5817 = vsub.s32 3, %v5816
    %v5818 = vrot.slane %v5801, %v5817
    %v5855 = vunpack.c.l.b16 %v5768
    %v5856 = vunpack.c.h.b16 %v5768
    %v5857 = vunpack.c.l.b16 %v5769
    %v5858 = vunpack.c.h.b16 %v5769
    %v5859 = vunpack.c.l.b16 %v5770
    %v5860 = vunpack.c.h.b16 %v5770
    %v5861 = vunpack.c.l.b16 %v5771
    %v5862 = vunpack.c.h.b16 %v5771
    %v5863 = vunpack.c.l.b16 %v5772
    %v5864 = vunpack.c.h.b16 %v5772
    %v5865 = vunpack.c.l.b16 %v5773
    %v5866 = vunpack.c.h.b16 %v5773
    %v5867 = vunpack.c.l.b16 %v5774
    %v5868 = vunpack.c.h.b16 %v5774
    %v5869 = vunpack.c.l.b16 %v5775
    %v5870 = vunpack.c.h.b16 %v5775
    %v5871 = vunpack.c.l.b16 %v5776
    %v5872 = vunpack.c.h.b16 %v5776
    %v5873 = vunpack.c.l.b16 %v5777
    %v5874 = vunpack.c.h.b16 %v5777
    %v5875 = vunpack.c.l.b16 %v5778
    %v5876 = vunpack.c.h.b16 %v5778
    %v5877 = vunpack.c.l.b16 %v5779
    %v5878 = vunpack.c.h.b16 %v5779
    %v5879 = vunpack.c.l.b16 %v5780
    %v5880 = vunpack.c.h.b16 %v5780
    %v5881 = vunpack.c.l.b16 %v5781
    %v5882 = vunpack.c.h.b16 %v5781
    %v5883 = vunpack.c.l.b16 %v5782
    %v5884 = vunpack.c.h.b16 %v5782
    %v5885 = vunpack.c.l.b16 %v5783
    %v5886 = vunpack.c.h.b16 %v5783
    %v5887 = vunpack.c.l.b16 %v5784
    %v5888 = vunpack.c.h.b16 %v5784
    %v5889 = vunpack.c.l.b16 %v5785
    %v5890 = vunpack.c.h.b16 %v5785
    %v5891 = vunpack.c.l.b16 %v5786
    %v5892 = vunpack.c.h.b16 %v5786
    %v5893 = vunpack.c.l.b16 %v5787
    %v5894 = vunpack.c.h.b16 %v5787
    %v5895 = vunpack.c.l.b16 %v5788
    %v5896 = vunpack.c.h.b16 %v5788
    %v5897 = vunpack.c.l.b16 %v5789
    %v5898 = vunpack.c.h.b16 %v5789
    %v5899 = vunpack.c.l.b16 %v5790
    %v5900 = vunpack.c.h.b16 %v5790
    %v5901 = vunpack.c.l.b16 %v5791
    %v5902 = vunpack.c.h.b16 %v5791
    %v5903 = vunpack.c.l.b16 %v5792
    %v5904 = vunpack.c.h.b16 %v5792
    %v5905 = vunpack.c.l.b16 %v5793
    %v5906 = vunpack.c.h.b16 %v5793
    %v5907 = vunpack.c.l.b16 %v5794
    %v5908 = vunpack.c.h.b16 %v5794
    %v5909 = vunpack.c.l.b16 %v5795
    %v5910 = vunpack.c.h.b16 %v5795
    %v5911 = vunpack.c.l.b16 %v5796
    %v5912 = vunpack.c.h.b16 %v5796
    %v5913 = vunpack.c.l.b16 %v5797
    %v5914 = vunpack.c.h.b16 %v5797
    %v5915 = vunpack.c.l.b16 %v5798
    %v5916 = vunpack.c.h.b16 %v5798
    %v5917 = vunpack.c.l.b16 %v5799
    %v5918 = vunpack.c.h.b16 %v5799
    %v5919 = vpack.c.b16 %v5859, %v5855
    %v5920 = vpack.c.b16 %v5860, %v5856
    %v5921 = vpack.c.b16 %v5861, %v5857
    %v5922 = vpack.c.b16 %v5862, %v5858
    %v5923 = vpack.c.b16 %v5867, %v5863
    %v5924 = vpack.c.b16 %v5868, %v5864
    %v5925 = vpack.c.b16 %v5869, %v5865
    %v5926 = vpack.c.b16 %v5870, %v5866
    %v5927 = vpack.c.b16 %v5875, %v5871
    %v5928 = vpack.c.b16 %v5876, %v5872
    %v5929 = vpack.c.b16 %v5877, %v5873
    %v5930 = vpack.c.b16 %v5878, %v5874
    %v5931 = vpack.c.b16 %v5883, %v5879
    %v5932 = vpack.c.b16 %v5884, %v5880
    %v5933 = vpack.c.b16 %v5885, %v5881
    %v5934 = vpack.c.b16 %v5886, %v5882
    %v5935 = vpack.c.b16 %v5891, %v5887
    %v5936 = vpack.c.b16 %v5892, %v5888
    %v5937 = vpack.c.b16 %v5893, %v5889
    %v5938 = vpack.c.b16 %v5894, %v5890
    %v5939 = vpack.c.b16 %v5899, %v5895
    %v5940 = vpack.c.b16 %v5900, %v5896
    %v5941 = vpack.c.b16 %v5901, %v5897
    %v5942 = vpack.c.b16 %v5902, %v5898
    %v5943 = vpack.c.b16 %v5907, %v5903
    %v5944 = vpack.c.b16 %v5908, %v5904
    %v5945 = vpack.c.b16 %v5909, %v5905
    %v5946 = vpack.c.b16 %v5910, %v5906
    %v5947 = vpack.c.b16 %v5915, %v5911
    %v5948 = vpack.c.b16 %v5916, %v5912
    %v5949 = vpack.c.b16 %v5917, %v5913
    %v5950 = vpack.c.b16 %v5918, %v5914
    %5983 = vmatprep.subr.bf16.mxu0 %v5920
    %5984 = vmatpush1.bf16.msra.mxu0 %v5919
    %5985 = vmatprep.subr.bf16.mxu0 %v5924
    %5986 = vmatpush1.bf16.msra.mxu0 %v5923
    %5987 = vmatprep.subr.bf16.mxu0 %v5928
    %5988 = vmatpush1.bf16.msra.mxu0 %v5927
    %5989 = vmatprep.subr.bf16.mxu0 %v5932
    %5990 = vmatpush1.bf16.msra.mxu0 %v5931
    %5991 = vmatprep.subr.bf16.mxu0 %v5936
    %5992 = vmatpush1.bf16.msra.mxu0 %v5935
    %5993 = vmatprep.subr.bf16.mxu0 %v5940
    %5994 = vmatpush1.bf16.msra.mxu0 %v5939
    %5995 = vmatprep.subr.bf16.mxu0 %v5944
    %5996 = vmatpush1.bf16.msra.mxu0 %v5943
    %5997 = vmatprep.subr.bf16.mxu0 %v5948
    %5998 = vmatpush1.bf16.msra.mxu0 %v5947
    %5999 = vmatprep.subr.bf16.mxu0 0
    %6000 = vmatpush1.bf16.msra.mxu0 0
    %6001 = vmatprep.subr.bf16.mxu0 0
    %6002 = vmatpush1.bf16.msra.mxu0 0
    %6003 = vmatprep.subr.bf16.mxu0 0
    %6004 = vmatpush1.bf16.msra.mxu0 0
    %6005 = vmatprep.subr.bf16.mxu0 0
    %6006 = vmatpush1.bf16.msra.mxu0 0
    %6007 = vmatprep.subr.bf16.mxu0 0
    %6008 = vmatpush1.bf16.msra.mxu0 0
    %6009 = vmatprep.subr.bf16.mxu0 0
    %6010 = vmatpush1.bf16.msra.mxu0 0
    %6011 = vmatprep.subr.bf16.mxu0 0
    %6012 = vmatpush1.bf16.msra.mxu0 0
    %6013 = vmatprep.subr.bf16.mxu0 0
    %6014 = vmatpush1.bf16.msra.mxu0 0
    %6015 = vmatprep.mubr.bf16.mxu0 0
    %6016 = vmatmul.mubr.bf16.gmra.mrb[0].mxu0 %v5766
    %v6017 = vpop.f32.mrb[0].mxu0
    %v6018 = vadd.f32 %v5806, %v6017
    %v6019 = vpop.f32.mrb[0].mxu0
    %v6020 = vadd.f32 %v5810, %v6019
    %v6021 = vpop.f32.mrb[0].mxu0
    %v6022 = vadd.f32 %v5806, %v6021
    %v6023 = vpop.f32.mrb[0].mxu0
    %v6024 = vadd.f32 %v5810, %v6023
    %6025 = vdwg.mxu0
    %6026 = vmatprep.subr.bf16.mxu0 %v5922
    %6027 = vmatpush1.bf16.msra.mxu0 %v5921
    %6028 = vmatprep.subr.bf16.mxu0 %v5926
    %6029 = vmatpush1.bf16.msra.mxu0 %v5925
    %6030 = vmatprep.subr.bf16.mxu0 %v5930
    %6031 = vmatpush1.bf16.msra.mxu0 %v5929
    %6032 = vmatprep.subr.bf16.mxu0 %v5934
    %6033 = vmatpush1.bf16.msra.mxu0 %v5933
    %6034 = vmatprep.subr.bf16.mxu0 %v5938
    %6035 = vmatpush1.bf16.msra.mxu0 %v5937
    %6036 = vmatprep.subr.bf16.mxu0 %v5942
    %6037 = vmatpush1.bf16.msra.mxu0 %v5941
    %6038 = vmatprep.subr.bf16.mxu0 %v5946
    %6039 = vmatpush1.bf16.msra.mxu0 %v5945
    %6040 = vmatprep.subr.bf16.mxu0 %v5950
    %6041 = vmatpush1.bf16.msra.mxu0 %v5949
    %6042 = vmatprep.subr.bf16.mxu0 0
    %6043 = vmatpush1.bf16.msra.mxu0 0
    %6044 = vmatprep.subr.bf16.mxu0 0
    %6045 = vmatpush1.bf16.msra.mxu0 0
    %6046 = vmatprep.subr.bf16.mxu0 0
    %6047 = vmatpush1.bf16.msra.mxu0 0
    %6048 = vmatprep.subr.bf16.mxu0 0
    %6049 = vmatpush1.bf16.msra.mxu0 0
    %6050 = vmatprep.subr.bf16.mxu0 0
    %6051 = vmatpush1.bf16.msra.mxu0 0
    %6052 = vmatprep.subr.bf16.mxu0 0
    %6053 = vmatpush1.bf16.msra.mxu0 0
    %6054 = vmatprep.subr.bf16.mxu0 0
    %6055 = vmatpush1.bf16.msra.mxu0 0
    %6056 = vmatprep.subr.bf16.mxu0 0
    %6057 = vmatpush1.bf16.msra.mxu0 0
    %6058 = vmatprep.mubr.bf16.mxu0 0
    %6059 = vmatmul.mubr.bf16.gmra.mrb[0].mxu0 %v5766
    %v6060 = vpop.f32.mrb[0].mxu0
    %v6061 = vadd.f32 %v5814, %v6060
    %v6062 = vpop.f32.mrb[0].mxu0
    %v6063 = vadd.f32 %v5818, %v6062
    %v6064 = vpop.f32.mrb[0].mxu0
    %v6065 = vadd.f32 %v5814, %v6064
    %v6066 = vpop.f32.mrb[0].mxu0
    %v6067 = vadd.f32 %v5818, %v6066
    %6068 = vdwg.mxu0
    %v6069 = vmul.f32 %v6018, 0.5
    %v6070 = vmul.f32 %v6020, 0.5
    %v6071 = vmul.f32 %v6061, 0.5
    %v6072 = vmul.f32 %v6063, 0.5
    %v6073 = vmul.f32 %v6022, 0.5
    %v6074 = vmul.f32 %v6024, 0.5
    %v6075 = vmul.f32 %v6065, 0.5
    %v6076 = vmul.f32 %v6067, 0.5
    %v6077 = vmul.f32 %v6018, 0.70710677
    %v6078 = vmul.f32 %v6020, 0.70710677
    %v6079 = vmul.f32 %v6061, 0.70710677
    %v6080 = vmul.f32 %v6063, 0.70710677
    %v6081 = vmul.f32 %v6022, 0.70710677
    %v6082 = vmul.f32 %v6024, 0.70710677
    %v6083 = vmul.f32 %v6065, 0.70710677
    %v6084 = vmul.f32 %v6067, 0.70710677
    %v6085 = verf.f32.pop %v6077
    %v6086 = verf.f32.pop %v6078
    %v6087 = verf.f32.pop %v6079
    %v6088 = verf.f32.pop %v6080
    %v6089 = verf.f32.pop %v6081
    %v6090 = verf.f32.pop %v6082
    %v6091 = verf.f32.pop %v6083
    %v6092 = verf.f32.pop %v6084
    %v6093 = vadd.f32 %v6085, 1.0
    %v6094 = vadd.f32 %v6086, 1.0
    %v6095 = vadd.f32 %v6087, 1.0
    %v6096 = vadd.f32 %v6088, 1.0
    %v6097 = vadd.f32 %v6089, 1.0
    %v6098 = vadd.f32 %v6090, 1.0
    %v6099 = vadd.f32 %v6091, 1.0
    %v6100 = vadd.f32 %v6092, 1.0
    %v6101 = vmul.f32 %v6069, %v6093
    %v6102 = vmul.f32 %v6070, %v6094
    %v6103 = vmul.f32 %v6071, %v6095
    %v6104 = vmul.f32 %v6072, %v6096
    %v6105 = vmul.f32 %v6073, %v6097
    %v6106 = vmul.f32 %v6074, %v6098
    %v6107 = vmul.f32 %v6075, %v6099
    %v6108 = vmul.f32 %v6076, %v6100
    %v6109 = vpack.c.bf16 %v6105, %v6101
    %v6110 = vpack.c.bf16 %v6106, %v6102
    %v6111 = vpack.c.bf16 %v6107, %v6103
    %v6112 = vpack.c.bf16 %v6108, %v6104
    %s6113 = scalar_lea.vmem [#allocation11], 256
    %v6114 = vld [vmem:[%s6113] sm:$0xf]
    %v6115 = vld [vmem:[%s6113 + $0x4] sm:$0xf]
    %v6116 = vld [vmem:[%s6113 + $0x8] sm:$0xf]
    %v6117 = vld [vmem:[%s6113 + $0xc] sm:$0xf]
    %v6118 = vld [vmem:[%s6113 + $0x10] sm:$0xf]
    %v6119 = vld [vmem:[%s6113 + $0x14] sm:$0xf]
    %v6120 = vld [vmem:[%s6113 + $0x18] sm:$0xf]
    %v6121 = vld [vmem:[%s6113 + $0x1c] sm:$0xf]
    %v6122 = vld [vmem:[%s6113 + $0x20] sm:$0xf]
    %v6123 = vld [vmem:[%s6113 + $0x24] sm:$0xf]
    %v6124 = vld [vmem:[%s6113 + $0x28] sm:$0xf]
    %v6125 = vld [vmem:[%s6113 + $0x2c] sm:$0xf]
    %v6126 = vld [vmem:[%s6113 + $0x30] sm:$0xf]
    %v6127 = vld [vmem:[%s6113 + $0x34] sm:$0xf]
    %v6128 = vld [vmem:[%s6113 + $0x38] sm:$0xf]
    %v6129 = vld [vmem:[%s6113 + $0x3c] sm:$0xf]
    %v6130 = vld [vmem:[%s6113 + $0x40] sm:$0xf]
    %v6131 = vld [vmem:[%s6113 + $0x44] sm:$0xf]
    %v6132 = vld [vmem:[%s6113 + $0x48] sm:$0xf]
    %v6133 = vld [vmem:[%s6113 + $0x4c] sm:$0xf]
    %v6134 = vld [vmem:[%s6113 + $0x50] sm:$0xf]
    %v6135 = vld [vmem:[%s6113 + $0x54] sm:$0xf]
    %v6136 = vld [vmem:[%s6113 + $0x58] sm:$0xf]
    %v6137 = vld [vmem:[%s6113 + $0x5c] sm:$0xf]
    %v6138 = vld [vmem:[%s6113 + $0x60] sm:$0xf]
    %v6139 = vld [vmem:[%s6113 + $0x64] sm:$0xf]
    %v6140 = vld [vmem:[%s6113 + $0x68] sm:$0xf]
    %v6141 = vld [vmem:[%s6113 + $0x6c] sm:$0xf]
    %v6142 = vld [vmem:[%s6113 + $0x70] sm:$0xf]
    %v6143 = vld [vmem:[%s6113 + $0x74] sm:$0xf]
    %v6144 = vld [vmem:[%s6113 + $0x78] sm:$0xf]
    %v6145 = vld [vmem:[%s6113 + $0x7c] sm:$0xf]
    %v6146 = vld [vmem:[%s6113 + $0x80] sm:$0xf]
    %v6147 = vld [vmem:[%s6113 + $0x84] sm:$0xf]
    %v6148 = vld [vmem:[%s6113 + $0x88] sm:$0xf]
    %v6149 = vld [vmem:[%s6113 + $0x8c] sm:$0xf]
    %v6150 = vld [vmem:[%s6113 + $0x90] sm:$0xf]
    %v6151 = vld [vmem:[%s6113 + $0x94] sm:$0xf]
    %v6152 = vld [vmem:[%s6113 + $0x98] sm:$0xf]
    %v6153 = vld [vmem:[%s6113 + $0x9c] sm:$0xf]
    %v6154 = vld [vmem:[%s6113 + $0xa0] sm:$0xf]
    %v6155 = vld [vmem:[%s6113 + $0xa4] sm:$0xf]
    %v6156 = vld [vmem:[%s6113 + $0xa8] sm:$0xf]
    %v6157 = vld [vmem:[%s6113 + $0xac] sm:$0xf]
    %v6158 = vld [vmem:[%s6113 + $0xb0] sm:$0xf]
    %v6159 = vld [vmem:[%s6113 + $0xb4] sm:$0xf]
    %v6160 = vld [vmem:[%s6113 + $0xb8] sm:$0xf]
    %v6161 = vld [vmem:[%s6113 + $0xbc] sm:$0xf]
    %v6162 = vld [vmem:[%s6113 + $0xc0] sm:$0xf]
    %v6163 = vld [vmem:[%s6113 + $0xc4] sm:$0xf]
    %v6164 = vld [vmem:[%s6113 + $0xc8] sm:$0xf]
    %v6165 = vld [vmem:[%s6113 + $0xcc] sm:$0xf]
    %v6166 = vld [vmem:[%s6113 + $0xd0] sm:$0xf]
    %v6167 = vld [vmem:[%s6113 + $0xd4] sm:$0xf]
    %v6168 = vld [vmem:[%s6113 + $0xd8] sm:$0xf]
    %v6169 = vld [vmem:[%s6113 + $0xdc] sm:$0xf]
    %v6170 = vld [vmem:[%s6113 + $0xe0] sm:$0xf]
    %v6171 = vld [vmem:[%s6113 + $0xe4] sm:$0xf]
    %v6172 = vld [vmem:[%s6113 + $0xe8] sm:$0xf]
    %v6173 = vld [vmem:[%s6113 + $0xec] sm:$0xf]
    %v6174 = vld [vmem:[%s6113 + $0xf0] sm:$0xf]
    %v6175 = vld [vmem:[%s6113 + $0xf4] sm:$0xf]
    %v6176 = vld [vmem:[%s6113 + $0xf8] sm:$0xf]
    %v6177 = vld [vmem:[%s6113 + $0xfc] sm:$0xf]
    %v6178 = vld [vmem:[%s12 + $0x1] sm:$0x1]
    %v6179 = vlaneseq
    %v6180 = vshrl.u32 %v6179, 7
    %v6181 = vsub.s32 0, %v6180
    %v6182 = vrot.slane %v6178, %v6181
    %v6247 = vunpack.c.l.b16 %v6114
    %v6248 = vunpack.c.l.b16 %v6115
    %v6249 = vunpack.c.l.b16 %v6116
    %v6250 = vunpack.c.l.b16 %v6117
    %v6251 = vunpack.c.l.b16 %v6118
    %v6252 = vunpack.c.l.b16 %v6119
    %v6253 = vunpack.c.l.b16 %v6120
    %v6254 = vunpack.c.l.b16 %v6121
    %v6255 = vunpack.c.l.b16 %v6122
    %v6256 = vunpack.c.l.b16 %v6123
    %v6257 = vunpack.c.l.b16 %v6124
    %v6258 = vunpack.c.l.b16 %v6125
    %v6259 = vunpack.c.l.b16 %v6126
    %v6260 = vunpack.c.l.b16 %v6127
    %v6261 = vunpack.c.l.b16 %v6128
    %v6262 = vunpack.c.l.b16 %v6129
    %v6263 = vunpack.c.l.b16 %v6130
    %v6264 = vunpack.c.l.b16 %v6131
    %v6265 = vunpack.c.l.b16 %v6132
    %v6266 = vunpack.c.l.b16 %v6133
    %v6267 = vunpack.c.l.b16 %v6134
    %v6268 = vunpack.c.l.b16 %v6135
    %v6269 = vunpack.c.l.b16 %v6136
    %v6270 = vunpack.c.l.b16 %v6137
    %v6271 = vunpack.c.l.b16 %v6138
    %v6272 = vunpack.c.l.b16 %v6139
    %v6273 = vunpack.c.l.b16 %v6140
    %v6274 = vunpack.c.l.b16 %v6141
    %v6275 = vunpack.c.l.b16 %v6142
    %v6276 = vunpack.c.l.b16 %v6143
    %v6277 = vunpack.c.l.b16 %v6144
    %v6278 = vunpack.c.l.b16 %v6145
    %v6279 = vunpack.c.l.b16 %v6146
    %v6280 = vunpack.c.l.b16 %v6147
    %v6281 = vunpack.c.l.b16 %v6148
    %v6282 = vunpack.c.l.b16 %v6149
    %v6283 = vunpack.c.l.b16 %v6150
    %v6284 = vunpack.c.l.b16 %v6151
    %v6285 = vunpack.c.l.b16 %v6152
    %v6286 = vunpack.c.l.b16 %v6153
    %v6287 = vunpack.c.l.b16 %v6154
    %v6288 = vunpack.c.l.b16 %v6155
    %v6289 = vunpack.c.l.b16 %v6156
    %v6290 = vunpack.c.l.b16 %v6157
    %v6291 = vunpack.c.l.b16 %v6158
    %v6292 = vunpack.c.l.b16 %v6159
    %v6293 = vunpack.c.l.b16 %v6160
    %v6294 = vunpack.c.l.b16 %v6161
    %v6295 = vunpack.c.l.b16 %v6162
    %v6296 = vunpack.c.l.b16 %v6163
    %v6297 = vunpack.c.l.b16 %v6164
    %v6298 = vunpack.c.l.b16 %v6165
    %v6299 = vunpack.c.l.b16 %v6166
    %v6300 = vunpack.c.l.b16 %v6167
    %v6301 = vunpack.c.l.b16 %v6168
    %v6302 = vunpack.c.l.b16 %v6169
    %v6303 = vunpack.c.l.b16 %v6170
    %v6304 = vunpack.c.l.b16 %v6171
    %v6305 = vunpack.c.l.b16 %v6172
    %v6306 = vunpack.c.l.b16 %v6173
    %v6307 = vunpack.c.l.b16 %v6174
    %v6308 = vunpack.c.l.b16 %v6175
    %v6309 = vunpack.c.l.b16 %v6176
    %v6310 = vunpack.c.l.b16 %v6177
    %v6311 = vpack.c.b16 %v6248, %v6247
    %v6312 = vpack.c.b16 %v6250, %v6249
    %v6313 = vpack.c.b16 %v6252, %v6251
    %v6314 = vpack.c.b16 %v6254, %v6253
    %v6315 = vpack.c.b16 %v6256, %v6255
    %v6316 = vpack.c.b16 %v6258, %v6257
    %v6317 = vpack.c.b16 %v6260, %v6259
    %v6318 = vpack.c.b16 %v6262, %v6261
    %v6319 = vpack.c.b16 %v6264, %v6263
    %v6320 = vpack.c.b16 %v6266, %v6265
    %v6321 = vpack.c.b16 %v6268, %v6267
    %v6322 = vpack.c.b16 %v6270, %v6269
    %v6323 = vpack.c.b16 %v6272, %v6271
    %v6324 = vpack.c.b16 %v6274, %v6273
    %v6325 = vpack.c.b16 %v6276, %v6275
    %v6326 = vpack.c.b16 %v6278, %v6277
    %v6327 = vpack.c.b16 %v6280, %v6279
    %v6328 = vpack.c.b16 %v6282, %v6281
    %v6329 = vpack.c.b16 %v6284, %v6283
    %v6330 = vpack.c.b16 %v6286, %v6285
    %v6331 = vpack.c.b16 %v6288, %v6287
    %v6332 = vpack.c.b16 %v6290, %v6289
    %v6333 = vpack.c.b16 %v6292, %v6291
    %v6334 = vpack.c.b16 %v6294, %v6293
    %v6335 = vpack.c.b16 %v6296, %v6295
    %v6336 = vpack.c.b16 %v6298, %v6297
    %v6337 = vpack.c.b16 %v6300, %v6299
    %v6338 = vpack.c.b16 %v6302, %v6301
    %v6339 = vpack.c.b16 %v6304, %v6303
    %v6340 = vpack.c.b16 %v6306, %v6305
    %v6341 = vpack.c.b16 %v6308, %v6307
    %v6342 = vpack.c.b16 %v6310, %v6309
    %6375 = vmatprep.subr.bf16.mxu0 0
    %6376 = vmatpush1.bf16.msra.mxu0 %v6311
    %6377 = vmatprep.subr.bf16.mxu0 0
    %6378 = vmatpush1.bf16.msra.mxu0 %v6312
    %6379 = vmatprep.subr.bf16.mxu0 0
    %6380 = vmatpush1.bf16.msra.mxu0 %v6313
    %6381 = vmatprep.subr.bf16.mxu0 0
    %6382 = vmatpush1.bf16.msra.mxu0 %v6314
    %6383 = vmatprep.subr.bf16.mxu0 0
    %6384 = vmatpush1.bf16.msra.mxu0 %v6315
    %6385 = vmatprep.subr.bf16.mxu0 0
    %6386 = vmatpush1.bf16.msra.mxu0 %v6316
    %6387 = vmatprep.subr.bf16.mxu0 0
    %6388 = vmatpush1.bf16.msra.mxu0 %v6317
    %6389 = vmatprep.subr.bf16.mxu0 0
    %6390 = vmatpush1.bf16.msra.mxu0 %v6318
    %6391 = vmatprep.subr.bf16.mxu0 0
    %6392 = vmatpush1.bf16.msra.mxu0 %v6319
    %6393 = vmatprep.subr.bf16.mxu0 0
    %6394 = vmatpush1.bf16.msra.mxu0 %v6320
    %6395 = vmatprep.subr.bf16.mxu0 0
    %6396 = vmatpush1.bf16.msra.mxu0 %v6321
    %6397 = vmatprep.subr.bf16.mxu0 0
    %6398 = vmatpush1.bf16.msra.mxu0 %v6322
    %6399 = vmatprep.subr.bf16.mxu0 0
    %6400 = vmatpush1.bf16.msra.mxu0 %v6323
    %6401 = vmatprep.subr.bf16.mxu0 0
    %6402 = vmatpush1.bf16.msra.mxu0 %v6324
    %6403 = vmatprep.subr.bf16.mxu0 0
    %6404 = vmatpush1.bf16.msra.mxu0 %v6325
    %6405 = vmatprep.subr.bf16.mxu0 0
    %6406 = vmatpush1.bf16.msra.mxu0 %v6326
    %6407 = vmatprep.mubr.bf16.mxu0 %v6110
    %6408 = vmatmul.mubr.bf16.gmra.mrb[0].mxu0 %v6109
    %v6409 = vpop.f32.mrb[0].mxu0
    %v6410 = vadd.f32 %v6182, %v6409
    %v6411 = vpop.f32.mrb[0].mxu0
    %v6412 = vpop.f32.mrb[0].mxu0
    %v6413 = vadd.f32 %v6182, %v6412
    %v6414 = vpop.f32.mrb[0].mxu0
    %6415 = vdwg.mxu0
    %6416 = vmatprep.subr.bf16.mxu0 0
    %6417 = vmatpush1.bf16.msra.mxu0 %v6327
    %6418 = vmatprep.subr.bf16.mxu0 0
    %6419 = vmatpush1.bf16.msra.mxu0 %v6328
    %6420 = vmatprep.subr.bf16.mxu0 0
    %6421 = vmatpush1.bf16.msra.mxu0 %v6329
    %6422 = vmatprep.subr.bf16.mxu0 0
    %6423 = vmatpush1.bf16.msra.mxu0 %v6330
    %6424 = vmatprep.subr.bf16.mxu0 0
    %6425 = vmatpush1.bf16.msra.mxu0 %v6331
    %6426 = vmatprep.subr.bf16.mxu0 0
    %6427 = vmatpush1.bf16.msra.mxu0 %v6332
    %6428 = vmatprep.subr.bf16.mxu0 0
    %6429 = vmatpush1.bf16.msra.mxu0 %v6333
    %6430 = vmatprep.subr.bf16.mxu0 0
    %6431 = vmatpush1.bf16.msra.mxu0 %v6334
    %6432 = vmatprep.subr.bf16.mxu0 0
    %6433 = vmatpush1.bf16.msra.mxu0 %v6335
    %6434 = vmatprep.subr.bf16.mxu0 0
    %6435 = vmatpush1.bf16.msra.mxu0 %v6336
    %6436 = vmatprep.subr.bf16.mxu0 0
    %6437 = vmatpush1.bf16.msra.mxu0 %v6337
    %6438 = vmatprep.subr.bf16.mxu0 0
    %6439 = vmatpush1.bf16.msra.mxu0 %v6338
    %6440 = vmatprep.subr.bf16.mxu0 0
    %6441 = vmatpush1.bf16.msra.mxu0 %v6339
    %6442 = vmatprep.subr.bf16.mxu0 0
    %6443 = vmatpush1.bf16.msra.mxu0 %v6340
    %6444 = vmatprep.subr.bf16.mxu0 0
    %6445 = vmatpush1.bf16.msra.mxu0 %v6341
    %6446 = vmatprep.subr.bf16.mxu0 0
    %6447 = vmatpush1.bf16.msra.mxu0 %v6342
    %6448 = vmatprep.mubr.bf16.mxu0 %v6112
    %6449 = vmatmul.mubr.bf16.gmra.mrb[0].mxu0 %v6111
    %v6450 = vpop.f32.mrb[0].mxu0
    %v6451 = vadd.f32 %v6410, %v6450
    %v6452 = vpop.f32.mrb[0].mxu0
    %v6453 = vpop.f32.mrb[0].mxu0
    %v6454 = vadd.f32 %v6413, %v6453
    %v6455 = vpop.f32.mrb[0].mxu0
    %6456 = vdwg.mxu0
    %v6457 = vadd.f32 %v5764, %v6451
    %v6458 = vadd.f32 %v5765, %v6454
    %v6459 = vld [vmem:[%s13] sm:$0x1]
    %v6460 = vld [vmem:[%s14] sm:$0x1]
    %6461 = vadd.xlane.f32.xlu0 %v6457
    %v6462 = vpop.xlane.xlu0 %6461
    %6463 = vadd.xlane.f32.xlu0 %v6458
    %v6464 = vpop.xlane.xlu0 %6463
    %v6465 = vmul.f32 %v6462, %v146
    %v6466 = vmul.f32 %v6464, %v146
    %v6467 = vsub.f32 %v6457, %v6465
    %v6468 = vsub.f32 %v6458, %v6466
    %v6469 = vmul.f32 %v6467, %v6467
    %v6470 = vmul.f32 %v6468, %v6468
    %6471 = vadd.xlane.f32.xlu0 %v6469
    %v6472 = vpop.xlane.xlu0 %6471
    %6473 = vadd.xlane.f32.xlu0 %v6470
    %v6474 = vpop.xlane.xlu0 %6473
    %v6475 = vmul.f32 %v6472, %v146
    %v6476 = vmul.f32 %v6474, %v146
    %v6477 = vadd.f32 %v6475, 1e-05
    %v6478 = vadd.f32 %v6476, 1e-05
    %v6479 = vrsqrt.pop %v6477
    %v6480 = vrsqrt.pop %v6478
    %v6481 = vmul.f32 %v6467, %v6479
    %v6482 = vmul.f32 %v6468, %v6480
    %v6484 = vlaneseq
    %v6485 = vshrl.u32 %v6484, 7
    %v6486 = vsub.s32 0, %v6485
    %v6487 = vrot.slane %v6459, %v6486
    %v6489 = vmul.f32 %v6481, %v6487
    %v6490 = vmul.f32 %v6482, %v6487
    %v6492 = vlaneseq
    %v6493 = vshrl.u32 %v6492, 7
    %v6494 = vsub.s32 0, %v6493
    %v6495 = vrot.slane %v6460, %v6494
    %v6497 = vadd.f32 %v6489, %v6495
    %v6498 = vadd.f32 %v6490, %v6495
    %6499 = vst [vmem:[#allocation13] sm:$0xff] %v6497
    %6500 = vst [vmem:[#allocation13 + $0x8] sm:$0xff] %v6498
    // Predicated region
    $region86: #{tpu_custom_call.1} parent=1 // pred_check
      _
    $region87: #{tpu_custom_call.1} parent=1 // pred_check_branch
      %6502 = sbr.rel (0) target = $region89
    $region88: #{tpu_custom_call.1} parent=1 // pred_region
      %s6504 = ssub.s32 256, 256
      %6505 = vsyncadd [#allocation4], %s6504
      %s6506 = sshll.u32 [#allocation13], 4
      %s6507 = int_to_ptr.vmem [resolvable:$true] %s6506
      %6512 = dma.vmem_to_hbm [thread:$0]  %s6507, 256, %s15, [#allocation4], 128, 128, 8
    $region89: #{tpu_custom_call.1} parent=1 // pred_fallthru
      _
    // Predicated region
    $region90: #{tpu_custom_call.1} parent=1 // pred_check
      _
    $region91: #{tpu_custom_call.1} parent=1 // pred_check_branch
      %6514 = sbr.rel (0) target = $region93
    $region92: #{tpu_custom_call.1} parent=1 // pred_region
      %6515 = dma.done [#allocation4], 256
    $region93: #{tpu_custom_call.1} parent=1 // pred_fallthru
      _
    %6516 = vsyncpa [#allocation3], 1
    %6517 = vsyncpa [#allocation6], 1
    %6518 = vsyncpa [#allocation9], 1
    %6519 = vsyncpa [#allocation12], 1
    %6520 = vsyncpa [#allocation4], 1

</llo_original>
